<compile_context>
chip_gen: v6e
topology: v6e:2x2x1
jax: 0.10.0
libtpu: 0.0.40
codegen_flags: <defaults>
</compile_context>

<pallas_src>
import jax
import jax.numpy as jnp
from jax.experimental import pallas as pl
from jax.experimental.pallas import tpu as pltpu

_EPS = 1e-5


def _prenorm_ffn_kernel(x_ref, gamma_ref, beta_ref, wi_ref, wo_ref, o_ref):
    """One (nb, C, tp) slab: nb images, C channels (sublanes), tp pixels (lanes).

    x_ref    : (nb, C, tp)  NCHW slab, pixels on the lane axis, f32
    gamma_ref: (C, 1)       LayerNorm scale, f32
    beta_ref : (C, 1)       LayerNorm shift, f32
    wi_ref   : (2*CS, C)    fused wi weight (rows [0,CS) -> h1, [CS,2CS) -> h2), bf16
    wo_ref   : (C, CS)      output projection, bf16
    o_ref    : (nb, C, tp)
    """
    nb = x_ref.shape[0]
    CS = wo_ref.shape[1]

    # Hoist resident operands out of the per-image loop.
    gamma = gamma_ref[...]          # (C, 1)
    beta = beta_ref[...]            # (C, 1)
    wi = wi_ref[...]                # (2*CS, C) bf16
    wo = wo_ref[...]                # (C, CS)   bf16

    for i in range(nb):             # nb is a small static int -> unrolled
        x = x_ref[i]                # (C, tp) f32

        # LayerNorm over channels (axis 0 = sublanes), biased variance,
        # single pass: var = E[x^2] - mean^2.
        mean = jnp.mean(x, axis=0, keepdims=True)               # (1, tp)
        mean_sq = jnp.mean(x * x, axis=0, keepdims=True)        # (1, tp)
        var = mean_sq - mean * mean
        y = (x - mean) * jax.lax.rsqrt(var + _EPS)              # (C, tp)
        y = (y * gamma + beta).astype(jnp.bfloat16)             # bf16 for the MXU

        # Fused wi: (2CS, C) @ (C, tp) -> (2CS, tp), f32 accumulation.
        h = jnp.dot(wi, y, preferred_element_type=jnp.float32)
        h1 = h[:CS]                 # (CS, tp), sublane-aligned static slice
        h2 = h[CS:]                 # (CS, tp)

        # silu gate; sigmoid via a single EUP tanh: sigmoid(z) = 0.5*(tanh(z/2)+1)
        sig = 0.5 * (jnp.tanh(0.5 * h2) + 1.0)
        g = (h1 * (h2 * sig)).astype(jnp.bfloat16)              # h1 * silu(h2)

        out = jnp.dot(wo, g, preferred_element_type=jnp.float32)  # (C, tp)
        o_ref[i] = out.astype(o_ref.dtype)


def _choose_tiles(BT, HW, C, CS, budget_bytes=12 * 1024 * 1024):
    """Pick (nb, tp): lane-dense pixel tile + batch block under a VMEM budget.

    Budget accounts for the double-buffered in/out slabs plus the per-image
    f32 intermediates (y, h, gate).  Keeps the first grid axis >= 2 when
    possible so v7x's two TensorCores both get work.
    """
    io_bytes_per_px = 2 * 2 * C * 4                 # in + out slabs, double buffered, f32
    tmp_bytes_per_px = (2 * C + 6 * CS) * 4         # rough live per-image intermediates

    def step_bytes(nb, tp):
        return nb * io_bytes_per_px * tp + tmp_bytes_per_px * tp

    # Pixel tile: multiple of 128 that divides HW (or full HW), largest that fits.
    if HW % 128 == 0:
        cands = [t for t in range(128, HW + 1, 128) if HW % t == 0]
    else:
        # TODO(synk): pad H*W up to a multiple of 128 to avoid masked partial stores.
        cands = [HW]
    tp = cands[0]
    for t in cands:
        if step_bytes(1, t) <= budget_bytes:
            tp = t

    # Batch block: divisor of BT, fits the budget, keeps >=2 steps on axis 0.
    nb = 1
    for n in range(1, BT + 1):
        if BT % n == 0 and step_bytes(n, tp) <= budget_bytes and (BT == 1 or BT // n >= 2):
            nb = n
    return nb, tp


def prenorm_ffn3d_forward(x, gamma, beta, wi, wo, *, nb=None, tp=None,
                          vmem_limit_bytes=32 * 1024 * 1024):
    """x: [B, T, C, H, W] f32.  wi: [2*C*s, C], wo: [C, C*s] (1x1 conv weights as
    [out, in] matrices, no bias).  Returns [B, T, C, H, W]."""
    B, T, C, H, W = x.shape
    two_cs, c_in = wi.shape
    CS = wo.shape[1]
    assert c_in == C and two_cs == 2 * CS and wo.shape[0] == C
    assert gamma.shape == (C,) and beta.shape == (C,)

    BT = B * T
    HW = H * W

    auto_nb, auto_tp = _choose_tiles(BT, HW, C, CS)
    if tp is None:
        tp = auto_tp
    if nb is None:
        nb = auto_nb
    assert HW % tp == 0, "H*W must be divisible by the pixel tile tp"
    assert BT % nb == 0, "B*T must be divisible by the batch block nb"
    assert tp % 128 == 0 or tp == HW, "tp must be lane-aligned (mult of 128) or full H*W"

    # Free row-major reshapes only — no HBM transposes anywhere.
    x3 = x.reshape(BT, C, HW)
    g2 = gamma.reshape(C, 1).astype(jnp.float32)
    b2 = beta.reshape(C, 1).astype(jnp.float32)
    wi_bf = wi.astype(jnp.bfloat16)      # (2*CS, C) resident, bf16
    wo_bf = wo.astype(jnp.bfloat16)      # (C, CS)   resident, bf16

    out3 = pl.pallas_call(
        _prenorm_ffn_kernel,
        out_shape=jax.ShapeDtypeStruct((BT, C, HW), x.dtype),
        grid_spec=pltpu.PrefetchScalarGridSpec(
            num_scalar_prefetch=0,
            grid=(BT // nb, HW // tp),
            in_specs=[
                pl.BlockSpec((nb, C, tp), lambda b, p: (b, 0, p)),   # x slab
                pl.BlockSpec((C, 1), lambda b, p: (0, 0)),           # gamma (resident)
                pl.BlockSpec((C, 1), lambda b, p: (0, 0)),           # beta  (resident)
                pl.BlockSpec((2 * CS, C), lambda b, p: (0, 0)),      # wi    (resident)
                pl.BlockSpec((C, CS), lambda b, p: (0, 0)),          # wo    (resident)
            ],
            out_specs=pl.BlockSpec((nb, C, tp), lambda b, p: (b, 0, p)),
        ),
        compiler_params=pltpu.CompilerParams(
            dimension_semantics=("parallel", "parallel"),
            vmem_limit_bytes=vmem_limit_bytes,
        ),
    )(x3, g2, b2, wi_bf, wo_bf)

    return out3.reshape(B, T, C, H, W)


def _reference_forward(x, gamma, beta, wi, wo):
    """Pure-JAX f32 reference with the module's exact semantics (sanity check)."""
    B, T, C, H, W = x.shape
    CS = wo.shape[1]
    xi = x.reshape(B * T, C, H * W).astype(jnp.float32)
    mean = xi.mean(axis=1, keepdims=True)
    var = ((xi - mean) ** 2).mean(axis=1, keepdims=True)
    y = (xi - mean) / jnp.sqrt(var + _EPS)
    y = y * gamma[None, :, None] + beta[None, :, None]
    h = jnp.einsum("oc,bcp->bop", wi, y)
    h1, h2 = h[:, :CS], h[:, CS:]
    g = h1 * jax.nn.silu(h2)
    out = jnp.einsum("oc,bcp->bop", wo, g)
    return out.reshape(B, T, C, H, W).astype(x.dtype)


if __name__ == "__main__":
    key = jax.random.PRNGKey(0)
    B, T, C, H, W = 2, 4, 64, 16, 16   # video [B, T, C, H, W]; H*W = 256 lanes/slab
    s = 2
    CS = C * s                          # 128

    kx, kwi, kwo, kg, kb = jax.random.split(key, 5)
    x = jax.random.normal(kx, (B, T, C, H, W), dtype=jnp.float32)

    # Conv2d 1x1 weights as [out, in] matrices (PyTorch weight[:, :, 0, 0]); no bias.
    wi = 0.05 * jax.random.normal(kwi, (2 * CS, C), dtype=jnp.float32)
    wo = 0.05 * jax.random.normal(kwo, (C, CS), dtype=jnp.float32)
    # LayerNorm affine params (perturbed from the default 1 / 0 init to exercise them).
    gamma = 1.0 + 0.1 * jax.random.normal(kg, (C,), dtype=jnp.float32)
    beta = 0.02 * jax.random.normal(kb, (C,), dtype=jnp.float32)

    out = prenorm_ffn3d_forward(x, gamma, beta, wi, wo)
    out = jax.block_until_ready(out)

    ref = _reference_forward(x, gamma, beta, wi, wo)
    assert out.shape == (B, T, C, H, W)
    # bf16 matmuls (f32 accumulation) vs f32 reference -> loosened tolerance.
    assert jnp.allclose(out, ref, atol=3e-2, rtol=3e-2), "mismatch vs reference"

    print("KERNEL_OK")
</pallas_src>

<mosaic_0001>
module attributes {stable_mosaic.version = 11 : i64} {
  func.func @_prenorm_ffn_kernel(%arg0: i32, %arg1: i32, %arg2: memref<4x64x256xf32, #tpu.memory_space<vmem>>, %arg3: memref<64x1xf32, #tpu.memory_space<vmem>>, %arg4: memref<64x1xf32, #tpu.memory_space<vmem>>, %arg5: memref<256x64xbf16, #tpu.memory_space<vmem>>, %arg6: memref<64x128xbf16, #tpu.memory_space<vmem>>, %arg7: memref<4x64x256xf32, #tpu.memory_space<vmem>>) attributes {dimension_semantics = [#tpu.dimension_semantics<parallel>, #tpu.dimension_semantics<parallel>], iteration_bounds = array<i64: 2, 1>, scalar_prefetch = 0 : i64, scratch_operands = 0 : i64, tpu.core_type = #tpu.core_type<tc>, window_params = [{transform_indices = @transform_0, window_bounds = array<i64: 4, 64, 256>}, {pipeline_mode = #tpu.pipeline_mode<synchronous>, transform_indices = @transform_1, window_bounds = array<i64: 64, 1>}, {pipeline_mode = #tpu.pipeline_mode<synchronous>, transform_indices = @transform_2, window_bounds = array<i64: 64, 1>}, {pipeline_mode = #tpu.pipeline_mode<synchronous>, transform_indices = @transform_3, window_bounds = array<i64: 256, 64>}, {pipeline_mode = #tpu.pipeline_mode<synchronous>, transform_indices = @transform_4, window_bounds = array<i64: 64, 128>}, {transform_indices = @transform_5, window_bounds = array<i64: 4, 64, 256>}]} {
    %c0 = arith.constant 0 : index
    %c0_0 = arith.constant 0 : index
    %0 = vector.load %arg3[%c0, %c0_0] : memref<64x1xf32, #tpu.memory_space<vmem>>, vector<64x1xf32>
    %c0_1 = arith.constant 0 : index
    %c0_2 = arith.constant 0 : index
    %1 = vector.load %arg4[%c0_1, %c0_2] : memref<64x1xf32, #tpu.memory_space<vmem>>, vector<64x1xf32>
    %c0_3 = arith.constant 0 : index
    %c0_4 = arith.constant 0 : index
    %2 = vector.load %arg5[%c0_3, %c0_4] : memref<256x64xbf16, #tpu.memory_space<vmem>>, vector<256x64xbf16>
    %c0_5 = arith.constant 0 : index
    %c0_6 = arith.constant 0 : index
    %3 = vector.load %arg6[%c0_5, %c0_6] : memref<64x128xbf16, #tpu.memory_space<vmem>>, vector<64x128xbf16>
    %c0_7 = arith.constant 0 : index
    %c0_8 = arith.constant 0 : index
    %c0_9 = arith.constant 0 : index
    %4 = vector.load %arg2[%c0_7, %c0_8, %c0_9] : memref<4x64x256xf32, #tpu.memory_space<vmem>>, vector<1x64x256xf32>
    %5 = vector.shape_cast %4 : vector<1x64x256xf32> to vector<64x256xf32>
    %cst = arith.constant dense<0.000000e+00> : vector<256xf32>
    %6 = vector.multi_reduction <add>, %5, %cst [0] : vector<64x256xf32> to vector<256xf32>
    %7 = vector.shape_cast %6 : vector<256xf32> to vector<1x256xf32>
    %cst_10 = arith.constant 6.400000e+01 : f32
    %8 = vector.broadcast %cst_10 : f32 to vector<1x256xf32>
    %9 = arith.divf %7, %8 : vector<1x256xf32>
    %10 = arith.mulf %5, %5 : vector<64x256xf32>
    %cst_11 = arith.constant dense<0.000000e+00> : vector<256xf32>
    %11 = vector.multi_reduction <add>, %10, %cst_11 [0] : vector<64x256xf32> to vector<256xf32>
    %12 = vector.shape_cast %11 : vector<256xf32> to vector<1x256xf32>
    %cst_12 = arith.constant 6.400000e+01 : f32
    %13 = vector.broadcast %cst_12 : f32 to vector<1x256xf32>
    %14 = arith.divf %12, %13 : vector<1x256xf32>
    %15 = arith.mulf %9, %9 : vector<1x256xf32>
    %16 = arith.subf %14, %15 : vector<1x256xf32>
    %17 = vector.broadcast %9 : vector<1x256xf32> to vector<64x256xf32>
    %18 = arith.subf %5, %17 : vector<64x256xf32>
    %cst_13 = arith.constant 9.99999974E-6 : f32
    %19 = vector.broadcast %cst_13 : f32 to vector<1x256xf32>
    %20 = arith.addf %16, %19 : vector<1x256xf32>
    %21 = math.rsqrt %20 : vector<1x256xf32>
    %22 = vector.broadcast %21 : vector<1x256xf32> to vector<64x256xf32>
    %23 = arith.mulf %18, %22 : vector<64x256xf32>
    %24 = vector.broadcast %0 : vector<64x1xf32> to vector<64x256xf32>
    %25 = arith.mulf %23, %24 : vector<64x256xf32>
    %26 = vector.broadcast %1 : vector<64x1xf32> to vector<64x256xf32>
    %27 = arith.addf %25, %26 : vector<64x256xf32>
    %28 = arith.truncf %27 : vector<64x256xf32> to vector<64x256xbf16>
    %cst_14 = arith.constant dense<0.000000e+00> : vector<256x256xf32>
    %29 = tpu.matmul %2, %28, %cst_14 {dimension_numbers = #tpu.dot_dimension_numbers<[1], [0], [0], [1], [0, 0, 1, 1], [], []>} : vector<256x64xbf16>, vector<64x256xbf16>, vector<256x256xf32> -> vector<256x256xf32>
    %30 = vector.extract_strided_slice %29 {offsets = [0, 0], sizes = [128, 256], strides = [1, 1]} : vector<256x256xf32> to vector<128x256xf32>
    %31 = vector.extract_strided_slice %29 {offsets = [128, 0], sizes = [128, 256], strides = [1, 1]} : vector<256x256xf32> to vector<128x256xf32>
    %cst_15 = arith.constant 5.000000e-01 : f32
    %32 = vector.broadcast %cst_15 : f32 to vector<128x256xf32>
    %33 = arith.mulf %32, %31 : vector<128x256xf32>
    %34 = math.tanh %33 : vector<128x256xf32>
    %cst_16 = arith.constant 1.000000e+00 : f32
    %35 = vector.broadcast %cst_16 : f32 to vector<128x256xf32>
    %36 = arith.addf %34, %35 : vector<128x256xf32>
    %cst_17 = arith.constant 5.000000e-01 : f32
    %37 = vector.broadcast %cst_17 : f32 to vector<128x256xf32>
    %38 = arith.mulf %37, %36 : vector<128x256xf32>
    %39 = arith.mulf %31, %38 : vector<128x256xf32>
    %40 = arith.mulf %30, %39 : vector<128x256xf32>
    %41 = arith.truncf %40 : vector<128x256xf32> to vector<128x256xbf16>
    %cst_18 = arith.constant dense<0.000000e+00> : vector<64x256xf32>
    %42 = tpu.matmul %3, %41, %cst_18 {dimension_numbers = #tpu.dot_dimension_numbers<[1], [0], [0], [1], [0, 0, 1, 1], [], []>} : vector<64x128xbf16>, vector<128x256xbf16>, vector<64x256xf32> -> vector<64x256xf32>
    %c0_19 = arith.constant 0 : index
    %c0_20 = arith.constant 0 : index
    %c0_21 = arith.constant 0 : index
    %43 = vector.load %arg7[%c0_19, %c0_20, %c0_21] : memref<4x64x256xf32, #tpu.memory_space<vmem>>, vector<1x64x256xf32>
    %44 = vector.shape_cast %43 : vector<1x64x256xf32> to vector<64x256xf32>
    %45 = vector.shape_cast %42 : vector<64x256xf32> to vector<1x64x256xf32>
    tpu.vector_store %arg7[%c0_19, %c0_20, %c0_21], %45 {strides = array<i32>} : memref<4x64x256xf32, #tpu.memory_space<vmem>>, vector<1x64x256xf32>,
    %c1 = arith.constant 1 : index
    %c0_22 = arith.constant 0 : index
    %c0_23 = arith.constant 0 : index
    %46 = vector.load %arg2[%c1, %c0_22, %c0_23] : memref<4x64x256xf32, #tpu.memory_space<vmem>>, vector<1x64x256xf32>
    %47 = vector.shape_cast %46 : vector<1x64x256xf32> to vector<64x256xf32>
    %cst_24 = arith.constant dense<0.000000e+00> : vector<256xf32>
    %48 = vector.multi_reduction <add>, %47, %cst_24 [0] : vector<64x256xf32> to vector<256xf32>
    %49 = vector.shape_cast %48 : vector<256xf32> to vector<1x256xf32>
    %cst_25 = arith.constant 6.400000e+01 : f32
    %50 = vector.broadcast %cst_25 : f32 to vector<1x256xf32>
    %51 = arith.divf %49, %50 : vector<1x256xf32>
    %52 = arith.mulf %47, %47 : vector<64x256xf32>
    %cst_26 = arith.constant dense<0.000000e+00> : vector<256xf32>
    %53 = vector.multi_reduction <add>, %52, %cst_26 [0] : vector<64x256xf32> to vector<256xf32>
    %54 = vector.shape_cast %53 : vector<256xf32> to vector<1x256xf32>
    %cst_27 = arith.constant 6.400000e+01 : f32
    %55 = vector.broadcast %cst_27 : f32 to vector<1x256xf32>
    %56 = arith.divf %54, %55 : vector<1x256xf32>
    %57 = arith.mulf %51, %51 : vector<1x256xf32>
    %58 = arith.subf %56, %57 : vector<1x256xf32>
    %59 = vector.broadcast %51 : vector<1x256xf32> to vector<64x256xf32>
    %60 = arith.subf %47, %59 : vector<64x256xf32>
    %cst_28 = arith.constant 9.99999974E-6 : f32
    %61 = vector.broadcast %cst_28 : f32 to vector<1x256xf32>
    %62 = arith.addf %58, %61 : vector<1x256xf32>
    %63 = math.rsqrt %62 : vector<1x256xf32>
    %64 = vector.broadcast %63 : vector<1x256xf32> to vector<64x256xf32>
    %65 = arith.mulf %60, %64 : vector<64x256xf32>
    %66 = vector.broadcast %0 : vector<64x1xf32> to vector<64x256xf32>
    %67 = arith.mulf %65, %66 : vector<64x256xf32>
    %68 = vector.broadcast %1 : vector<64x1xf32> to vector<64x256xf32>
    %69 = arith.addf %67, %68 : vector<64x256xf32>
    %70 = arith.truncf %69 : vector<64x256xf32> to vector<64x256xbf16>
    %cst_29 = arith.constant dense<0.000000e+00> : vector<256x256xf32>
    %71 = tpu.matmul %2, %70, %cst_29 {dimension_numbers = #tpu.dot_dimension_numbers<[1], [0], [0], [1], [0, 0, 1, 1], [], []>} : vector<256x64xbf16>, vector<64x256xbf16>, vector<256x256xf32> -> vector<256x256xf32>
    %72 = vector.extract_strided_slice %71 {offsets = [0, 0], sizes = [128, 256], strides = [1, 1]} : vector<256x256xf32> to vector<128x256xf32>
    %73 = vector.extract_strided_slice %71 {offsets = [128, 0], sizes = [128, 256], strides = [1, 1]} : vector<256x256xf32> to vector<128x256xf32>
    %cst_30 = arith.constant 5.000000e-01 : f32
    %74 = vector.broadcast %cst_30 : f32 to vector<128x256xf32>
    %75 = arith.mulf %74, %73 : vector<128x256xf32>
    %76 = math.tanh %75 : vector<128x256xf32>
    %cst_31 = arith.constant 1.000000e+00 : f32
    %77 = vector.broadcast %cst_31 : f32 to vector<128x256xf32>
    %78 = arith.addf %76, %77 : vector<128x256xf32>
    %cst_32 = arith.constant 5.000000e-01 : f32
    %79 = vector.broadcast %cst_32 : f32 to vector<128x256xf32>
    %80 = arith.mulf %79, %78 : vector<128x256xf32>
    %81 = arith.mulf %73, %80 : vector<128x256xf32>
    %82 = arith.mulf %72, %81 : vector<128x256xf32>
    %83 = arith.truncf %82 : vector<128x256xf32> to vector<128x256xbf16>
    %cst_33 = arith.constant dense<0.000000e+00> : vector<64x256xf32>
    %84 = tpu.matmul %3, %83, %cst_33 {dimension_numbers = #tpu.dot_dimension_numbers<[1], [0], [0], [1], [0, 0, 1, 1], [], []>} : vector<64x128xbf16>, vector<128x256xbf16>, vector<64x256xf32> -> vector<64x256xf32>
    %c1_34 = arith.constant 1 : index
    %c0_35 = arith.constant 0 : index
    %c0_36 = arith.constant 0 : index
    %85 = vector.load %arg7[%c1_34, %c0_35, %c0_36] : memref<4x64x256xf32, #tpu.memory_space<vmem>>, vector<1x64x256xf32>
    %86 = vector.shape_cast %85 : vector<1x64x256xf32> to vector<64x256xf32>
    %87 = vector.shape_cast %84 : vector<64x256xf32> to vector<1x64x256xf32>
    tpu.vector_store %arg7[%c1_34, %c0_35, %c0_36], %87 {strides = array<i32>} : memref<4x64x256xf32, #tpu.memory_space<vmem>>, vector<1x64x256xf32>,
    %c2 = arith.constant 2 : index
    %c0_37 = arith.constant 0 : index
    %c0_38 = arith.constant 0 : index
    %88 = vector.load %arg2[%c2, %c0_37, %c0_38] : memref<4x64x256xf32, #tpu.memory_space<vmem>>, vector<1x64x256xf32>
    %89 = vector.shape_cast %88 : vector<1x64x256xf32> to vector<64x256xf32>
    %cst_39 = arith.constant dense<0.000000e+00> : vector<256xf32>
    %90 = vector.multi_reduction <add>, %89, %cst_39 [0] : vector<64x256xf32> to vector<256xf32>
    %91 = vector.shape_cast %90 : vector<256xf32> to vector<1x256xf32>
    %cst_40 = arith.constant 6.400000e+01 : f32
    %92 = vector.broadcast %cst_40 : f32 to vector<1x256xf32>
    %93 = arith.divf %91, %92 : vector<1x256xf32>
    %94 = arith.mulf %89, %89 : vector<64x256xf32>
    %cst_41 = arith.constant dense<0.000000e+00> : vector<256xf32>
    %95 = vector.multi_reduction <add>, %94, %cst_41 [0] : vector<64x256xf32> to vector<256xf32>
    %96 = vector.shape_cast %95 : vector<256xf32> to vector<1x256xf32>
    %cst_42 = arith.constant 6.400000e+01 : f32
    %97 = vector.broadcast %cst_42 : f32 to vector<1x256xf32>
    %98 = arith.divf %96, %97 : vector<1x256xf32>
    %99 = arith.mulf %93, %93 : vector<1x256xf32>
    %100 = arith.subf %98, %99 : vector<1x256xf32>
    %101 = vector.broadcast %93 : vector<1x256xf32> to vector<64x256xf32>
    %102 = arith.subf %89, %101 : vector<64x256xf32>
    %cst_43 = arith.constant 9.99999974E-6 : f32
    %103 = vector.broadcast %cst_43 : f32 to vector<1x256xf32>
    %104 = arith.addf %100, %103 : vector<1x256xf32>
    %105 = math.rsqrt %104 : vector<1x256xf32>
    %106 = vector.broadcast %105 : vector<1x256xf32> to vector<64x256xf32>
    %107 = arith.mulf %102, %106 : vector<64x256xf32>
    %108 = vector.broadcast %0 : vector<64x1xf32> to vector<64x256xf32>
    %109 = arith.mulf %107, %108 : vector<64x256xf32>
    %110 = vector.broadcast %1 : vector<64x1xf32> to vector<64x256xf32>
    %111 = arith.addf %109, %110 : vector<64x256xf32>
    %112 = arith.truncf %111 : vector<64x256xf32> to vector<64x256xbf16>
    %cst_44 = arith.constant dense<0.000000e+00> : vector<256x256xf32>
    %113 = tpu.matmul %2, %112, %cst_44 {dimension_numbers = #tpu.dot_dimension_numbers<[1], [0], [0], [1], [0, 0, 1, 1], [], []>} : vector<256x64xbf16>, vector<64x256xbf16>, vector<256x256xf32> -> vector<256x256xf32>
    %114 = vector.extract_strided_slice %113 {offsets = [0, 0], sizes = [128, 256], strides = [1, 1]} : vector<256x256xf32> to vector<128x256xf32>
    %115 = vector.extract_strided_slice %113 {offsets = [128, 0], sizes = [128, 256], strides = [1, 1]} : vector<256x256xf32> to vector<128x256xf32>
    %cst_45 = arith.constant 5.000000e-01 : f32
    %116 = vector.broadcast %cst_45 : f32 to vector<128x256xf32>
    %117 = arith.mulf %116, %115 : vector<128x256xf32>
    %118 = math.tanh %117 : vector<128x256xf32>
    %cst_46 = arith.constant 1.000000e+00 : f32
    %119 = vector.broadcast %cst_46 : f32 to vector<128x256xf32>
    %120 = arith.addf %118, %119 : vector<128x256xf32>
    %cst_47 = arith.constant 5.000000e-01 : f32
    %121 = vector.broadcast %cst_47 : f32 to vector<128x256xf32>
    %122 = arith.mulf %121, %120 : vector<128x256xf32>
    %123 = arith.mulf %115, %122 : vector<128x256xf32>
    %124 = arith.mulf %114, %123 : vector<128x256xf32>
    %125 = arith.truncf %124 : vector<128x256xf32> to vector<128x256xbf16>
    %cst_48 = arith.constant dense<0.000000e+00> : vector<64x256xf32>
    %126 = tpu.matmul %3, %125, %cst_48 {dimension_numbers = #tpu.dot_dimension_numbers<[1], [0], [0], [1], [0, 0, 1, 1], [], []>} : vector<64x128xbf16>, vector<128x256xbf16>, vector<64x256xf32> -> vector<64x256xf32>
    %c2_49 = arith.constant 2 : index
    %c0_50 = arith.constant 0 : index
    %c0_51 = arith.constant 0 : index
    %127 = vector.load %arg7[%c2_49, %c0_50, %c0_51] : memref<4x64x256xf32, #tpu.memory_space<vmem>>, vector<1x64x256xf32>
    %128 = vector.shape_cast %127 : vector<1x64x256xf32> to vector<64x256xf32>
    %129 = vector.shape_cast %126 : vector<64x256xf32> to vector<1x64x256xf32>
    tpu.vector_store %arg7[%c2_49, %c0_50, %c0_51], %129 {strides = array<i32>} : memref<4x64x256xf32, #tpu.memory_space<vmem>>, vector<1x64x256xf32>,
    %c3 = arith.constant 3 : index
    %c0_52 = arith.constant 0 : index
    %c0_53 = arith.constant 0 : index
    %130 = vector.load %arg2[%c3, %c0_52, %c0_53] : memref<4x64x256xf32, #tpu.memory_space<vmem>>, vector<1x64x256xf32>
    %131 = vector.shape_cast %130 : vector<1x64x256xf32> to vector<64x256xf32>
    %cst_54 = arith.constant dense<0.000000e+00> : vector<256xf32>
    %132 = vector.multi_reduction <add>, %131, %cst_54 [0] : vector<64x256xf32> to vector<256xf32>
    %133 = vector.shape_cast %132 : vector<256xf32> to vector<1x256xf32>
    %cst_55 = arith.constant 6.400000e+01 : f32
    %134 = vector.broadcast %cst_55 : f32 to vector<1x256xf32>
    %135 = arith.divf %133, %134 : vector<1x256xf32>
    %136 = arith.mulf %131, %131 : vector<64x256xf32>
    %cst_56 = arith.constant dense<0.000000e+00> : vector<256xf32>
    %137 = vector.multi_reduction <add>, %136, %cst_56 [0] : vector<64x256xf32> to vector<256xf32>
    %138 = vector.shape_cast %137 : vector<256xf32> to vector<1x256xf32>
    %cst_57 = arith.constant 6.400000e+01 : f32
    %139 = vector.broadcast %cst_57 : f32 to vector<1x256xf32>
    %140 = arith.divf %138, %139 : vector<1x256xf32>
    %141 = arith.mulf %135, %135 : vector<1x256xf32>
    %142 = arith.subf %140, %141 : vector<1x256xf32>
    %143 = vector.broadcast %135 : vector<1x256xf32> to vector<64x256xf32>
    %144 = arith.subf %131, %143 : vector<64x256xf32>
    %cst_58 = arith.constant 9.99999974E-6 : f32
    %145 = vector.broadcast %cst_58 : f32 to vector<1x256xf32>
    %146 = arith.addf %142, %145 : vector<1x256xf32>
    %147 = math.rsqrt %146 : vector<1x256xf32>
    %148 = vector.broadcast %147 : vector<1x256xf32> to vector<64x256xf32>
    %149 = arith.mulf %144, %148 : vector<64x256xf32>
    %150 = vector.broadcast %0 : vector<64x1xf32> to vector<64x256xf32>
    %151 = arith.mulf %149, %150 : vector<64x256xf32>
    %152 = vector.broadcast %1 : vector<64x1xf32> to vector<64x256xf32>
    %153 = arith.addf %151, %152 : vector<64x256xf32>
    %154 = arith.truncf %153 : vector<64x256xf32> to vector<64x256xbf16>
    %cst_59 = arith.constant dense<0.000000e+00> : vector<256x256xf32>
    %155 = tpu.matmul %2, %154, %cst_59 {dimension_numbers = #tpu.dot_dimension_numbers<[1], [0], [0], [1], [0, 0, 1, 1], [], []>} : vector<256x64xbf16>, vector<64x256xbf16>, vector<256x256xf32> -> vector<256x256xf32>
    %156 = vector.extract_strided_slice %155 {offsets = [0, 0], sizes = [128, 256], strides = [1, 1]} : vector<256x256xf32> to vector<128x256xf32>
    %157 = vector.extract_strided_slice %155 {offsets = [128, 0], sizes = [128, 256], strides = [1, 1]} : vector<256x256xf32> to vector<128x256xf32>
    %cst_60 = arith.constant 5.000000e-01 : f32
    %158 = vector.broadcast %cst_60 : f32 to vector<128x256xf32>
    %159 = arith.mulf %158, %157 : vector<128x256xf32>
    %160 = math.tanh %159 : vector<128x256xf32>
    %cst_61 = arith.constant 1.000000e+00 : f32
    %161 = vector.broadcast %cst_61 : f32 to vector<128x256xf32>
    %162 = arith.addf %160, %161 : vector<128x256xf32>
    %cst_62 = arith.constant 5.000000e-01 : f32
    %163 = vector.broadcast %cst_62 : f32 to vector<128x256xf32>
    %164 = arith.mulf %163, %162 : vector<128x256xf32>
    %165 = arith.mulf %157, %164 : vector<128x256xf32>
    %166 = arith.mulf %156, %165 : vector<128x256xf32>
    %167 = arith.truncf %166 : vector<128x256xf32> to vector<128x256xbf16>
    %cst_63 = arith.constant dense<0.000000e+00> : vector<64x256xf32>
    %168 = tpu.matmul %3, %167, %cst_63 {dimension_numbers = #tpu.dot_dimension_numbers<[1], [0], [0], [1], [0, 0, 1, 1], [], []>} : vector<64x128xbf16>, vector<128x256xbf16>, vector<64x256xf32> -> vector<64x256xf32>
    %c3_64 = arith.constant 3 : index
    %c0_65 = arith.constant 0 : index
    %c0_66 = arith.constant 0 : index
    %169 = vector.load %arg7[%c3_64, %c0_65, %c0_66] : memref<4x64x256xf32, #tpu.memory_space<vmem>>, vector<1x64x256xf32>
    %170 = vector.shape_cast %169 : vector<1x64x256xf32> to vector<64x256xf32>
    %171 = vector.shape_cast %168 : vector<64x256xf32> to vector<1x64x256xf32>
    tpu.vector_store %arg7[%c3_64, %c0_65, %c0_66], %171 {strides = array<i32>} : memref<4x64x256xf32, #tpu.memory_space<vmem>>, vector<1x64x256xf32>,
    return
  }
  func.func @transform_0(%arg0: i32, %arg1: i32) -> (i32, i32, i32) {
    %c0_i32 = arith.constant 0 : i32
    %c0_i32_0 = arith.constant 0 : i32
    return %arg0, %c0_i32, %arg1 : i32, i32, i32
  }
  func.func @transform_1(%arg0: i32, %arg1: i32) -> (i32, i32) {
    %c0_i32 = arith.constant 0 : i32
    %c0_i32_0 = arith.constant 0 : i32
    %c0_i32_1 = arith.constant 0 : i32
    return %c0_i32, %c0_i32_0 : i32, i32
  }
  func.func @transform_2(%arg0: i32, %arg1: i32) -> (i32, i32) {
    %c0_i32 = arith.constant 0 : i32
    %c0_i32_0 = arith.constant 0 : i32
    %c0_i32_1 = arith.constant 0 : i32
    return %c0_i32, %c0_i32_0 : i32, i32
  }
  func.func @transform_3(%arg0: i32, %arg1: i32) -> (i32, i32) {
    %c0_i32 = arith.constant 0 : i32
    %c0_i32_0 = arith.constant 0 : i32
    %c0_i32_1 = arith.constant 0 : i32
    return %c0_i32, %c0_i32_0 : i32, i32
  }
  func.func @transform_4(%arg0: i32, %arg1: i32) -> (i32, i32) {
    %c0_i32 = arith.constant 0 : i32
    %c0_i32_0 = arith.constant 0 : i32
    %c0_i32_1 = arith.constant 0 : i32
    return %c0_i32, %c0_i32_0 : i32, i32
  }
  func.func @transform_5(%arg0: i32, %arg1: i32) -> (i32, i32, i32) {
    %c0_i32 = arith.constant 0 : i32
    %c0_i32_0 = arith.constant 0 : i32
    return %arg0, %c0_i32, %arg1 : i32, i32, i32
  }
}

</mosaic_0001>

<llo_original>
// kernel: tpu_custom_call.1
$region0: #{tpu_custom_call.1}
  #allocation0 [shape = 'u32[]', space=smem, size = 0x4, offset = 0x4, fixed_abs, tag = 'smem constant byte address 0x4 - core index']
  #allocation1 [shape = 'u32[144,128]{1,0:T(1,128)}', space=vmem, size = 0x12000, scoped, tag = 'internal scratch']
  %s0 = inlined_call_operand.hbm [shape: f32[8,64,256], index: 0, kind: input, shape index: {}]
  %s1 = inlined_call_operand.vmem [shape: f32[64,1], index: 1, kind: input, shape index: {}]
  %s2 = inlined_call_operand.vmem [shape: f32[64,1], index: 2, kind: input, shape index: {}]
  %s3 = inlined_call_operand.vmem [shape: bf16[256,64], index: 3, kind: input, shape index: {}]
  %s4 = inlined_call_operand.vmem [shape: bf16[64,128], index: 4, kind: input, shape index: {}]
  %s5 = inlined_call_operand.hbm [shape: f32[8,64,256], index: 5, kind: output, shape index: {}]
  %s6 = sld [smem:[#allocation0]]
  $region57: #{tpu_custom_call.1} parent=0
    _
  %s8 = ssub.s32 1, %s6
  %s9 = scalar_select 0, %s8, %s6
  $region1: #{tpu_custom_call.1} parent=0
    #allocation2 [shape = 'u8[524288]{0}', space=vmem, size = 0x80000, scoped, tag = 'input window, operand 0']
    #allocation3 [shape = 's32[2]{0}', space=sflag, size = 0x8, scoped, tag = 'scoped memory for tpu_custom_call.1']
    #allocation4 [shape = 's32[2]{0}', space=sflag, size = 0x8, scoped, tag = 'scoped memory for tpu_custom_call.1']
    #allocation5 [shape = 'u8[524288]{0}', space=vmem, size = 0x80000, scoped, tag = 'output window, operand 0']
    %10 = vsyncpa [#allocation3], 0
    %s11 = scalar_lea.sflag [#allocation3], 1
    %12 = vsyncpa %s11, 0
    %13 = vsyncpa [#allocation4], 0
    %s14 = scalar_lea.sflag [#allocation4], 1
    %15 = vsyncpa %s14, 0
    loop: start=0, step=1, limit=4
    $region2: #{tpu_custom_call.1} parent=1 // loop_pre_header
      _
    $region3: #{tpu_custom_call.1} parent=1 // loop_header
      %s17 = sphi 0, %s21
      %p18 = scmp.ge.s32.totalorder %s17, 4
      %s24 = sphi 0, %s36
      %s25 = sphi 0, %s32
      %s26 = sphi 0, %s24
      %s27 = sphi 0, %s25
      %s28 = sphi 0, %s26
      %s29 = sphi 0, %s27
      %s41 = sphi 0, %s43
      %s44 = sphi 0, %s41
      %s45 = sphi 0, %s44
      %s61 = sphi 0, %s45
      %s65 = sphi 0, %s65
      %s67 = sphi 0, %s65
      %s68 = sphi 0, %s67
      %s82 = sphi 0, %s68
      %s86 = sphi 0, %s86
      %s88 = sphi 0, %s86
      %s89 = sphi 0, %s88
      %s103 = sphi 0, %s89
      %s107 = sphi 0, %s107
      %s109 = sphi 0, %s107
      %s110 = sphi 0, %s109
      %s124 = sphi 0, %s110
      %s128 = sphi 0, %s128
      %s130 = sphi 0, %s128
      %s131 = sphi 0, %s130
      %s145 = sphi 0, %s131
      %s153 = sphi 0, %s155
      %s156 = sphi 0, %s153
      %s157 = sphi 0, %s156
      %s173 = sphi 0, %s157
    $region4: #{tpu_custom_call.1} parent=1 // loop_header_branch
      %20 = sbr.rel (%p18) target = $region8
    $region5: #{tpu_custom_call.1} parent=1 // loop_body
      %s22 = ssub.s32 %s17, 1
      %s23 = ssub.s32 %s17, 2
      %s30 = sadd.s32 1, %s25
      %p31 = scmp.ge.s32.totalorder %s30, 1
      %s32 = scalar_select %p31, 0, %s30
      %s33 = sadd.s32 1, %s24
      %s34 = scalar_select %p31, %s33, %s24
      %p35 = scmp.ge.s32.totalorder %s34, 2
      %s36 = scalar_select %p35, 0, %s34
      %s37 = ssub.s32 %s24, %s36
      %s38 = ssub.s32 %s25, %s32
      %s39 = sor.u32 %s37, %s38
      %p40 = scmp.eq.s32.totalorder %s39, 0
      %s42 = sadd.s32 %s41, 1
      %s43 = scalar_select %p40, %s41, %s42
      %p46 = pneg %p40
      %p47 = scmp.eq.s32.totalorder %s17, 1
      %p48 = por %p46, %p47
      %p49 = scmp.ne.s32.totalorder %s41, %s44
      %p50 = scmp.eq.s32.totalorder %s17, 0
      %p51 = por %p49, %p50
      %p52 = scmp.ne.s32.totalorder %s41, %s44
      %p53 = scmp.eq.s32.totalorder %s22, 1
      %p54 = por %p52, %p53
      %p55 = scmp.ne.s32.totalorder %s44, %s45
      %p56 = scmp.eq.s32.totalorder %s22, 0
      %p57 = por %p55, %p56
      %p58 = scmp.ne.s32.totalorder %s44, %s45
      %p59 = scmp.eq.s32.totalorder %s23, 1
      %p60 = por %p58, %p59
      %p62 = scmp.ne.s32.totalorder %s45, %s61
      %p63 = scmp.eq.s32.totalorder %s23, 0
      %p64 = por %p62, %p63
      %s66 = sadd.s32 %s65, 1
      %p69 = scmp.eq.s32.totalorder %s17, 1
      %p70 = scmp.ne.s32.totalorder %s65, %s67
      %p71 = scmp.eq.s32.totalorder %s17, 0
      %p72 = por %p70, %p71
      %p73 = scmp.ne.s32.totalorder %s65, %s67
      %p74 = scmp.eq.s32.totalorder %s22, 1
      %p75 = por %p73, %p74
      %p76 = scmp.ne.s32.totalorder %s67, %s68
      %p77 = scmp.eq.s32.totalorder %s22, 0
      %p78 = por %p76, %p77
      %p79 = scmp.ne.s32.totalorder %s67, %s68
      %p80 = scmp.eq.s32.totalorder %s23, 1
      %p81 = por %p79, %p80
      %p83 = scmp.ne.s32.totalorder %s68, %s82
      %p84 = scmp.eq.s32.totalorder %s23, 0
      %p85 = por %p83, %p84
      %s87 = sadd.s32 %s86, 1
      %p90 = scmp.eq.s32.totalorder %s17, 1
      %p91 = scmp.ne.s32.totalorder %s86, %s88
      %p92 = scmp.eq.s32.totalorder %s17, 0
      %p93 = por %p91, %p92
      %p94 = scmp.ne.s32.totalorder %s86, %s88
      %p95 = scmp.eq.s32.totalorder %s22, 1
      %p96 = por %p94, %p95
      %p97 = scmp.ne.s32.totalorder %s88, %s89
      %p98 = scmp.eq.s32.totalorder %s22, 0
      %p99 = por %p97, %p98
      %p100 = scmp.ne.s32.totalorder %s88, %s89
      %p101 = scmp.eq.s32.totalorder %s23, 1
      %p102 = por %p100, %p101
      %p104 = scmp.ne.s32.totalorder %s89, %s103
      %p105 = scmp.eq.s32.totalorder %s23, 0
      %p106 = por %p104, %p105
      %s108 = sadd.s32 %s107, 1
      %p111 = scmp.eq.s32.totalorder %s17, 1
      %p112 = scmp.ne.s32.totalorder %s107, %s109
      %p113 = scmp.eq.s32.totalorder %s17, 0
      %p114 = por %p112, %p113
      %p115 = scmp.ne.s32.totalorder %s107, %s109
      %p116 = scmp.eq.s32.totalorder %s22, 1
      %p117 = por %p115, %p116
      %p118 = scmp.ne.s32.totalorder %s109, %s110
      %p119 = scmp.eq.s32.totalorder %s22, 0
      %p120 = por %p118, %p119
      %p121 = scmp.ne.s32.totalorder %s109, %s110
      %p122 = scmp.eq.s32.totalorder %s23, 1
      %p123 = por %p121, %p122
      %p125 = scmp.ne.s32.totalorder %s110, %s124
      %p126 = scmp.eq.s32.totalorder %s23, 0
      %p127 = por %p125, %p126
      %s129 = sadd.s32 %s128, 1
      %p132 = scmp.eq.s32.totalorder %s17, 1
      %p133 = scmp.ne.s32.totalorder %s128, %s130
      %p134 = scmp.eq.s32.totalorder %s17, 0
      %p135 = por %p133, %p134
      %p136 = scmp.ne.s32.totalorder %s128, %s130
      %p137 = scmp.eq.s32.totalorder %s22, 1
      %p138 = por %p136, %p137
      %p139 = scmp.ne.s32.totalorder %s130, %s131
      %p140 = scmp.eq.s32.totalorder %s22, 0
      %p141 = por %p139, %p140
      %p142 = scmp.ne.s32.totalorder %s130, %s131
      %p143 = scmp.eq.s32.totalorder %s23, 1
      %p144 = por %p142, %p143
      %p146 = scmp.ne.s32.totalorder %s131, %s145
      %p147 = scmp.eq.s32.totalorder %s23, 0
      %p148 = por %p146, %p147
      %s149 = ssub.s32 %s24, %s36
      %s150 = ssub.s32 %s25, %s32
      %s151 = sor.u32 %s149, %s150
      %p152 = scmp.eq.s32.totalorder %s151, 0
      %s154 = sadd.s32 %s153, 1
      %s155 = scalar_select %p152, %s153, %s154
      %p158 = pneg %p152
      %p159 = scmp.eq.s32.totalorder %s17, 1
      %p160 = por %p158, %p159
      %p161 = scmp.ne.s32.totalorder %s153, %s156
      %p162 = scmp.eq.s32.totalorder %s17, 0
      %p163 = por %p161, %p162
      %p164 = scmp.ne.s32.totalorder %s153, %s156
      %p165 = scmp.eq.s32.totalorder %s22, 1
      %p166 = por %p164, %p165
      %p167 = scmp.ne.s32.totalorder %s156, %s157
      %p168 = scmp.eq.s32.totalorder %s22, 0
      %p169 = por %p167, %p168
      %p170 = scmp.ne.s32.totalorder %s156, %s157
      %p171 = scmp.eq.s32.totalorder %s23, 1
      %p172 = por %p170, %p171
      %p174 = scmp.ne.s32.totalorder %s157, %s173
      %p175 = scmp.eq.s32.totalorder %s23, 0
      %p176 = por %p174, %p175
      %p177 = scmp.le.s32.totalorder 1, %s17
      %p178 = scmp.lt.s32.totalorder %s17, 3
      %p179 = pnand %p177, %p178
      %p180 = pneg %p179
      // Predicated region
      $region9: #{tpu_custom_call.1} parent=5 // pred_check
        _
      $region10: #{tpu_custom_call.1} parent=5 // pred_check_branch
        %182 = sbr.rel (%p179) target = $region12
      $region11: #{tpu_custom_call.1} parent=5 // pred_region
        %s183 = ssub.s32 %s17, 1
        // Predicated region
        $region13: #{tpu_custom_call.1} parent=11 // pred_check
          %p184 = pneg %p78
        $region14: #{tpu_custom_call.1} parent=11 // pred_check_branch
          %186 = sbr.rel (%p184) target = $region16
        $region15: #{tpu_custom_call.1} parent=11 // pred_region
          _
        $region16: #{tpu_custom_call.1} parent=11 // pred_fallthru
          _
        // Predicated region
        $region17: #{tpu_custom_call.1} parent=11 // pred_check
          %p187 = pneg %p99
        $region18: #{tpu_custom_call.1} parent=11 // pred_check_branch
          %189 = sbr.rel (%p187) target = $region20
        $region19: #{tpu_custom_call.1} parent=11 // pred_region
          _
        $region20: #{tpu_custom_call.1} parent=11 // pred_fallthru
          _
        // Predicated region
        $region21: #{tpu_custom_call.1} parent=11 // pred_check
          %p190 = pneg %p120
        $region22: #{tpu_custom_call.1} parent=11 // pred_check_branch
          %192 = sbr.rel (%p190) target = $region24
        $region23: #{tpu_custom_call.1} parent=11 // pred_region
          _
        $region24: #{tpu_custom_call.1} parent=11 // pred_fallthru
          _
        // Predicated region
        $region25: #{tpu_custom_call.1} parent=11 // pred_check
          %p193 = pneg %p141
        $region26: #{tpu_custom_call.1} parent=11 // pred_check_branch
          %195 = sbr.rel (%p193) target = $region28
        $region27: #{tpu_custom_call.1} parent=11 // pred_region
          _
        $region28: #{tpu_custom_call.1} parent=11 // pred_fallthru
          _
      $region12: #{tpu_custom_call.1} parent=5 // pred_fallthru
        _
      %p196 = scmp.lt.s32.totalorder %s17, 2
      // Predicated region
      $region29: #{tpu_custom_call.1} parent=5 // pred_check
        %p197 = pneg %p196
      $region30: #{tpu_custom_call.1} parent=5 // pred_check_branch
        %199 = sbr.rel (%p197) target = $region32
      $region31: #{tpu_custom_call.1} parent=5 // pred_region
        // Predicated region
        $region33: #{tpu_custom_call.1} parent=31 // pred_check
          %p200 = pneg %p51
        $region34: #{tpu_custom_call.1} parent=31 // pred_check_branch
          %202 = sbr.rel (%p200) target = $region36
        $region35: #{tpu_custom_call.1} parent=31 // pred_region
          %s203 = sand.u32 %s41, 1
          %s204 = scalar_lea.sflag [#allocation3], %s203
          %s205 = sand.u32 %s41, 1
          %s206 = smul.addr %s205, 512
          %s207 = scalar_lea.vmem [#allocation2], %s206
          %s208 = smul.u32 4, %s24
          %s209 = smul.u32 2, %s25
          %s211 = ssub.s32 8192, 8192
          %212 = vsyncadd %s204, %s211
          %s213 = smul.addr %s208, 16
          %s214 = sadd.s32 %s209, %s213
          %s215 = smul.addr %s214, 128
          %s216 = scalar_lea.hbm %s0, %s215
          %s217 = sshll.u32 %s207, 4
          %s218 = int_to_ptr.vmem [resolvable:$true] %s217
          %223 = dma.hbm_to_vmem [thread:$0]  %s216, 8192, %s218, %s204, 256, 256, 16
        $region36: #{tpu_custom_call.1} parent=31 // pred_fallthru
          _
      $region32: #{tpu_custom_call.1} parent=5 // pred_fallthru
        _
      %p224 = scmp.le.s32.totalorder 1, %s17
      %p225 = scmp.lt.s32.totalorder %s17, 3
      %p226 = pnand %p224, %p225
      %p227 = pneg %p226
      // Predicated region
      $region37: #{tpu_custom_call.1} parent=5 // pred_check
        _
      $region38: #{tpu_custom_call.1} parent=5 // pred_check_branch
        %229 = sbr.rel (%p226) target = $region40
      $region39: #{tpu_custom_call.1} parent=5 // pred_region
        %s230 = ssub.s32 %s17, 1
        %s231 = sand.u32 %s44, 1
        %s232 = scalar_lea.sflag [#allocation3], %s231
        %s233 = sand.u32 %s44, 1
        %s234 = smul.addr %s233, 512
        %s235 = scalar_lea.vmem [#allocation2], %s234
        // Predicated region
        $region41: #{tpu_custom_call.1} parent=39 // pred_check
          %p236 = pneg %p57
        $region42: #{tpu_custom_call.1} parent=39 // pred_check_branch
          %238 = sbr.rel (%p236) target = $region44
        $region43: #{tpu_custom_call.1} parent=39 // pred_region
          %239 = dma.done %s232, 8192
        $region44: #{tpu_custom_call.1} parent=39 // pred_fallthru
          _
        %s240 = sand.u32 %s44, 1
        %s241 = scalar_lea.sflag [#allocation3], %s240
        %s242 = sand.u32 %s44, 1
        %s243 = smul.addr %s242, 512
        %s244 = scalar_lea.vmem [#allocation2], %s243
        %p245 = pneg %p57
        %p246 = pneg %p54
        %p247 = pneg %p78
        %p248 = pneg %p75
        %p249 = pneg %p99
        %p250 = pneg %p96
        %p251 = pneg %p120
        %p252 = pneg %p117
        %p253 = pneg %p141
        %p254 = pneg %p138
        %p255 = pneg %p169
        %p256 = pneg %p166
        %s257 = sand.u32 %s156, 1
        %s258 = scalar_lea.sflag [#allocation4], %s257
        %s259 = sand.u32 %s156, 1
        %s260 = smul.addr %s259, 512
        %s261 = scalar_lea.vmem [#allocation5], %s260
        %s262 = smul.u32 4, %s26
        %s263 = smul.u32 2, %s27
        %s264 = smul.u32 4, %s26
        %s265 = smul.u32 2, %s27
        %v267 = vld [vmem:[%s1] sm:$0xff]
        %v268 = vld [vmem:[%s1 + $0x8] sm:$0xff]
        %v269 = vld [vmem:[%s1 + $0x10] sm:$0xff]
        %v270 = vld [vmem:[%s1 + $0x18] sm:$0xff]
        %v271 = vld [vmem:[%s1 + $0x20] sm:$0xff]
        %v272 = vld [vmem:[%s1 + $0x28] sm:$0xff]
        %v273 = vld [vmem:[%s1 + $0x30] sm:$0xff]
        %v274 = vld [vmem:[%s1 + $0x38] sm:$0xff]
        %v275 = vld [vmem:[%s2] sm:$0xff]
        %v276 = vld [vmem:[%s2 + $0x8] sm:$0xff]
        %v277 = vld [vmem:[%s2 + $0x10] sm:$0xff]
        %v278 = vld [vmem:[%s2 + $0x18] sm:$0xff]
        %v279 = vld [vmem:[%s2 + $0x20] sm:$0xff]
        %v280 = vld [vmem:[%s2 + $0x28] sm:$0xff]
        %v281 = vld [vmem:[%s2 + $0x30] sm:$0xff]
        %v282 = vld [vmem:[%s2 + $0x38] sm:$0xff]
        %v283 = vld [vmem:[%s3] sm:$0xf]
        %v284 = vld [vmem:[%s3 + $0x4] sm:$0xf]
        %v285 = vld [vmem:[%s3 + $0x8] sm:$0xf]
        %v286 = vld [vmem:[%s3 + $0xc] sm:$0xf]
        %v287 = vld [vmem:[%s3 + $0x10] sm:$0xf]
        %v288 = vld [vmem:[%s3 + $0x14] sm:$0xf]
        %v289 = vld [vmem:[%s3 + $0x18] sm:$0xf]
        %v290 = vld [vmem:[%s3 + $0x1c] sm:$0xf]
        %v291 = vld [vmem:[%s3 + $0x20] sm:$0xf]
        %v292 = vld [vmem:[%s3 + $0x24] sm:$0xf]
        %v293 = vld [vmem:[%s3 + $0x28] sm:$0xf]
        %v294 = vld [vmem:[%s3 + $0x2c] sm:$0xf]
        %v295 = vld [vmem:[%s3 + $0x30] sm:$0xf]
        %v296 = vld [vmem:[%s3 + $0x34] sm:$0xf]
        %v297 = vld [vmem:[%s3 + $0x38] sm:$0xf]
        %v298 = vld [vmem:[%s3 + $0x3c] sm:$0xf]
        %v299 = vld [vmem:[%s3 + $0x40] sm:$0xf]
        %v300 = vld [vmem:[%s3 + $0x44] sm:$0xf]
        %v301 = vld [vmem:[%s3 + $0x48] sm:$0xf]
        %v302 = vld [vmem:[%s3 + $0x4c] sm:$0xf]
        %v303 = vld [vmem:[%s3 + $0x50] sm:$0xf]
        %v304 = vld [vmem:[%s3 + $0x54] sm:$0xf]
        %v305 = vld [vmem:[%s3 + $0x58] sm:$0xf]
        %v306 = vld [vmem:[%s3 + $0x5c] sm:$0xf]
        %v307 = vld [vmem:[%s3 + $0x60] sm:$0xf]
        %v308 = vld [vmem:[%s3 + $0x64] sm:$0xf]
        %v309 = vld [vmem:[%s3 + $0x68] sm:$0xf]
        %v310 = vld [vmem:[%s3 + $0x6c] sm:$0xf]
        %v311 = vld [vmem:[%s3 + $0x70] sm:$0xf]
        %v312 = vld [vmem:[%s3 + $0x74] sm:$0xf]
        %v313 = vld [vmem:[%s3 + $0x78] sm:$0xf]
        %v314 = vld [vmem:[%s3 + $0x7c] sm:$0xf]
        %v315 = vld [vmem:[%s4] sm:$0xf]
        %v316 = vld [vmem:[%s4 + $0x4] sm:$0xf]
        %v317 = vld [vmem:[%s4 + $0x8] sm:$0xf]
        %v318 = vld [vmem:[%s4 + $0xc] sm:$0xf]
        %v319 = vld [vmem:[%s4 + $0x10] sm:$0xf]
        %v320 = vld [vmem:[%s4 + $0x14] sm:$0xf]
        %v321 = vld [vmem:[%s4 + $0x18] sm:$0xf]
        %v322 = vld [vmem:[%s4 + $0x1c] sm:$0xf]
        %v323 = vld [vmem:[%s235] sm:$0xff]
        %v324 = vld [vmem:[%s235 + $0x8] sm:$0xff]
        %v325 = vld [vmem:[%s235 + $0x10] sm:$0xff]
        %v326 = vld [vmem:[%s235 + $0x18] sm:$0xff]
        %v327 = vld [vmem:[%s235 + $0x20] sm:$0xff]
        %v328 = vld [vmem:[%s235 + $0x28] sm:$0xff]
        %v329 = vld [vmem:[%s235 + $0x30] sm:$0xff]
        %v330 = vld [vmem:[%s235 + $0x38] sm:$0xff]
        %v331 = vld [vmem:[%s235 + $0x40] sm:$0xff]
        %v332 = vld [vmem:[%s235 + $0x48] sm:$0xff]
        %v333 = vld [vmem:[%s235 + $0x50] sm:$0xff]
        %v334 = vld [vmem:[%s235 + $0x58] sm:$0xff]
        %v335 = vld [vmem:[%s235 + $0x60] sm:$0xff]
        %v336 = vld [vmem:[%s235 + $0x68] sm:$0xff]
        %v337 = vld [vmem:[%s235 + $0x70] sm:$0xff]
        %v338 = vld [vmem:[%s235 + $0x78] sm:$0xff]
        %v339 = vadd.f32 %v323, %v325
        %v340 = vadd.f32 %v339, %v327
        %v341 = vadd.f32 %v340, %v329
        %v342 = vadd.f32 %v341, %v331
        %v343 = vadd.f32 %v342, %v333
        %v344 = vadd.f32 %v343, %v335
        %v345 = vadd.f32 %v344, %v337
        %v346 = vrot.slane %v345, 4
        %v347 = vadd.f32 %v345, %v346
        %v348 = vrot.slane %v347, 2
        %v349 = vadd.f32 %v347, %v348
        %v350 = vrot.slane %v349, 1
        %v351 = vadd.f32 %v349, %v350
        %v352 = vadd.f32 %v324, %v326
        %v353 = vadd.f32 %v352, %v328
        %v354 = vadd.f32 %v353, %v330
        %v355 = vadd.f32 %v354, %v332
        %v356 = vadd.f32 %v355, %v334
        %v357 = vadd.f32 %v356, %v336
        %v358 = vadd.f32 %v357, %v338
        %v359 = vrot.slane %v358, 4
        %v360 = vadd.f32 %v358, %v359
        %v361 = vrot.slane %v360, 2
        %v362 = vadd.f32 %v360, %v361
        %v363 = vrot.slane %v362, 1
        %v364 = vadd.f32 %v362, %v363
        %v365 = vrcp.pop 64.0
        %v366 = vmul.f32 %v351, %v365
        %v367 = vmul.f32 %v364, %v365
        %v368 = vmul.f32 %v323, %v323
        %v369 = vmul.f32 %v324, %v324
        %v370 = vmul.f32 %v325, %v325
        %v371 = vmul.f32 %v326, %v326
        %v372 = vmul.f32 %v327, %v327
        %v373 = vmul.f32 %v328, %v328
        %v374 = vmul.f32 %v329, %v329
        %v375 = vmul.f32 %v330, %v330
        %v376 = vmul.f32 %v331, %v331
        %v377 = vmul.f32 %v332, %v332
        %v378 = vmul.f32 %v333, %v333
        %v379 = vmul.f32 %v334, %v334
        %v380 = vmul.f32 %v335, %v335
        %v381 = vmul.f32 %v336, %v336
        %v382 = vmul.f32 %v337, %v337
        %v383 = vmul.f32 %v338, %v338
        %v384 = vadd.f32 %v368, %v370
        %v385 = vadd.f32 %v384, %v372
        %v386 = vadd.f32 %v385, %v374
        %v387 = vadd.f32 %v386, %v376
        %v388 = vadd.f32 %v387, %v378
        %v389 = vadd.f32 %v388, %v380
        %v390 = vadd.f32 %v389, %v382
        %v391 = vrot.slane %v390, 4
        %v392 = vadd.f32 %v390, %v391
        %v393 = vrot.slane %v392, 2
        %v394 = vadd.f32 %v392, %v393
        %v395 = vrot.slane %v394, 1
        %v396 = vadd.f32 %v394, %v395
        %v397 = vadd.f32 %v369, %v371
        %v398 = vadd.f32 %v397, %v373
        %v399 = vadd.f32 %v398, %v375
        %v400 = vadd.f32 %v399, %v377
        %v401 = vadd.f32 %v400, %v379
        %v402 = vadd.f32 %v401, %v381
        %v403 = vadd.f32 %v402, %v383
        %v404 = vrot.slane %v403, 4
        %v405 = vadd.f32 %v403, %v404
        %v406 = vrot.slane %v405, 2
        %v407 = vadd.f32 %v405, %v406
        %v408 = vrot.slane %v407, 1
        %v409 = vadd.f32 %v407, %v408
        %v410 = vmul.f32 %v396, %v365
        %v411 = vmul.f32 %v409, %v365
        %v412 = vmul.f32 %v366, %v366
        %v413 = vmul.f32 %v367, %v367
        %v414 = vsub.f32 %v410, %v412
        %v415 = vsub.f32 %v411, %v413
        %v416 = vsub.f32 %v323, %v366
        %v417 = vsub.f32 %v324, %v367
        %v418 = vsub.f32 %v325, %v366
        %v419 = vsub.f32 %v326, %v367
        %v420 = vsub.f32 %v327, %v366
        %v421 = vsub.f32 %v328, %v367
        %v422 = vsub.f32 %v329, %v366
        %v423 = vsub.f32 %v330, %v367
        %v424 = vsub.f32 %v331, %v366
        %v425 = vsub.f32 %v332, %v367
        %v426 = vsub.f32 %v333, %v366
        %v427 = vsub.f32 %v334, %v367
        %v428 = vsub.f32 %v335, %v366
        %v429 = vsub.f32 %v336, %v367
        %v430 = vsub.f32 %v337, %v366
        %v431 = vsub.f32 %v338, %v367
        %v432 = vadd.f32 %v414, 1e-05
        %v433 = vadd.f32 %v415, 1e-05
        %v434 = vrsqrt.pop %v432
        %v435 = vrsqrt.pop %v433
        %v436 = vmul.f32 %v416, %v434
        %v437 = vmul.f32 %v417, %v435
        %v438 = vmul.f32 %v418, %v434
        %v439 = vmul.f32 %v419, %v435
        %v440 = vmul.f32 %v420, %v434
        %v441 = vmul.f32 %v421, %v435
        %v442 = vmul.f32 %v422, %v434
        %v443 = vmul.f32 %v423, %v435
        %v444 = vmul.f32 %v424, %v434
        %v445 = vmul.f32 %v425, %v435
        %v446 = vmul.f32 %v426, %v434
        %v447 = vmul.f32 %v427, %v435
        %v448 = vmul.f32 %v428, %v434
        %v449 = vmul.f32 %v429, %v435
        %v450 = vmul.f32 %v430, %v434
        %v451 = vmul.f32 %v431, %v435
        %453 = vset.pattern.permute.xlu0 0
        %454 = vperm.xlu0 %453, %v267
        %v455 = vpop.permute.xlu0 %454
        %458 = vset.pattern.permute.xlu0 0
        %459 = vperm.xlu0 %458, %v268
        %v460 = vpop.permute.xlu0 %459
        %463 = vset.pattern.permute.xlu0 0
        %464 = vperm.xlu0 %463, %v269
        %v465 = vpop.permute.xlu0 %464
        %468 = vset.pattern.permute.xlu0 0
        %469 = vperm.xlu0 %468, %v270
        %v470 = vpop.permute.xlu0 %469
        %473 = vset.pattern.permute.xlu0 0
        %474 = vperm.xlu0 %473, %v271
        %v475 = vpop.permute.xlu0 %474
        %478 = vset.pattern.permute.xlu0 0
        %479 = vperm.xlu0 %478, %v272
        %v480 = vpop.permute.xlu0 %479
        %483 = vset.pattern.permute.xlu0 0
        %484 = vperm.xlu0 %483, %v273
        %v485 = vpop.permute.xlu0 %484
        %488 = vset.pattern.permute.xlu0 0
        %489 = vperm.xlu0 %488, %v274
        %v490 = vpop.permute.xlu0 %489
        %v492 = vmul.f32 %v436, %v455
        %v493 = vmul.f32 %v437, %v455
        %v494 = vmul.f32 %v438, %v460
        %v495 = vmul.f32 %v439, %v460
        %v496 = vmul.f32 %v440, %v465
        %v497 = vmul.f32 %v441, %v465
        %v498 = vmul.f32 %v442, %v470
        %v499 = vmul.f32 %v443, %v470
        %v500 = vmul.f32 %v444, %v475
        %v501 = vmul.f32 %v445, %v475
        %v502 = vmul.f32 %v446, %v480
        %v503 = vmul.f32 %v447, %v480
        %v504 = vmul.f32 %v448, %v485
        %v505 = vmul.f32 %v449, %v485
        %v506 = vmul.f32 %v450, %v490
        %v507 = vmul.f32 %v451, %v490
        %509 = vset.pattern.permute.xlu0 0
        %510 = vperm.xlu0 %509, %v275
        %v511 = vpop.permute.xlu0 %510
        %514 = vset.pattern.permute.xlu0 0
        %515 = vperm.xlu0 %514, %v276
        %v516 = vpop.permute.xlu0 %515
        %519 = vset.pattern.permute.xlu0 0
        %520 = vperm.xlu0 %519, %v277
        %v521 = vpop.permute.xlu0 %520
        %524 = vset.pattern.permute.xlu0 0
        %525 = vperm.xlu0 %524, %v278
        %v526 = vpop.permute.xlu0 %525
        %529 = vset.pattern.permute.xlu0 0
        %530 = vperm.xlu0 %529, %v279
        %v531 = vpop.permute.xlu0 %530
        %534 = vset.pattern.permute.xlu0 0
        %535 = vperm.xlu0 %534, %v280
        %v536 = vpop.permute.xlu0 %535
        %539 = vset.pattern.permute.xlu0 0
        %540 = vperm.xlu0 %539, %v281
        %v541 = vpop.permute.xlu0 %540
        %544 = vset.pattern.permute.xlu0 0
        %545 = vperm.xlu0 %544, %v282
        %v546 = vpop.permute.xlu0 %545
        %v548 = vadd.f32 %v492, %v511
        %v549 = vadd.f32 %v493, %v511
        %v550 = vadd.f32 %v494, %v516
        %v551 = vadd.f32 %v495, %v516
        %v552 = vadd.f32 %v496, %v521
        %v553 = vadd.f32 %v497, %v521
        %v554 = vadd.f32 %v498, %v526
        %v555 = vadd.f32 %v499, %v526
        %v556 = vadd.f32 %v500, %v531
        %v557 = vadd.f32 %v501, %v531
        %v558 = vadd.f32 %v502, %v536
        %v559 = vadd.f32 %v503, %v536
        %v560 = vadd.f32 %v504, %v541
        %v561 = vadd.f32 %v505, %v541
        %v562 = vadd.f32 %v506, %v546
        %v563 = vadd.f32 %v507, %v546
        %v564 = vpack.c.bf16 %v550, %v548
        %v565 = vpack.c.bf16 %v551, %v549
        %v566 = vpack.c.bf16 %v554, %v552
        %v567 = vpack.c.bf16 %v555, %v553
        %v568 = vpack.c.bf16 %v558, %v556
        %v569 = vpack.c.bf16 %v559, %v557
        %v570 = vpack.c.bf16 %v562, %v560
        %v571 = vpack.c.bf16 %v563, %v561
        %v604 = vunpack.c.l.b16 %v283
        %v605 = vunpack.c.l.b16 %v284
        %v606 = vunpack.c.l.b16 %v285
        %v607 = vunpack.c.l.b16 %v286
        %v608 = vunpack.c.l.b16 %v287
        %v609 = vunpack.c.l.b16 %v288
        %v610 = vunpack.c.l.b16 %v289
        %v611 = vunpack.c.l.b16 %v290
        %v612 = vunpack.c.l.b16 %v291
        %v613 = vunpack.c.l.b16 %v292
        %v614 = vunpack.c.l.b16 %v293
        %v615 = vunpack.c.l.b16 %v294
        %v616 = vunpack.c.l.b16 %v295
        %v617 = vunpack.c.l.b16 %v296
        %v618 = vunpack.c.l.b16 %v297
        %v619 = vunpack.c.l.b16 %v298
        %v620 = vunpack.c.l.b16 %v299
        %v621 = vunpack.c.l.b16 %v300
        %v622 = vunpack.c.l.b16 %v301
        %v623 = vunpack.c.l.b16 %v302
        %v624 = vunpack.c.l.b16 %v303
        %v625 = vunpack.c.l.b16 %v304
        %v626 = vunpack.c.l.b16 %v305
        %v627 = vunpack.c.l.b16 %v306
        %v628 = vunpack.c.l.b16 %v307
        %v629 = vunpack.c.l.b16 %v308
        %v630 = vunpack.c.l.b16 %v309
        %v631 = vunpack.c.l.b16 %v310
        %v632 = vunpack.c.l.b16 %v311
        %v633 = vunpack.c.l.b16 %v312
        %v634 = vunpack.c.l.b16 %v313
        %v635 = vunpack.c.l.b16 %v314
        %v636 = vpack.c.b16 %v605, %v604
        %v637 = vpack.c.b16 %v607, %v606
        %v638 = vpack.c.b16 %v609, %v608
        %v639 = vpack.c.b16 %v611, %v610
        %v640 = vpack.c.b16 %v613, %v612
        %v641 = vpack.c.b16 %v615, %v614
        %v642 = vpack.c.b16 %v617, %v616
        %v643 = vpack.c.b16 %v619, %v618
        %v644 = vpack.c.b16 %v621, %v620
        %v645 = vpack.c.b16 %v623, %v622
        %v646 = vpack.c.b16 %v625, %v624
        %v647 = vpack.c.b16 %v627, %v626
        %v648 = vpack.c.b16 %v629, %v628
        %v649 = vpack.c.b16 %v631, %v630
        %v650 = vpack.c.b16 %v633, %v632
        %v651 = vpack.c.b16 %v635, %v634
        %vm652 = vcmask 523264
        %v654 = vsel %vm652, %v636, 0
        %v657 = vsel %vm652, %v637, 0
        %v660 = vsel %vm652, %v638, 0
        %v663 = vsel %vm652, %v639, 0
        %v666 = vsel %vm652, %v640, 0
        %v669 = vsel %vm652, %v641, 0
        %v672 = vsel %vm652, %v642, 0
        %v675 = vsel %vm652, %v643, 0
        %v678 = vsel %vm652, %v644, 0
        %v681 = vsel %vm652, %v645, 0
        %v684 = vsel %vm652, %v646, 0
        %v687 = vsel %vm652, %v647, 0
        %v690 = vsel %vm652, %v648, 0
        %v693 = vsel %vm652, %v649, 0
        %v696 = vsel %vm652, %v650, 0
        %v699 = vsel %vm652, %v651, 0
        %701 = vmatprep.subr.bf16.mxu0 0
        %702 = vmatpush1.bf16.msra.mxu0 0
        %703 = vmatprep.subr.bf16.mxu0 0
        %704 = vmatpush1.bf16.msra.mxu0 0
        %705 = vmatprep.subr.bf16.mxu0 0
        %706 = vmatpush1.bf16.msra.mxu0 0
        %707 = vmatprep.subr.bf16.mxu0 0
        %708 = vmatpush1.bf16.msra.mxu0 0
        %709 = vmatprep.subr.bf16.mxu0 %v571
        %710 = vmatpush1.bf16.msra.mxu0 %v570
        %711 = vmatprep.subr.bf16.mxu0 %v569
        %712 = vmatpush1.bf16.msra.mxu0 %v568
        %713 = vmatprep.subr.bf16.mxu0 %v567
        %714 = vmatpush1.bf16.msra.mxu0 %v566
        %715 = vmatprep.subr.bf16.mxu0 %v565
        %716 = vmatpush1.bf16.msra.mxu0 %v564
        %717 = vmatprep.subr.bf16.mxu0 0
        %718 = vmatpush2.bf16.msra.mxu0 0
        %719 = vmatprep.subr.bf16.mxu0 0
        %720 = vmatpush2.bf16.msra.mxu0 0
        %721 = vmatprep.subr.bf16.mxu0 0
        %722 = vmatpush2.bf16.msra.mxu0 0
        %723 = vmatprep.subr.bf16.mxu0 0
        %724 = vmatpush2.bf16.msra.mxu0 0
        %725 = vmatprep.subr.bf16.mxu0 0
        %726 = vmatpush2.bf16.msra.mxu0 0
        %727 = vmatprep.subr.bf16.mxu0 0
        %728 = vmatpush2.bf16.msra.mxu0 0
        %729 = vmatprep.subr.bf16.mxu0 0
        %730 = vmatpush2.bf16.msra.mxu0 0
        %731 = vmatprep.subr.bf16.mxu0 0
        %732 = vmatpush2.bf16.msra.mxu0 0
        %733 = vmatprep.mubr.bf16.mxu0 0
        %734 = vmatmul.mubr.bf16.gmra.mxu0 %v654
        %v735 = vpop.f32.mrf.mxu0
        %v736 = vadd.f32 0.0, %v735
        %v737 = vpop.f32.mrf.mxu0
        %v738 = vadd.f32 0.0, %v737
        %v739 = vpop.f32.mrf.mxu0
        %v740 = vadd.f32 0.0, %v739
        %v741 = vpop.f32.mrf.mxu0
        %v742 = vadd.f32 0.0, %v741
        %743 = vmatprep.mubr.bf16.mxu0 0
        %744 = vmatmul.mubr.bf16.gmra.mxu0 %v657
        %v745 = vpop.f32.mrf.mxu0
        %v746 = vadd.f32 0.0, %v745
        %v747 = vpop.f32.mrf.mxu0
        %v748 = vadd.f32 0.0, %v747
        %v749 = vpop.f32.mrf.mxu0
        %v750 = vadd.f32 0.0, %v749
        %v751 = vpop.f32.mrf.mxu0
        %v752 = vadd.f32 0.0, %v751
        %753 = vmatprep.mubr.bf16.mxu0 0
        %754 = vmatmul.mubr.bf16.gmra.mxu0 %v660
        %v755 = vpop.f32.mrf.mxu0
        %v756 = vadd.f32 0.0, %v755
        %v757 = vpop.f32.mrf.mxu0
        %v758 = vadd.f32 0.0, %v757
        %v759 = vpop.f32.mrf.mxu0
        %v760 = vadd.f32 0.0, %v759
        %v761 = vpop.f32.mrf.mxu0
        %v762 = vadd.f32 0.0, %v761
        %763 = vmatprep.mubr.bf16.mxu0 0
        %764 = vmatmul.mubr.bf16.gmra.mxu0 %v663
        %v765 = vpop.f32.mrf.mxu0
        %v766 = vadd.f32 0.0, %v765
        %v767 = vpop.f32.mrf.mxu0
        %v768 = vadd.f32 0.0, %v767
        %v769 = vpop.f32.mrf.mxu0
        %v770 = vadd.f32 0.0, %v769
        %v771 = vpop.f32.mrf.mxu0
        %v772 = vadd.f32 0.0, %v771
        %773 = vmatprep.mubr.bf16.mxu0 0
        %774 = vmatmul.mubr.bf16.gmra.mxu0 %v666
        %v775 = vpop.f32.mrf.mxu0
        %v776 = vadd.f32 0.0, %v775
        %v777 = vpop.f32.mrf.mxu0
        %v778 = vadd.f32 0.0, %v777
        %v779 = vpop.f32.mrf.mxu0
        %v780 = vadd.f32 0.0, %v779
        %v781 = vpop.f32.mrf.mxu0
        %v782 = vadd.f32 0.0, %v781
        %783 = vmatprep.mubr.bf16.mxu0 0
        %784 = vmatmul.mubr.bf16.gmra.mxu0 %v669
        %v785 = vpop.f32.mrf.mxu0
        %v786 = vadd.f32 0.0, %v785
        %v787 = vpop.f32.mrf.mxu0
        %v788 = vadd.f32 0.0, %v787
        %v789 = vpop.f32.mrf.mxu0
        %v790 = vadd.f32 0.0, %v789
        %v791 = vpop.f32.mrf.mxu0
        %v792 = vadd.f32 0.0, %v791
        %793 = vmatprep.mubr.bf16.mxu0 0
        %794 = vmatmul.mubr.bf16.gmra.mxu0 %v672
        %v795 = vpop.f32.mrf.mxu0
        %v796 = vadd.f32 0.0, %v795
        %v797 = vpop.f32.mrf.mxu0
        %v798 = vadd.f32 0.0, %v797
        %v799 = vpop.f32.mrf.mxu0
        %v800 = vadd.f32 0.0, %v799
        %v801 = vpop.f32.mrf.mxu0
        %v802 = vadd.f32 0.0, %v801
        %803 = vmatprep.mubr.bf16.mxu0 0
        %804 = vmatmul.mubr.bf16.gmra.mxu0 %v675
        %v805 = vpop.f32.mrf.mxu0
        %v806 = vadd.f32 0.0, %v805
        %v807 = vpop.f32.mrf.mxu0
        %v808 = vadd.f32 0.0, %v807
        %v809 = vpop.f32.mrf.mxu0
        %v810 = vadd.f32 0.0, %v809
        %v811 = vpop.f32.mrf.mxu0
        %v812 = vadd.f32 0.0, %v811
        %813 = vmatprep.mubr.bf16.mxu0 0
        %814 = vmatmul.mubr.bf16.gmra.mxu0 %v678
        %v815 = vpop.f32.mrf.mxu0
        %v816 = vadd.f32 0.0, %v815
        %v817 = vpop.f32.mrf.mxu0
        %v818 = vadd.f32 0.0, %v817
        %v819 = vpop.f32.mrf.mxu0
        %v820 = vadd.f32 0.0, %v819
        %v821 = vpop.f32.mrf.mxu0
        %v822 = vadd.f32 0.0, %v821
        %823 = vmatprep.mubr.bf16.mxu0 0
        %824 = vmatmul.mubr.bf16.gmra.mxu0 %v681
        %v825 = vpop.f32.mrf.mxu0
        %v826 = vadd.f32 0.0, %v825
        %v827 = vpop.f32.mrf.mxu0
        %v828 = vadd.f32 0.0, %v827
        %v829 = vpop.f32.mrf.mxu0
        %v830 = vadd.f32 0.0, %v829
        %v831 = vpop.f32.mrf.mxu0
        %v832 = vadd.f32 0.0, %v831
        %833 = vmatprep.mubr.bf16.mxu0 0
        %834 = vmatmul.mubr.bf16.gmra.mxu0 %v684
        %v835 = vpop.f32.mrf.mxu0
        %v836 = vadd.f32 0.0, %v835
        %v837 = vpop.f32.mrf.mxu0
        %v838 = vadd.f32 0.0, %v837
        %v839 = vpop.f32.mrf.mxu0
        %v840 = vadd.f32 0.0, %v839
        %v841 = vpop.f32.mrf.mxu0
        %v842 = vadd.f32 0.0, %v841
        %843 = vmatprep.mubr.bf16.mxu0 0
        %844 = vmatmul.mubr.bf16.gmra.mxu0 %v687
        %v845 = vpop.f32.mrf.mxu0
        %v846 = vadd.f32 0.0, %v845
        %v847 = vpop.f32.mrf.mxu0
        %v848 = vadd.f32 0.0, %v847
        %v849 = vpop.f32.mrf.mxu0
        %v850 = vadd.f32 0.0, %v849
        %v851 = vpop.f32.mrf.mxu0
        %v852 = vadd.f32 0.0, %v851
        %853 = vmatprep.mubr.bf16.mxu0 0
        %854 = vmatmul.mubr.bf16.gmra.mxu0 %v690
        %v855 = vpop.f32.mrf.mxu0
        %v856 = vadd.f32 0.0, %v855
        %v857 = vpop.f32.mrf.mxu0
        %v858 = vadd.f32 0.0, %v857
        %v859 = vpop.f32.mrf.mxu0
        %v860 = vadd.f32 0.0, %v859
        %v861 = vpop.f32.mrf.mxu0
        %v862 = vadd.f32 0.0, %v861
        %863 = vmatprep.mubr.bf16.mxu0 0
        %864 = vmatmul.mubr.bf16.gmra.mxu0 %v693
        %v865 = vpop.f32.mrf.mxu0
        %v866 = vadd.f32 0.0, %v865
        %v867 = vpop.f32.mrf.mxu0
        %v868 = vadd.f32 0.0, %v867
        %v869 = vpop.f32.mrf.mxu0
        %v870 = vadd.f32 0.0, %v869
        %v871 = vpop.f32.mrf.mxu0
        %v872 = vadd.f32 0.0, %v871
        %873 = vmatprep.mubr.bf16.mxu0 0
        %874 = vmatmul.mubr.bf16.gmra.mxu0 %v696
        %v875 = vpop.f32.mrf.mxu0
        %v876 = vadd.f32 0.0, %v875
        %v877 = vpop.f32.mrf.mxu0
        %v878 = vadd.f32 0.0, %v877
        %v879 = vpop.f32.mrf.mxu0
        %v880 = vadd.f32 0.0, %v879
        %v881 = vpop.f32.mrf.mxu0
        %v882 = vadd.f32 0.0, %v881
        %883 = vmatprep.mubr.bf16.mxu0 0
        %884 = vmatmul.mubr.bf16.gmra.mxu0 %v699
        %v885 = vpop.f32.mrf.mxu0
        %v886 = vadd.f32 0.0, %v885
        %v887 = vpop.f32.mrf.mxu0
        %v888 = vadd.f32 0.0, %v887
        %v889 = vpop.f32.mrf.mxu0
        %v890 = vadd.f32 0.0, %v889
        %v891 = vpop.f32.mrf.mxu0
        %v892 = vadd.f32 0.0, %v891
        %893 = vdwg.mxu0
        %v894 = vmul.f32 %v816, 0.5
        %v895 = vmul.f32 %v818, 0.5
        %v896 = vmul.f32 %v820, 0.5
        %v897 = vmul.f32 %v822, 0.5
        %v898 = vmul.f32 %v826, 0.5
        %v899 = vmul.f32 %v828, 0.5
        %v900 = vmul.f32 %v830, 0.5
        %v901 = vmul.f32 %v832, 0.5
        %v902 = vmul.f32 %v836, 0.5
        %v903 = vmul.f32 %v838, 0.5
        %v904 = vmul.f32 %v840, 0.5
        %v905 = vmul.f32 %v842, 0.5
        %v906 = vmul.f32 %v846, 0.5
        %v907 = vmul.f32 %v848, 0.5
        %v908 = vmul.f32 %v850, 0.5
        %v909 = vmul.f32 %v852, 0.5
        %v910 = vmul.f32 %v856, 0.5
        %v911 = vmul.f32 %v858, 0.5
        %v912 = vmul.f32 %v860, 0.5
        %v913 = vmul.f32 %v862, 0.5
        %v914 = vmul.f32 %v866, 0.5
        %v915 = vmul.f32 %v868, 0.5
        %v916 = vmul.f32 %v870, 0.5
        %v917 = vmul.f32 %v872, 0.5
        %v918 = vmul.f32 %v876, 0.5
        %v919 = vmul.f32 %v878, 0.5
        %v920 = vmul.f32 %v880, 0.5
        %v921 = vmul.f32 %v882, 0.5
        %v922 = vmul.f32 %v886, 0.5
        %v923 = vmul.f32 %v888, 0.5
        %v924 = vmul.f32 %v890, 0.5
        %v925 = vmul.f32 %v892, 0.5
        %v926 = vtanh.pop %v894
        %v927 = vtanh.pop %v895
        %v928 = vtanh.pop %v896
        %v929 = vtanh.pop %v897
        %v930 = vtanh.pop %v898
        %v931 = vtanh.pop %v899
        %v932 = vtanh.pop %v900
        %v933 = vtanh.pop %v901
        %v934 = vtanh.pop %v902
        %v935 = vtanh.pop %v903
        %v936 = vtanh.pop %v904
        %v937 = vtanh.pop %v905
        %v938 = vtanh.pop %v906
        %v939 = vtanh.pop %v907
        %v940 = vtanh.pop %v908
        %v941 = vtanh.pop %v909
        %v942 = vtanh.pop %v910
        %v943 = vtanh.pop %v911
        %v944 = vtanh.pop %v912
        %v945 = vtanh.pop %v913
        %v946 = vtanh.pop %v914
        %v947 = vtanh.pop %v915
        %v948 = vtanh.pop %v916
        %v949 = vtanh.pop %v917
        %v950 = vtanh.pop %v918
        %v951 = vtanh.pop %v919
        %v952 = vtanh.pop %v920
        %v953 = vtanh.pop %v921
        %v954 = vtanh.pop %v922
        %v955 = vtanh.pop %v923
        %v956 = vtanh.pop %v924
        %v957 = vtanh.pop %v925
        %v958 = vadd.f32 %v926, 1.0
        %v959 = vadd.f32 %v927, 1.0
        %v960 = vadd.f32 %v928, 1.0
        %v961 = vadd.f32 %v929, 1.0
        %v962 = vadd.f32 %v930, 1.0
        %v963 = vadd.f32 %v931, 1.0
        %v964 = vadd.f32 %v932, 1.0
        %v965 = vadd.f32 %v933, 1.0
        %v966 = vadd.f32 %v934, 1.0
        %v967 = vadd.f32 %v935, 1.0
        %v968 = vadd.f32 %v936, 1.0
        %v969 = vadd.f32 %v937, 1.0
        %v970 = vadd.f32 %v938, 1.0
        %v971 = vadd.f32 %v939, 1.0
        %v972 = vadd.f32 %v940, 1.0
        %v973 = vadd.f32 %v941, 1.0
        %v974 = vadd.f32 %v942, 1.0
        %v975 = vadd.f32 %v943, 1.0
        %v976 = vadd.f32 %v944, 1.0
        %v977 = vadd.f32 %v945, 1.0
        %v978 = vadd.f32 %v946, 1.0
        %v979 = vadd.f32 %v947, 1.0
        %v980 = vadd.f32 %v948, 1.0
        %v981 = vadd.f32 %v949, 1.0
        %v982 = vadd.f32 %v950, 1.0
        %v983 = vadd.f32 %v951, 1.0
        %v984 = vadd.f32 %v952, 1.0
        %v985 = vadd.f32 %v953, 1.0
        %v986 = vadd.f32 %v954, 1.0
        %v987 = vadd.f32 %v955, 1.0
        %v988 = vadd.f32 %v956, 1.0
        %v989 = vadd.f32 %v957, 1.0
        %v990 = vmul.f32 %v958, 0.5
        %v991 = vmul.f32 %v959, 0.5
        %v992 = vmul.f32 %v960, 0.5
        %v993 = vmul.f32 %v961, 0.5
        %v994 = vmul.f32 %v962, 0.5
        %v995 = vmul.f32 %v963, 0.5
        %v996 = vmul.f32 %v964, 0.5
        %v997 = vmul.f32 %v965, 0.5
        %v998 = vmul.f32 %v966, 0.5
        %v999 = vmul.f32 %v967, 0.5
        %v1000 = vmul.f32 %v968, 0.5
        %v1001 = vmul.f32 %v969, 0.5
        %v1002 = vmul.f32 %v970, 0.5
        %v1003 = vmul.f32 %v971, 0.5
        %v1004 = vmul.f32 %v972, 0.5
        %v1005 = vmul.f32 %v973, 0.5
        %v1006 = vmul.f32 %v974, 0.5
        %v1007 = vmul.f32 %v975, 0.5
        %v1008 = vmul.f32 %v976, 0.5
        %v1009 = vmul.f32 %v977, 0.5
        %v1010 = vmul.f32 %v978, 0.5
        %v1011 = vmul.f32 %v979, 0.5
        %v1012 = vmul.f32 %v980, 0.5
        %v1013 = vmul.f32 %v981, 0.5
        %v1014 = vmul.f32 %v982, 0.5
        %v1015 = vmul.f32 %v983, 0.5
        %v1016 = vmul.f32 %v984, 0.5
        %v1017 = vmul.f32 %v985, 0.5
        %v1018 = vmul.f32 %v986, 0.5
        %v1019 = vmul.f32 %v987, 0.5
        %v1020 = vmul.f32 %v988, 0.5
        %v1021 = vmul.f32 %v989, 0.5
        %v1022 = vmul.f32 %v816, %v990
        %v1023 = vmul.f32 %v818, %v991
        %v1024 = vmul.f32 %v820, %v992
        %v1025 = vmul.f32 %v822, %v993
        %v1026 = vmul.f32 %v826, %v994
        %v1027 = vmul.f32 %v828, %v995
        %v1028 = vmul.f32 %v830, %v996
        %v1029 = vmul.f32 %v832, %v997
        %v1030 = vmul.f32 %v836, %v998
        %v1031 = vmul.f32 %v838, %v999
        %v1032 = vmul.f32 %v840, %v1000
        %v1033 = vmul.f32 %v842, %v1001
        %v1034 = vmul.f32 %v846, %v1002
        %v1035 = vmul.f32 %v848, %v1003
        %v1036 = vmul.f32 %v850, %v1004
        %v1037 = vmul.f32 %v852, %v1005
        %v1038 = vmul.f32 %v856, %v1006
        %v1039 = vmul.f32 %v858, %v1007
        %v1040 = vmul.f32 %v860, %v1008
        %v1041 = vmul.f32 %v862, %v1009
        %v1042 = vmul.f32 %v866, %v1010
        %v1043 = vmul.f32 %v868, %v1011
        %v1044 = vmul.f32 %v870, %v1012
        %v1045 = vmul.f32 %v872, %v1013
        %v1046 = vmul.f32 %v876, %v1014
        %v1047 = vmul.f32 %v878, %v1015
        %v1048 = vmul.f32 %v880, %v1016
        %v1049 = vmul.f32 %v882, %v1017
        %v1050 = vmul.f32 %v886, %v1018
        %v1051 = vmul.f32 %v888, %v1019
        %v1052 = vmul.f32 %v890, %v1020
        %v1053 = vmul.f32 %v892, %v1021
        %v1054 = vmul.f32 %v736, %v1022
        %v1055 = vmul.f32 %v738, %v1023
        %v1056 = vmul.f32 %v740, %v1024
        %v1057 = vmul.f32 %v742, %v1025
        %v1058 = vmul.f32 %v746, %v1026
        %v1059 = vmul.f32 %v748, %v1027
        %v1060 = vmul.f32 %v750, %v1028
        %v1061 = vmul.f32 %v752, %v1029
        %v1062 = vmul.f32 %v756, %v1030
        %v1063 = vmul.f32 %v758, %v1031
        %v1064 = vmul.f32 %v760, %v1032
        %v1065 = vmul.f32 %v762, %v1033
        %v1066 = vmul.f32 %v766, %v1034
        %v1067 = vmul.f32 %v768, %v1035
        %v1068 = vmul.f32 %v770, %v1036
        %v1069 = vmul.f32 %v772, %v1037
        %v1070 = vmul.f32 %v776, %v1038
        %v1071 = vmul.f32 %v778, %v1039
        %v1072 = vmul.f32 %v780, %v1040
        %v1073 = vmul.f32 %v782, %v1041
        %v1074 = vmul.f32 %v786, %v1042
        %v1075 = vmul.f32 %v788, %v1043
        %v1076 = vmul.f32 %v790, %v1044
        %v1077 = vmul.f32 %v792, %v1045
        %v1078 = vmul.f32 %v796, %v1046
        %v1079 = vmul.f32 %v798, %v1047
        %v1080 = vmul.f32 %v800, %v1048
        %v1081 = vmul.f32 %v802, %v1049
        %v1082 = vmul.f32 %v806, %v1050
        %v1083 = vmul.f32 %v808, %v1051
        %v1084 = vmul.f32 %v810, %v1052
        %v1085 = vmul.f32 %v812, %v1053
        %v1086 = vpack.c.bf16 %v1056, %v1054
        %v1087 = vpack.c.bf16 %v1057, %v1055
        %v1088 = vpack.c.bf16 %v1060, %v1058
        %v1089 = vpack.c.bf16 %v1061, %v1059
        %v1090 = vpack.c.bf16 %v1064, %v1062
        %v1091 = vpack.c.bf16 %v1065, %v1063
        %v1092 = vpack.c.bf16 %v1068, %v1066
        %v1093 = vpack.c.bf16 %v1069, %v1067
        %v1094 = vpack.c.bf16 %v1072, %v1070
        %v1095 = vpack.c.bf16 %v1073, %v1071
        %v1096 = vpack.c.bf16 %v1076, %v1074
        %v1097 = vpack.c.bf16 %v1077, %v1075
        %v1098 = vpack.c.bf16 %v1080, %v1078
        %v1099 = vpack.c.bf16 %v1081, %v1079
        %v1100 = vpack.c.bf16 %v1084, %v1082
        %v1101 = vpack.c.bf16 %v1085, %v1083
        %v1110 = vunpack.c.l.b16 %v315
        %v1111 = vunpack.c.l.b16 %v316
        %v1112 = vunpack.c.l.b16 %v317
        %v1113 = vunpack.c.l.b16 %v318
        %v1114 = vunpack.c.l.b16 %v319
        %v1115 = vunpack.c.l.b16 %v320
        %v1116 = vunpack.c.l.b16 %v321
        %v1117 = vunpack.c.l.b16 %v322
        %v1118 = vpack.c.b16 %v1111, %v1110
        %v1119 = vpack.c.b16 %v1113, %v1112
        %v1120 = vpack.c.b16 %v1115, %v1114
        %v1121 = vpack.c.b16 %v1117, %v1116
        %1126 = vmatprep.subr.bf16.mxu0 %v1101
        %1127 = vmatpush1.bf16.msra.mxu0 %v1100
        %1128 = vmatprep.subr.bf16.mxu0 %v1099
        %1129 = vmatpush1.bf16.msra.mxu0 %v1098
        %1130 = vmatprep.subr.bf16.mxu0 %v1097
        %1131 = vmatpush1.bf16.msra.mxu0 %v1096
        %1132 = vmatprep.subr.bf16.mxu0 %v1095
        %1133 = vmatpush1.bf16.msra.mxu0 %v1094
        %1134 = vmatprep.subr.bf16.mxu0 %v1093
        %1135 = vmatpush1.bf16.msra.mxu0 %v1092
        %1136 = vmatprep.subr.bf16.mxu0 %v1091
        %1137 = vmatpush1.bf16.msra.mxu0 %v1090
        %1138 = vmatprep.subr.bf16.mxu0 %v1089
        %1139 = vmatpush1.bf16.msra.mxu0 %v1088
        %1140 = vmatprep.subr.bf16.mxu0 %v1087
        %1141 = vmatpush1.bf16.msra.mxu0 %v1086
        %1142 = vmatprep.subr.bf16.mxu0 0
        %1143 = vmatpush2.bf16.msra.mxu0 0
        %1144 = vmatprep.subr.bf16.mxu0 0
        %1145 = vmatpush2.bf16.msra.mxu0 0
        %1146 = vmatprep.subr.bf16.mxu0 0
        %1147 = vmatpush2.bf16.msra.mxu0 0
        %1148 = vmatprep.subr.bf16.mxu0 0
        %1149 = vmatpush2.bf16.msra.mxu0 0
        %1150 = vmatprep.subr.bf16.mxu0 0
        %1151 = vmatpush2.bf16.msra.mxu0 0
        %1152 = vmatprep.subr.bf16.mxu0 0
        %1153 = vmatpush2.bf16.msra.mxu0 0
        %1154 = vmatprep.subr.bf16.mxu0 0
        %1155 = vmatpush2.bf16.msra.mxu0 0
        %1156 = vmatprep.subr.bf16.mxu0 0
        %1157 = vmatpush2.bf16.msra.mxu0 0
        %1158 = vmatprep.mubr.bf16.mxu0 0
        %1159 = vmatmul.mubr.bf16.gmra.mxu0 %v1118
        %v1160 = vpop.f32.mrf.mxu0
        %v1161 = vadd.f32 0.0, %v1160
        %v1162 = vpop.f32.mrf.mxu0
        %v1163 = vadd.f32 0.0, %v1162
        %v1164 = vpop.f32.mrf.mxu0
        %v1165 = vadd.f32 0.0, %v1164
        %v1166 = vpop.f32.mrf.mxu0
        %v1167 = vadd.f32 0.0, %v1166
        %1168 = vmatprep.mubr.bf16.mxu0 0
        %1169 = vmatmul.mubr.bf16.gmra.mxu0 %v1119
        %v1170 = vpop.f32.mrf.mxu0
        %v1171 = vadd.f32 0.0, %v1170
        %v1172 = vpop.f32.mrf.mxu0
        %v1173 = vadd.f32 0.0, %v1172
        %v1174 = vpop.f32.mrf.mxu0
        %v1175 = vadd.f32 0.0, %v1174
        %v1176 = vpop.f32.mrf.mxu0
        %v1177 = vadd.f32 0.0, %v1176
        %1178 = vmatprep.mubr.bf16.mxu0 0
        %1179 = vmatmul.mubr.bf16.gmra.mxu0 %v1120
        %v1180 = vpop.f32.mrf.mxu0
        %v1181 = vadd.f32 0.0, %v1180
        %v1182 = vpop.f32.mrf.mxu0
        %v1183 = vadd.f32 0.0, %v1182
        %v1184 = vpop.f32.mrf.mxu0
        %v1185 = vadd.f32 0.0, %v1184
        %v1186 = vpop.f32.mrf.mxu0
        %v1187 = vadd.f32 0.0, %v1186
        %1188 = vmatprep.mubr.bf16.mxu0 0
        %1189 = vmatmul.mubr.bf16.gmra.mxu0 %v1121
        %v1190 = vpop.f32.mrf.mxu0
        %v1191 = vadd.f32 0.0, %v1190
        %v1192 = vpop.f32.mrf.mxu0
        %v1193 = vadd.f32 0.0, %v1192
        %v1194 = vpop.f32.mrf.mxu0
        %v1195 = vadd.f32 0.0, %v1194
        %v1196 = vpop.f32.mrf.mxu0
        %v1197 = vadd.f32 0.0, %v1196
        %1198 = vdwg.mxu0
        %1199 = vst [vmem:[%s261] sm:$0xff] %v1161
        %1200 = vst [vmem:[%s261 + $0x8] sm:$0xff] %v1163
        %1201 = vst [vmem:[%s261 + $0x10] sm:$0xff] %v1165
        %1202 = vst [vmem:[%s261 + $0x18] sm:$0xff] %v1167
        %1203 = vst [vmem:[%s261 + $0x20] sm:$0xff] %v1171
        %1204 = vst [vmem:[%s261 + $0x28] sm:$0xff] %v1173
        %1205 = vst [vmem:[%s261 + $0x30] sm:$0xff] %v1175
        %1206 = vst [vmem:[%s261 + $0x38] sm:$0xff] %v1177
        %1207 = vst [vmem:[%s261 + $0x40] sm:$0xff] %v1181
        %1208 = vst [vmem:[%s261 + $0x48] sm:$0xff] %v1183
        %1209 = vst [vmem:[%s261 + $0x50] sm:$0xff] %v1185
        %1210 = vst [vmem:[%s261 + $0x58] sm:$0xff] %v1187
        %1211 = vst [vmem:[%s261 + $0x60] sm:$0xff] %v1191
        %1212 = vst [vmem:[%s261 + $0x68] sm:$0xff] %v1193
        %1213 = vst [vmem:[%s261 + $0x70] sm:$0xff] %v1195
        %1214 = vst [vmem:[%s261 + $0x78] sm:$0xff] %v1197
        %s1215 = scalar_lea.vmem %s235, 128 [#allocation2]
        %v1216 = vld [vmem:[%s1215] sm:$0xff]
        %v1217 = vld [vmem:[%s1215 + $0x8] sm:$0xff]
        %v1218 = vld [vmem:[%s1215 + $0x10] sm:$0xff]
        %v1219 = vld [vmem:[%s1215 + $0x18] sm:$0xff]
        %v1220 = vld [vmem:[%s1215 + $0x20] sm:$0xff]
        %v1221 = vld [vmem:[%s1215 + $0x28] sm:$0xff]
        %v1222 = vld [vmem:[%s1215 + $0x30] sm:$0xff]
        %v1223 = vld [vmem:[%s1215 + $0x38] sm:$0xff]
        %v1224 = vld [vmem:[%s1215 + $0x40] sm:$0xff]
        %v1225 = vld [vmem:[%s1215 + $0x48] sm:$0xff]
        %v1226 = vld [vmem:[%s1215 + $0x50] sm:$0xff]
        %v1227 = vld [vmem:[%s1215 + $0x58] sm:$0xff]
        %v1228 = vld [vmem:[%s1215 + $0x60] sm:$0xff]
        %v1229 = vld [vmem:[%s1215 + $0x68] sm:$0xff]
        %v1230 = vld [vmem:[%s1215 + $0x70] sm:$0xff]
        %v1231 = vld [vmem:[%s1215 + $0x78] sm:$0xff]
        %v1232 = vadd.f32 %v1216, %v1218
        %v1233 = vadd.f32 %v1232, %v1220
        %v1234 = vadd.f32 %v1233, %v1222
        %v1235 = vadd.f32 %v1234, %v1224
        %v1236 = vadd.f32 %v1235, %v1226
        %v1237 = vadd.f32 %v1236, %v1228
        %v1238 = vadd.f32 %v1237, %v1230
        %v1239 = vrot.slane %v1238, 4
        %v1240 = vadd.f32 %v1238, %v1239
        %v1241 = vrot.slane %v1240, 2
        %v1242 = vadd.f32 %v1240, %v1241
        %v1243 = vrot.slane %v1242, 1
        %v1244 = vadd.f32 %v1242, %v1243
        %v1245 = vadd.f32 %v1217, %v1219
        %v1246 = vadd.f32 %v1245, %v1221
        %v1247 = vadd.f32 %v1246, %v1223
        %v1248 = vadd.f32 %v1247, %v1225
        %v1249 = vadd.f32 %v1248, %v1227
        %v1250 = vadd.f32 %v1249, %v1229
        %v1251 = vadd.f32 %v1250, %v1231
        %v1252 = vrot.slane %v1251, 4
        %v1253 = vadd.f32 %v1251, %v1252
        %v1254 = vrot.slane %v1253, 2
        %v1255 = vadd.f32 %v1253, %v1254
        %v1256 = vrot.slane %v1255, 1
        %v1257 = vadd.f32 %v1255, %v1256
        %v1258 = vmul.f32 %v1244, %v365
        %v1259 = vmul.f32 %v1257, %v365
        %v1260 = vmul.f32 %v1216, %v1216
        %v1261 = vmul.f32 %v1217, %v1217
        %v1262 = vmul.f32 %v1218, %v1218
        %v1263 = vmul.f32 %v1219, %v1219
        %v1264 = vmul.f32 %v1220, %v1220
        %v1265 = vmul.f32 %v1221, %v1221
        %v1266 = vmul.f32 %v1222, %v1222
        %v1267 = vmul.f32 %v1223, %v1223
        %v1268 = vmul.f32 %v1224, %v1224
        %v1269 = vmul.f32 %v1225, %v1225
        %v1270 = vmul.f32 %v1226, %v1226
        %v1271 = vmul.f32 %v1227, %v1227
        %v1272 = vmul.f32 %v1228, %v1228
        %v1273 = vmul.f32 %v1229, %v1229
        %v1274 = vmul.f32 %v1230, %v1230
        %v1275 = vmul.f32 %v1231, %v1231
        %v1276 = vadd.f32 %v1260, %v1262
        %v1277 = vadd.f32 %v1276, %v1264
        %v1278 = vadd.f32 %v1277, %v1266
        %v1279 = vadd.f32 %v1278, %v1268
        %v1280 = vadd.f32 %v1279, %v1270
        %v1281 = vadd.f32 %v1280, %v1272
        %v1282 = vadd.f32 %v1281, %v1274
        %v1283 = vrot.slane %v1282, 4
        %v1284 = vadd.f32 %v1282, %v1283
        %v1285 = vrot.slane %v1284, 2
        %v1286 = vadd.f32 %v1284, %v1285
        %v1287 = vrot.slane %v1286, 1
        %v1288 = vadd.f32 %v1286, %v1287
        %v1289 = vadd.f32 %v1261, %v1263
        %v1290 = vadd.f32 %v1289, %v1265
        %v1291 = vadd.f32 %v1290, %v1267
        %v1292 = vadd.f32 %v1291, %v1269
        %v1293 = vadd.f32 %v1292, %v1271
        %v1294 = vadd.f32 %v1293, %v1273
        %v1295 = vadd.f32 %v1294, %v1275
        %v1296 = vrot.slane %v1295, 4
        %v1297 = vadd.f32 %v1295, %v1296
        %v1298 = vrot.slane %v1297, 2
        %v1299 = vadd.f32 %v1297, %v1298
        %v1300 = vrot.slane %v1299, 1
        %v1301 = vadd.f32 %v1299, %v1300
        %v1302 = vmul.f32 %v1288, %v365
        %v1303 = vmul.f32 %v1301, %v365
        %v1304 = vmul.f32 %v1258, %v1258
        %v1305 = vmul.f32 %v1259, %v1259
        %v1306 = vsub.f32 %v1302, %v1304
        %v1307 = vsub.f32 %v1303, %v1305
        %v1308 = vsub.f32 %v1216, %v1258
        %v1309 = vsub.f32 %v1217, %v1259
        %v1310 = vsub.f32 %v1218, %v1258
        %v1311 = vsub.f32 %v1219, %v1259
        %v1312 = vsub.f32 %v1220, %v1258
        %v1313 = vsub.f32 %v1221, %v1259
        %v1314 = vsub.f32 %v1222, %v1258
        %v1315 = vsub.f32 %v1223, %v1259
        %v1316 = vsub.f32 %v1224, %v1258
        %v1317 = vsub.f32 %v1225, %v1259
        %v1318 = vsub.f32 %v1226, %v1258
        %v1319 = vsub.f32 %v1227, %v1259
        %v1320 = vsub.f32 %v1228, %v1258
        %v1321 = vsub.f32 %v1229, %v1259
        %v1322 = vsub.f32 %v1230, %v1258
        %v1323 = vsub.f32 %v1231, %v1259
        %v1324 = vadd.f32 %v1306, 1e-05
        %v1325 = vadd.f32 %v1307, 1e-05
        %v1326 = vrsqrt.pop %v1324
        %v1327 = vrsqrt.pop %v1325
        %v1328 = vmul.f32 %v1308, %v1326
        %v1329 = vmul.f32 %v1309, %v1327
        %v1330 = vmul.f32 %v1310, %v1326
        %v1331 = vmul.f32 %v1311, %v1327
        %v1332 = vmul.f32 %v1312, %v1326
        %v1333 = vmul.f32 %v1313, %v1327
        %v1334 = vmul.f32 %v1314, %v1326
        %v1335 = vmul.f32 %v1315, %v1327
        %v1336 = vmul.f32 %v1316, %v1326
        %v1337 = vmul.f32 %v1317, %v1327
        %v1338 = vmul.f32 %v1318, %v1326
        %v1339 = vmul.f32 %v1319, %v1327
        %v1340 = vmul.f32 %v1320, %v1326
        %v1341 = vmul.f32 %v1321, %v1327
        %v1342 = vmul.f32 %v1322, %v1326
        %v1343 = vmul.f32 %v1323, %v1327
        %v1344 = vmul.f32 %v1328, %v455
        %v1345 = vmul.f32 %v1329, %v455
        %v1346 = vmul.f32 %v1330, %v460
        %v1347 = vmul.f32 %v1331, %v460
        %v1348 = vmul.f32 %v1332, %v465
        %v1349 = vmul.f32 %v1333, %v465
        %v1350 = vmul.f32 %v1334, %v470
        %v1351 = vmul.f32 %v1335, %v470
        %v1352 = vmul.f32 %v1336, %v475
        %v1353 = vmul.f32 %v1337, %v475
        %v1354 = vmul.f32 %v1338, %v480
        %v1355 = vmul.f32 %v1339, %v480
        %v1356 = vmul.f32 %v1340, %v485
        %v1357 = vmul.f32 %v1341, %v485
        %v1358 = vmul.f32 %v1342, %v490
        %v1359 = vmul.f32 %v1343, %v490
        %v1360 = vadd.f32 %v1344, %v511
        %v1361 = vadd.f32 %v1345, %v511
        %v1362 = vadd.f32 %v1346, %v516
        %v1363 = vadd.f32 %v1347, %v516
        %v1364 = vadd.f32 %v1348, %v521
        %v1365 = vadd.f32 %v1349, %v521
        %v1366 = vadd.f32 %v1350, %v526
        %v1367 = vadd.f32 %v1351, %v526
        %v1368 = vadd.f32 %v1352, %v531
        %v1369 = vadd.f32 %v1353, %v531
        %v1370 = vadd.f32 %v1354, %v536
        %v1371 = vadd.f32 %v1355, %v536
        %v1372 = vadd.f32 %v1356, %v541
        %v1373 = vadd.f32 %v1357, %v541
        %v1374 = vadd.f32 %v1358, %v546
        %v1375 = vadd.f32 %v1359, %v546
        %v1376 = vpack.c.bf16 %v1362, %v1360
        %v1377 = vpack.c.bf16 %v1363, %v1361
        %v1378 = vpack.c.bf16 %v1366, %v1364
        %v1379 = vpack.c.bf16 %v1367, %v1365
        %v1380 = vpack.c.bf16 %v1370, %v1368
        %v1381 = vpack.c.bf16 %v1371, %v1369
        %v1382 = vpack.c.bf16 %v1374, %v1372
        %v1383 = vpack.c.bf16 %v1375, %v1373
        %1384 = vmatprep.subr.bf16.mxu0 0
        %1385 = vmatpush1.bf16.msra.mxu0 0
        %1386 = vmatprep.subr.bf16.mxu0 0
        %1387 = vmatpush1.bf16.msra.mxu0 0
        %1388 = vmatprep.subr.bf16.mxu0 0
        %1389 = vmatpush1.bf16.msra.mxu0 0
        %1390 = vmatprep.subr.bf16.mxu0 0
        %1391 = vmatpush1.bf16.msra.mxu0 0
        %1392 = vmatprep.subr.bf16.mxu0 %v1383
        %1393 = vmatpush1.bf16.msra.mxu0 %v1382
        %1394 = vmatprep.subr.bf16.mxu0 %v1381
        %1395 = vmatpush1.bf16.msra.mxu0 %v1380
        %1396 = vmatprep.subr.bf16.mxu0 %v1379
        %1397 = vmatpush1.bf16.msra.mxu0 %v1378
        %1398 = vmatprep.subr.bf16.mxu0 %v1377
        %1399 = vmatpush1.bf16.msra.mxu0 %v1376
        %1400 = vmatprep.subr.bf16.mxu0 0
        %1401 = vmatpush2.bf16.msra.mxu0 0
        %1402 = vmatprep.subr.bf16.mxu0 0
        %1403 = vmatpush2.bf16.msra.mxu0 0
        %1404 = vmatprep.subr.bf16.mxu0 0
        %1405 = vmatpush2.bf16.msra.mxu0 0
        %1406 = vmatprep.subr.bf16.mxu0 0
        %1407 = vmatpush2.bf16.msra.mxu0 0
        %1408 = vmatprep.subr.bf16.mxu0 0
        %1409 = vmatpush2.bf16.msra.mxu0 0
        %1410 = vmatprep.subr.bf16.mxu0 0
        %1411 = vmatpush2.bf16.msra.mxu0 0
        %1412 = vmatprep.subr.bf16.mxu0 0
        %1413 = vmatpush2.bf16.msra.mxu0 0
        %1414 = vmatprep.subr.bf16.mxu0 0
        %1415 = vmatpush2.bf16.msra.mxu0 0
        %1416 = vmatprep.mubr.bf16.mxu0 0
        %1417 = vmatmul.mubr.bf16.gmra.mxu0 %v654
        %v1418 = vpop.f32.mrf.mxu0
        %v1419 = vadd.f32 0.0, %v1418
        %v1420 = vpop.f32.mrf.mxu0
        %v1421 = vadd.f32 0.0, %v1420
        %v1422 = vpop.f32.mrf.mxu0
        %v1423 = vadd.f32 0.0, %v1422
        %v1424 = vpop.f32.mrf.mxu0
        %v1425 = vadd.f32 0.0, %v1424
        %1426 = vmatprep.mubr.bf16.mxu0 0
        %1427 = vmatmul.mubr.bf16.gmra.mxu0 %v657
        %v1428 = vpop.f32.mrf.mxu0
        %v1429 = vadd.f32 0.0, %v1428
        %v1430 = vpop.f32.mrf.mxu0
        %v1431 = vadd.f32 0.0, %v1430
        %v1432 = vpop.f32.mrf.mxu0
        %v1433 = vadd.f32 0.0, %v1432
        %v1434 = vpop.f32.mrf.mxu0
        %v1435 = vadd.f32 0.0, %v1434
        %1436 = vmatprep.mubr.bf16.mxu0 0
        %1437 = vmatmul.mubr.bf16.gmra.mxu0 %v660
        %v1438 = vpop.f32.mrf.mxu0
        %v1439 = vadd.f32 0.0, %v1438
        %v1440 = vpop.f32.mrf.mxu0
        %v1441 = vadd.f32 0.0, %v1440
        %v1442 = vpop.f32.mrf.mxu0
        %v1443 = vadd.f32 0.0, %v1442
        %v1444 = vpop.f32.mrf.mxu0
        %v1445 = vadd.f32 0.0, %v1444
        %1446 = vmatprep.mubr.bf16.mxu0 0
        %1447 = vmatmul.mubr.bf16.gmra.mxu0 %v663
        %v1448 = vpop.f32.mrf.mxu0
        %v1449 = vadd.f32 0.0, %v1448
        %v1450 = vpop.f32.mrf.mxu0
        %v1451 = vadd.f32 0.0, %v1450
        %v1452 = vpop.f32.mrf.mxu0
        %v1453 = vadd.f32 0.0, %v1452
        %v1454 = vpop.f32.mrf.mxu0
        %v1455 = vadd.f32 0.0, %v1454
        %1456 = vmatprep.mubr.bf16.mxu0 0
        %1457 = vmatmul.mubr.bf16.gmra.mxu0 %v666
        %v1458 = vpop.f32.mrf.mxu0
        %v1459 = vadd.f32 0.0, %v1458
        %v1460 = vpop.f32.mrf.mxu0
        %v1461 = vadd.f32 0.0, %v1460
        %v1462 = vpop.f32.mrf.mxu0
        %v1463 = vadd.f32 0.0, %v1462
        %v1464 = vpop.f32.mrf.mxu0
        %v1465 = vadd.f32 0.0, %v1464
        %1466 = vmatprep.mubr.bf16.mxu0 0
        %1467 = vmatmul.mubr.bf16.gmra.mxu0 %v669
        %v1468 = vpop.f32.mrf.mxu0
        %v1469 = vadd.f32 0.0, %v1468
        %v1470 = vpop.f32.mrf.mxu0
        %v1471 = vadd.f32 0.0, %v1470
        %v1472 = vpop.f32.mrf.mxu0
        %v1473 = vadd.f32 0.0, %v1472
        %v1474 = vpop.f32.mrf.mxu0
        %v1475 = vadd.f32 0.0, %v1474
        %1476 = vmatprep.mubr.bf16.mxu0 0
        %1477 = vmatmul.mubr.bf16.gmra.mxu0 %v672
        %v1478 = vpop.f32.mrf.mxu0
        %v1479 = vadd.f32 0.0, %v1478
        %v1480 = vpop.f32.mrf.mxu0
        %v1481 = vadd.f32 0.0, %v1480
        %v1482 = vpop.f32.mrf.mxu0
        %v1483 = vadd.f32 0.0, %v1482
        %v1484 = vpop.f32.mrf.mxu0
        %v1485 = vadd.f32 0.0, %v1484
        %1486 = vmatprep.mubr.bf16.mxu0 0
        %1487 = vmatmul.mubr.bf16.gmra.mxu0 %v675
        %v1488 = vpop.f32.mrf.mxu0
        %v1489 = vadd.f32 0.0, %v1488
        %v1490 = vpop.f32.mrf.mxu0
        %v1491 = vadd.f32 0.0, %v1490
        %v1492 = vpop.f32.mrf.mxu0
        %v1493 = vadd.f32 0.0, %v1492
        %v1494 = vpop.f32.mrf.mxu0
        %v1495 = vadd.f32 0.0, %v1494
        %1496 = vmatprep.mubr.bf16.mxu0 0
        %1497 = vmatmul.mubr.bf16.gmra.mxu0 %v678
        %v1498 = vpop.f32.mrf.mxu0
        %v1499 = vadd.f32 0.0, %v1498
        %v1500 = vpop.f32.mrf.mxu0
        %v1501 = vadd.f32 0.0, %v1500
        %v1502 = vpop.f32.mrf.mxu0
        %v1503 = vadd.f32 0.0, %v1502
        %v1504 = vpop.f32.mrf.mxu0
        %v1505 = vadd.f32 0.0, %v1504
        %1506 = vmatprep.mubr.bf16.mxu0 0
        %1507 = vmatmul.mubr.bf16.gmra.mxu0 %v681
        %v1508 = vpop.f32.mrf.mxu0
        %v1509 = vadd.f32 0.0, %v1508
        %v1510 = vpop.f32.mrf.mxu0
        %v1511 = vadd.f32 0.0, %v1510
        %v1512 = vpop.f32.mrf.mxu0
        %v1513 = vadd.f32 0.0, %v1512
        %v1514 = vpop.f32.mrf.mxu0
        %v1515 = vadd.f32 0.0, %v1514
        %1516 = vmatprep.mubr.bf16.mxu0 0
        %1517 = vmatmul.mubr.bf16.gmra.mxu0 %v684
        %v1518 = vpop.f32.mrf.mxu0
        %v1519 = vadd.f32 0.0, %v1518
        %v1520 = vpop.f32.mrf.mxu0
        %v1521 = vadd.f32 0.0, %v1520
        %v1522 = vpop.f32.mrf.mxu0
        %v1523 = vadd.f32 0.0, %v1522
        %v1524 = vpop.f32.mrf.mxu0
        %v1525 = vadd.f32 0.0, %v1524
        %1526 = vmatprep.mubr.bf16.mxu0 0
        %1527 = vmatmul.mubr.bf16.gmra.mxu0 %v687
        %v1528 = vpop.f32.mrf.mxu0
        %v1529 = vadd.f32 0.0, %v1528
        %v1530 = vpop.f32.mrf.mxu0
        %v1531 = vadd.f32 0.0, %v1530
        %v1532 = vpop.f32.mrf.mxu0
        %v1533 = vadd.f32 0.0, %v1532
        %v1534 = vpop.f32.mrf.mxu0
        %v1535 = vadd.f32 0.0, %v1534
        %1536 = vmatprep.mubr.bf16.mxu0 0
        %1537 = vmatmul.mubr.bf16.gmra.mxu0 %v690
        %v1538 = vpop.f32.mrf.mxu0
        %v1539 = vadd.f32 0.0, %v1538
        %v1540 = vpop.f32.mrf.mxu0
        %v1541 = vadd.f32 0.0, %v1540
        %v1542 = vpop.f32.mrf.mxu0
        %v1543 = vadd.f32 0.0, %v1542
        %v1544 = vpop.f32.mrf.mxu0
        %v1545 = vadd.f32 0.0, %v1544
        %1546 = vmatprep.mubr.bf16.mxu0 0
        %1547 = vmatmul.mubr.bf16.gmra.mxu0 %v693
        %v1548 = vpop.f32.mrf.mxu0
        %v1549 = vadd.f32 0.0, %v1548
        %v1550 = vpop.f32.mrf.mxu0
        %v1551 = vadd.f32 0.0, %v1550
        %v1552 = vpop.f32.mrf.mxu0
        %v1553 = vadd.f32 0.0, %v1552
        %v1554 = vpop.f32.mrf.mxu0
        %v1555 = vadd.f32 0.0, %v1554
        %1556 = vmatprep.mubr.bf16.mxu0 0
        %1557 = vmatmul.mubr.bf16.gmra.mxu0 %v696
        %v1558 = vpop.f32.mrf.mxu0
        %v1559 = vadd.f32 0.0, %v1558
        %v1560 = vpop.f32.mrf.mxu0
        %v1561 = vadd.f32 0.0, %v1560
        %v1562 = vpop.f32.mrf.mxu0
        %v1563 = vadd.f32 0.0, %v1562
        %v1564 = vpop.f32.mrf.mxu0
        %v1565 = vadd.f32 0.0, %v1564
        %1566 = vmatprep.mubr.bf16.mxu0 0
        %1567 = vmatmul.mubr.bf16.gmra.mxu0 %v699
        %v1568 = vpop.f32.mrf.mxu0
        %v1569 = vadd.f32 0.0, %v1568
        %v1570 = vpop.f32.mrf.mxu0
        %v1571 = vadd.f32 0.0, %v1570
        %v1572 = vpop.f32.mrf.mxu0
        %v1573 = vadd.f32 0.0, %v1572
        %v1574 = vpop.f32.mrf.mxu0
        %v1575 = vadd.f32 0.0, %v1574
        %1576 = vdwg.mxu0
        %v1577 = vmul.f32 %v1499, 0.5
        %v1578 = vmul.f32 %v1501, 0.5
        %v1579 = vmul.f32 %v1503, 0.5
        %v1580 = vmul.f32 %v1505, 0.5
        %v1581 = vmul.f32 %v1509, 0.5
        %v1582 = vmul.f32 %v1511, 0.5
        %v1583 = vmul.f32 %v1513, 0.5
        %v1584 = vmul.f32 %v1515, 0.5
        %v1585 = vmul.f32 %v1519, 0.5
        %v1586 = vmul.f32 %v1521, 0.5
        %v1587 = vmul.f32 %v1523, 0.5
        %v1588 = vmul.f32 %v1525, 0.5
        %v1589 = vmul.f32 %v1529, 0.5
        %v1590 = vmul.f32 %v1531, 0.5
        %v1591 = vmul.f32 %v1533, 0.5
        %v1592 = vmul.f32 %v1535, 0.5
        %v1593 = vmul.f32 %v1539, 0.5
        %v1594 = vmul.f32 %v1541, 0.5
        %v1595 = vmul.f32 %v1543, 0.5
        %v1596 = vmul.f32 %v1545, 0.5
        %v1597 = vmul.f32 %v1549, 0.5
        %v1598 = vmul.f32 %v1551, 0.5
        %v1599 = vmul.f32 %v1553, 0.5
        %v1600 = vmul.f32 %v1555, 0.5
        %v1601 = vmul.f32 %v1559, 0.5
        %v1602 = vmul.f32 %v1561, 0.5
        %v1603 = vmul.f32 %v1563, 0.5
        %v1604 = vmul.f32 %v1565, 0.5
        %v1605 = vmul.f32 %v1569, 0.5
        %v1606 = vmul.f32 %v1571, 0.5
        %v1607 = vmul.f32 %v1573, 0.5
        %v1608 = vmul.f32 %v1575, 0.5
        %v1609 = vtanh.pop %v1577
        %v1610 = vtanh.pop %v1578
        %v1611 = vtanh.pop %v1579
        %v1612 = vtanh.pop %v1580
        %v1613 = vtanh.pop %v1581
        %v1614 = vtanh.pop %v1582
        %v1615 = vtanh.pop %v1583
        %v1616 = vtanh.pop %v1584
        %v1617 = vtanh.pop %v1585
        %v1618 = vtanh.pop %v1586
        %v1619 = vtanh.pop %v1587
        %v1620 = vtanh.pop %v1588
        %v1621 = vtanh.pop %v1589
        %v1622 = vtanh.pop %v1590
        %v1623 = vtanh.pop %v1591
        %v1624 = vtanh.pop %v1592
        %v1625 = vtanh.pop %v1593
        %v1626 = vtanh.pop %v1594
        %v1627 = vtanh.pop %v1595
        %v1628 = vtanh.pop %v1596
        %v1629 = vtanh.pop %v1597
        %v1630 = vtanh.pop %v1598
        %v1631 = vtanh.pop %v1599
        %v1632 = vtanh.pop %v1600
        %v1633 = vtanh.pop %v1601
        %v1634 = vtanh.pop %v1602
        %v1635 = vtanh.pop %v1603
        %v1636 = vtanh.pop %v1604
        %v1637 = vtanh.pop %v1605
        %v1638 = vtanh.pop %v1606
        %v1639 = vtanh.pop %v1607
        %v1640 = vtanh.pop %v1608
        %v1641 = vadd.f32 %v1609, 1.0
        %v1642 = vadd.f32 %v1610, 1.0
        %v1643 = vadd.f32 %v1611, 1.0
        %v1644 = vadd.f32 %v1612, 1.0
        %v1645 = vadd.f32 %v1613, 1.0
        %v1646 = vadd.f32 %v1614, 1.0
        %v1647 = vadd.f32 %v1615, 1.0
        %v1648 = vadd.f32 %v1616, 1.0
        %v1649 = vadd.f32 %v1617, 1.0
        %v1650 = vadd.f32 %v1618, 1.0
        %v1651 = vadd.f32 %v1619, 1.0
        %v1652 = vadd.f32 %v1620, 1.0
        %v1653 = vadd.f32 %v1621, 1.0
        %v1654 = vadd.f32 %v1622, 1.0
        %v1655 = vadd.f32 %v1623, 1.0
        %v1656 = vadd.f32 %v1624, 1.0
        %v1657 = vadd.f32 %v1625, 1.0
        %v1658 = vadd.f32 %v1626, 1.0
        %v1659 = vadd.f32 %v1627, 1.0
        %v1660 = vadd.f32 %v1628, 1.0
        %v1661 = vadd.f32 %v1629, 1.0
        %v1662 = vadd.f32 %v1630, 1.0
        %v1663 = vadd.f32 %v1631, 1.0
        %v1664 = vadd.f32 %v1632, 1.0
        %v1665 = vadd.f32 %v1633, 1.0
        %v1666 = vadd.f32 %v1634, 1.0
        %v1667 = vadd.f32 %v1635, 1.0
        %v1668 = vadd.f32 %v1636, 1.0
        %v1669 = vadd.f32 %v1637, 1.0
        %v1670 = vadd.f32 %v1638, 1.0
        %v1671 = vadd.f32 %v1639, 1.0
        %v1672 = vadd.f32 %v1640, 1.0
        %v1673 = vmul.f32 %v1641, 0.5
        %v1674 = vmul.f32 %v1642, 0.5
        %v1675 = vmul.f32 %v1643, 0.5
        %v1676 = vmul.f32 %v1644, 0.5
        %v1677 = vmul.f32 %v1645, 0.5
        %v1678 = vmul.f32 %v1646, 0.5
        %v1679 = vmul.f32 %v1647, 0.5
        %v1680 = vmul.f32 %v1648, 0.5
        %v1681 = vmul.f32 %v1649, 0.5
        %v1682 = vmul.f32 %v1650, 0.5
        %v1683 = vmul.f32 %v1651, 0.5
        %v1684 = vmul.f32 %v1652, 0.5
        %v1685 = vmul.f32 %v1653, 0.5
        %v1686 = vmul.f32 %v1654, 0.5
        %v1687 = vmul.f32 %v1655, 0.5
        %v1688 = vmul.f32 %v1656, 0.5
        %v1689 = vmul.f32 %v1657, 0.5
        %v1690 = vmul.f32 %v1658, 0.5
        %v1691 = vmul.f32 %v1659, 0.5
        %v1692 = vmul.f32 %v1660, 0.5
        %v1693 = vmul.f32 %v1661, 0.5
        %v1694 = vmul.f32 %v1662, 0.5
        %v1695 = vmul.f32 %v1663, 0.5
        %v1696 = vmul.f32 %v1664, 0.5
        %v1697 = vmul.f32 %v1665, 0.5
        %v1698 = vmul.f32 %v1666, 0.5
        %v1699 = vmul.f32 %v1667, 0.5
        %v1700 = vmul.f32 %v1668, 0.5
        %v1701 = vmul.f32 %v1669, 0.5
        %v1702 = vmul.f32 %v1670, 0.5
        %v1703 = vmul.f32 %v1671, 0.5
        %v1704 = vmul.f32 %v1672, 0.5
        %v1705 = vmul.f32 %v1499, %v1673
        %v1706 = vmul.f32 %v1501, %v1674
        %v1707 = vmul.f32 %v1503, %v1675
        %v1708 = vmul.f32 %v1505, %v1676
        %v1709 = vmul.f32 %v1509, %v1677
        %v1710 = vmul.f32 %v1511, %v1678
        %v1711 = vmul.f32 %v1513, %v1679
        %v1712 = vmul.f32 %v1515, %v1680
        %v1713 = vmul.f32 %v1519, %v1681
        %v1714 = vmul.f32 %v1521, %v1682
        %v1715 = vmul.f32 %v1523, %v1683
        %v1716 = vmul.f32 %v1525, %v1684
        %v1717 = vmul.f32 %v1529, %v1685
        %v1718 = vmul.f32 %v1531, %v1686
        %v1719 = vmul.f32 %v1533, %v1687
        %v1720 = vmul.f32 %v1535, %v1688
        %v1721 = vmul.f32 %v1539, %v1689
        %v1722 = vmul.f32 %v1541, %v1690
        %v1723 = vmul.f32 %v1543, %v1691
        %v1724 = vmul.f32 %v1545, %v1692
        %v1725 = vmul.f32 %v1549, %v1693
        %v1726 = vmul.f32 %v1551, %v1694
        %v1727 = vmul.f32 %v1553, %v1695
        %v1728 = vmul.f32 %v1555, %v1696
        %v1729 = vmul.f32 %v1559, %v1697
        %v1730 = vmul.f32 %v1561, %v1698
        %v1731 = vmul.f32 %v1563, %v1699
        %v1732 = vmul.f32 %v1565, %v1700
        %v1733 = vmul.f32 %v1569, %v1701
        %v1734 = vmul.f32 %v1571, %v1702
        %v1735 = vmul.f32 %v1573, %v1703
        %v1736 = vmul.f32 %v1575, %v1704
        %v1737 = vmul.f32 %v1419, %v1705
        %v1738 = vmul.f32 %v1421, %v1706
        %v1739 = vmul.f32 %v1423, %v1707
        %v1740 = vmul.f32 %v1425, %v1708
        %v1741 = vmul.f32 %v1429, %v1709
        %v1742 = vmul.f32 %v1431, %v1710
        %v1743 = vmul.f32 %v1433, %v1711
        %v1744 = vmul.f32 %v1435, %v1712
        %v1745 = vmul.f32 %v1439, %v1713
        %v1746 = vmul.f32 %v1441, %v1714
        %v1747 = vmul.f32 %v1443, %v1715
        %v1748 = vmul.f32 %v1445, %v1716
        %v1749 = vmul.f32 %v1449, %v1717
        %v1750 = vmul.f32 %v1451, %v1718
        %v1751 = vmul.f32 %v1453, %v1719
        %v1752 = vmul.f32 %v1455, %v1720
        %v1753 = vmul.f32 %v1459, %v1721
        %v1754 = vmul.f32 %v1461, %v1722
        %v1755 = vmul.f32 %v1463, %v1723
        %v1756 = vmul.f32 %v1465, %v1724
        %v1757 = vmul.f32 %v1469, %v1725
        %v1758 = vmul.f32 %v1471, %v1726
        %v1759 = vmul.f32 %v1473, %v1727
        %v1760 = vmul.f32 %v1475, %v1728
        %v1761 = vmul.f32 %v1479, %v1729
        %v1762 = vmul.f32 %v1481, %v1730
        %v1763 = vmul.f32 %v1483, %v1731
        %v1764 = vmul.f32 %v1485, %v1732
        %v1765 = vmul.f32 %v1489, %v1733
        %v1766 = vmul.f32 %v1491, %v1734
        %v1767 = vmul.f32 %v1493, %v1735
        %v1768 = vmul.f32 %v1495, %v1736
        %v1769 = vpack.c.bf16 %v1739, %v1737
        %v1770 = vpack.c.bf16 %v1740, %v1738
        %v1771 = vpack.c.bf16 %v1743, %v1741
        %v1772 = vpack.c.bf16 %v1744, %v1742
        %v1773 = vpack.c.bf16 %v1747, %v1745
        %v1774 = vpack.c.bf16 %v1748, %v1746
        %v1775 = vpack.c.bf16 %v1751, %v1749
        %v1776 = vpack.c.bf16 %v1752, %v1750
        %v1777 = vpack.c.bf16 %v1755, %v1753
        %v1778 = vpack.c.bf16 %v1756, %v1754
        %v1779 = vpack.c.bf16 %v1759, %v1757
        %v1780 = vpack.c.bf16 %v1760, %v1758
        %v1781 = vpack.c.bf16 %v1763, %v1761
        %v1782 = vpack.c.bf16 %v1764, %v1762
        %v1783 = vpack.c.bf16 %v1767, %v1765
        %v1784 = vpack.c.bf16 %v1768, %v1766
        %1785 = vmatprep.subr.bf16.mxu0 %v1784
        %1786 = vmatpush1.bf16.msra.mxu0 %v1783
        %1787 = vmatprep.subr.bf16.mxu0 %v1782
        %1788 = vmatpush1.bf16.msra.mxu0 %v1781
        %1789 = vmatprep.subr.bf16.mxu0 %v1780
        %1790 = vmatpush1.bf16.msra.mxu0 %v1779
        %1791 = vmatprep.subr.bf16.mxu0 %v1778
        %1792 = vmatpush1.bf16.msra.mxu0 %v1777
        %1793 = vmatprep.subr.bf16.mxu0 %v1776
        %1794 = vmatpush1.bf16.msra.mxu0 %v1775
        %1795 = vmatprep.subr.bf16.mxu0 %v1774
        %1796 = vmatpush1.bf16.msra.mxu0 %v1773
        %1797 = vmatprep.subr.bf16.mxu0 %v1772
        %1798 = vmatpush1.bf16.msra.mxu0 %v1771
        %1799 = vmatprep.subr.bf16.mxu0 %v1770
        %1800 = vmatpush1.bf16.msra.mxu0 %v1769
        %1801 = vmatprep.subr.bf16.mxu0 0
        %1802 = vmatpush2.bf16.msra.mxu0 0
        %1803 = vmatprep.subr.bf16.mxu0 0
        %1804 = vmatpush2.bf16.msra.mxu0 0
        %1805 = vmatprep.subr.bf16.mxu0 0
        %1806 = vmatpush2.bf16.msra.mxu0 0
        %1807 = vmatprep.subr.bf16.mxu0 0
        %1808 = vmatpush2.bf16.msra.mxu0 0
        %1809 = vmatprep.subr.bf16.mxu0 0
        %1810 = vmatpush2.bf16.msra.mxu0 0
        %1811 = vmatprep.subr.bf16.mxu0 0
        %1812 = vmatpush2.bf16.msra.mxu0 0
        %1813 = vmatprep.subr.bf16.mxu0 0
        %1814 = vmatpush2.bf16.msra.mxu0 0
        %1815 = vmatprep.subr.bf16.mxu0 0
        %1816 = vmatpush2.bf16.msra.mxu0 0
        %1817 = vmatprep.mubr.bf16.mxu0 0
        %1818 = vmatmul.mubr.bf16.gmra.mxu0 %v1118
        %v1819 = vpop.f32.mrf.mxu0
        %v1820 = vadd.f32 0.0, %v1819
        %v1821 = vpop.f32.mrf.mxu0
        %v1822 = vadd.f32 0.0, %v1821
        %v1823 = vpop.f32.mrf.mxu0
        %v1824 = vadd.f32 0.0, %v1823
        %v1825 = vpop.f32.mrf.mxu0
        %v1826 = vadd.f32 0.0, %v1825
        %1827 = vmatprep.mubr.bf16.mxu0 0
        %1828 = vmatmul.mubr.bf16.gmra.mxu0 %v1119
        %v1829 = vpop.f32.mrf.mxu0
        %v1830 = vadd.f32 0.0, %v1829
        %v1831 = vpop.f32.mrf.mxu0
        %v1832 = vadd.f32 0.0, %v1831
        %v1833 = vpop.f32.mrf.mxu0
        %v1834 = vadd.f32 0.0, %v1833
        %v1835 = vpop.f32.mrf.mxu0
        %v1836 = vadd.f32 0.0, %v1835
        %1837 = vmatprep.mubr.bf16.mxu0 0
        %1838 = vmatmul.mubr.bf16.gmra.mxu0 %v1120
        %v1839 = vpop.f32.mrf.mxu0
        %v1840 = vadd.f32 0.0, %v1839
        %v1841 = vpop.f32.mrf.mxu0
        %v1842 = vadd.f32 0.0, %v1841
        %v1843 = vpop.f32.mrf.mxu0
        %v1844 = vadd.f32 0.0, %v1843
        %v1845 = vpop.f32.mrf.mxu0
        %v1846 = vadd.f32 0.0, %v1845
        %1847 = vmatprep.mubr.bf16.mxu0 0
        %1848 = vmatmul.mubr.bf16.gmra.mxu0 %v1121
        %v1849 = vpop.f32.mrf.mxu0
        %v1850 = vadd.f32 0.0, %v1849
        %v1851 = vpop.f32.mrf.mxu0
        %v1852 = vadd.f32 0.0, %v1851
        %v1853 = vpop.f32.mrf.mxu0
        %v1854 = vadd.f32 0.0, %v1853
        %v1855 = vpop.f32.mrf.mxu0
        %v1856 = vadd.f32 0.0, %v1855
        %1857 = vdwg.mxu0
        %s1858 = scalar_lea.vmem %s261, 128 [#allocation5]
        %1859 = vst [vmem:[%s1858] sm:$0xff] %v1820
        %1860 = vst [vmem:[%s1858 + $0x8] sm:$0xff] %v1822
        %1861 = vst [vmem:[%s1858 + $0x10] sm:$0xff] %v1824
        %1862 = vst [vmem:[%s1858 + $0x18] sm:$0xff] %v1826
        %1863 = vst [vmem:[%s1858 + $0x20] sm:$0xff] %v1830
        %1864 = vst [vmem:[%s1858 + $0x28] sm:$0xff] %v1832
        %1865 = vst [vmem:[%s1858 + $0x30] sm:$0xff] %v1834
        %1866 = vst [vmem:[%s1858 + $0x38] sm:$0xff] %v1836
        %1867 = vst [vmem:[%s1858 + $0x40] sm:$0xff] %v1840
        %1868 = vst [vmem:[%s1858 + $0x48] sm:$0xff] %v1842
        %1869 = vst [vmem:[%s1858 + $0x50] sm:$0xff] %v1844
        %1870 = vst [vmem:[%s1858 + $0x58] sm:$0xff] %v1846
        %1871 = vst [vmem:[%s1858 + $0x60] sm:$0xff] %v1850
        %1872 = vst [vmem:[%s1858 + $0x68] sm:$0xff] %v1852
        %1873 = vst [vmem:[%s1858 + $0x70] sm:$0xff] %v1854
        %1874 = vst [vmem:[%s1858 + $0x78] sm:$0xff] %v1856
        %s1875 = scalar_lea.vmem %s235, 256 [#allocation2]
        %v1876 = vld [vmem:[%s1875] sm:$0xff]
        %v1877 = vld [vmem:[%s1875 + $0x8] sm:$0xff]
        %v1878 = vld [vmem:[%s1875 + $0x10] sm:$0xff]
        %v1879 = vld [vmem:[%s1875 + $0x18] sm:$0xff]
        %v1880 = vld [vmem:[%s1875 + $0x20] sm:$0xff]
        %v1881 = vld [vmem:[%s1875 + $0x28] sm:$0xff]
        %v1882 = vld [vmem:[%s1875 + $0x30] sm:$0xff]
        %v1883 = vld [vmem:[%s1875 + $0x38] sm:$0xff]
        %v1884 = vld [vmem:[%s1875 + $0x40] sm:$0xff]
        %v1885 = vld [vmem:[%s1875 + $0x48] sm:$0xff]
        %v1886 = vld [vmem:[%s1875 + $0x50] sm:$0xff]
        %v1887 = vld [vmem:[%s1875 + $0x58] sm:$0xff]
        %v1888 = vld [vmem:[%s1875 + $0x60] sm:$0xff]
        %v1889 = vld [vmem:[%s1875 + $0x68] sm:$0xff]
        %v1890 = vld [vmem:[%s1875 + $0x70] sm:$0xff]
        %v1891 = vld [vmem:[%s1875 + $0x78] sm:$0xff]
        %v1892 = vadd.f32 %v1876, %v1878
        %v1893 = vadd.f32 %v1892, %v1880
        %v1894 = vadd.f32 %v1893, %v1882
        %v1895 = vadd.f32 %v1894, %v1884
        %v1896 = vadd.f32 %v1895, %v1886
        %v1897 = vadd.f32 %v1896, %v1888
        %v1898 = vadd.f32 %v1897, %v1890
        %v1899 = vrot.slane %v1898, 4
        %v1900 = vadd.f32 %v1898, %v1899
        %v1901 = vrot.slane %v1900, 2
        %v1902 = vadd.f32 %v1900, %v1901
        %v1903 = vrot.slane %v1902, 1
        %v1904 = vadd.f32 %v1902, %v1903
        %v1905 = vadd.f32 %v1877, %v1879
        %v1906 = vadd.f32 %v1905, %v1881
        %v1907 = vadd.f32 %v1906, %v1883
        %v1908 = vadd.f32 %v1907, %v1885
        %v1909 = vadd.f32 %v1908, %v1887
        %v1910 = vadd.f32 %v1909, %v1889
        %v1911 = vadd.f32 %v1910, %v1891
        %v1912 = vrot.slane %v1911, 4
        %v1913 = vadd.f32 %v1911, %v1912
        %v1914 = vrot.slane %v1913, 2
        %v1915 = vadd.f32 %v1913, %v1914
        %v1916 = vrot.slane %v1915, 1
        %v1917 = vadd.f32 %v1915, %v1916
        %v1918 = vmul.f32 %v1904, %v365
        %v1919 = vmul.f32 %v1917, %v365
        %v1920 = vmul.f32 %v1876, %v1876
        %v1921 = vmul.f32 %v1877, %v1877
        %v1922 = vmul.f32 %v1878, %v1878
        %v1923 = vmul.f32 %v1879, %v1879
        %v1924 = vmul.f32 %v1880, %v1880
        %v1925 = vmul.f32 %v1881, %v1881
        %v1926 = vmul.f32 %v1882, %v1882
        %v1927 = vmul.f32 %v1883, %v1883
        %v1928 = vmul.f32 %v1884, %v1884
        %v1929 = vmul.f32 %v1885, %v1885
        %v1930 = vmul.f32 %v1886, %v1886
        %v1931 = vmul.f32 %v1887, %v1887
        %v1932 = vmul.f32 %v1888, %v1888
        %v1933 = vmul.f32 %v1889, %v1889
        %v1934 = vmul.f32 %v1890, %v1890
        %v1935 = vmul.f32 %v1891, %v1891
        %v1936 = vadd.f32 %v1920, %v1922
        %v1937 = vadd.f32 %v1936, %v1924
        %v1938 = vadd.f32 %v1937, %v1926
        %v1939 = vadd.f32 %v1938, %v1928
        %v1940 = vadd.f32 %v1939, %v1930
        %v1941 = vadd.f32 %v1940, %v1932
        %v1942 = vadd.f32 %v1941, %v1934
        %v1943 = vrot.slane %v1942, 4
        %v1944 = vadd.f32 %v1942, %v1943
        %v1945 = vrot.slane %v1944, 2
        %v1946 = vadd.f32 %v1944, %v1945
        %v1947 = vrot.slane %v1946, 1
        %v1948 = vadd.f32 %v1946, %v1947
        %v1949 = vadd.f32 %v1921, %v1923
        %v1950 = vadd.f32 %v1949, %v1925
        %v1951 = vadd.f32 %v1950, %v1927
        %v1952 = vadd.f32 %v1951, %v1929
        %v1953 = vadd.f32 %v1952, %v1931
        %v1954 = vadd.f32 %v1953, %v1933
        %v1955 = vadd.f32 %v1954, %v1935
        %v1956 = vrot.slane %v1955, 4
        %v1957 = vadd.f32 %v1955, %v1956
        %v1958 = vrot.slane %v1957, 2
        %v1959 = vadd.f32 %v1957, %v1958
        %v1960 = vrot.slane %v1959, 1
        %v1961 = vadd.f32 %v1959, %v1960
        %v1962 = vmul.f32 %v1948, %v365
        %v1963 = vmul.f32 %v1961, %v365
        %v1964 = vmul.f32 %v1918, %v1918
        %v1965 = vmul.f32 %v1919, %v1919
        %v1966 = vsub.f32 %v1962, %v1964
        %v1967 = vsub.f32 %v1963, %v1965
        %v1968 = vsub.f32 %v1876, %v1918
        %v1969 = vsub.f32 %v1877, %v1919
        %v1970 = vsub.f32 %v1878, %v1918
        %v1971 = vsub.f32 %v1879, %v1919
        %v1972 = vsub.f32 %v1880, %v1918
        %v1973 = vsub.f32 %v1881, %v1919
        %v1974 = vsub.f32 %v1882, %v1918
        %v1975 = vsub.f32 %v1883, %v1919
        %v1976 = vsub.f32 %v1884, %v1918
        %v1977 = vsub.f32 %v1885, %v1919
        %v1978 = vsub.f32 %v1886, %v1918
        %v1979 = vsub.f32 %v1887, %v1919
        %v1980 = vsub.f32 %v1888, %v1918
        %v1981 = vsub.f32 %v1889, %v1919
        %v1982 = vsub.f32 %v1890, %v1918
        %v1983 = vsub.f32 %v1891, %v1919
        %v1984 = vadd.f32 %v1966, 1e-05
        %v1985 = vadd.f32 %v1967, 1e-05
        %v1986 = vrsqrt.pop %v1984
        %v1987 = vrsqrt.pop %v1985
        %v1988 = vmul.f32 %v1968, %v1986
        %v1989 = vmul.f32 %v1969, %v1987
        %v1990 = vmul.f32 %v1970, %v1986
        %v1991 = vmul.f32 %v1971, %v1987
        %v1992 = vmul.f32 %v1972, %v1986
        %v1993 = vmul.f32 %v1973, %v1987
        %v1994 = vmul.f32 %v1974, %v1986
        %v1995 = vmul.f32 %v1975, %v1987
        %v1996 = vmul.f32 %v1976, %v1986
        %v1997 = vmul.f32 %v1977, %v1987
        %v1998 = vmul.f32 %v1978, %v1986
        %v1999 = vmul.f32 %v1979, %v1987
        %v2000 = vmul.f32 %v1980, %v1986
        %v2001 = vmul.f32 %v1981, %v1987
        %v2002 = vmul.f32 %v1982, %v1986
        %v2003 = vmul.f32 %v1983, %v1987
        %v2004 = vmul.f32 %v1988, %v455
        %v2005 = vmul.f32 %v1989, %v455
        %v2006 = vmul.f32 %v1990, %v460
        %v2007 = vmul.f32 %v1991, %v460
        %v2008 = vmul.f32 %v1992, %v465
        %v2009 = vmul.f32 %v1993, %v465
        %v2010 = vmul.f32 %v1994, %v470
        %v2011 = vmul.f32 %v1995, %v470
        %v2012 = vmul.f32 %v1996, %v475
        %v2013 = vmul.f32 %v1997, %v475
        %v2014 = vmul.f32 %v1998, %v480
        %v2015 = vmul.f32 %v1999, %v480
        %v2016 = vmul.f32 %v2000, %v485
        %v2017 = vmul.f32 %v2001, %v485
        %v2018 = vmul.f32 %v2002, %v490
        %v2019 = vmul.f32 %v2003, %v490
        %v2020 = vadd.f32 %v2004, %v511
        %v2021 = vadd.f32 %v2005, %v511
        %v2022 = vadd.f32 %v2006, %v516
        %v2023 = vadd.f32 %v2007, %v516
        %v2024 = vadd.f32 %v2008, %v521
        %v2025 = vadd.f32 %v2009, %v521
        %v2026 = vadd.f32 %v2010, %v526
        %v2027 = vadd.f32 %v2011, %v526
        %v2028 = vadd.f32 %v2012, %v531
        %v2029 = vadd.f32 %v2013, %v531
        %v2030 = vadd.f32 %v2014, %v536
        %v2031 = vadd.f32 %v2015, %v536
        %v2032 = vadd.f32 %v2016, %v541
        %v2033 = vadd.f32 %v2017, %v541
        %v2034 = vadd.f32 %v2018, %v546
        %v2035 = vadd.f32 %v2019, %v546
        %v2036 = vpack.c.bf16 %v2022, %v2020
        %v2037 = vpack.c.bf16 %v2023, %v2021
        %v2038 = vpack.c.bf16 %v2026, %v2024
        %v2039 = vpack.c.bf16 %v2027, %v2025
        %v2040 = vpack.c.bf16 %v2030, %v2028
        %v2041 = vpack.c.bf16 %v2031, %v2029
        %v2042 = vpack.c.bf16 %v2034, %v2032
        %v2043 = vpack.c.bf16 %v2035, %v2033
        %2044 = vmatprep.subr.bf16.mxu0 0
        %2045 = vmatpush1.bf16.msra.mxu0 0
        %2046 = vmatprep.subr.bf16.mxu0 0
        %2047 = vmatpush1.bf16.msra.mxu0 0
        %2048 = vmatprep.subr.bf16.mxu0 0
        %2049 = vmatpush1.bf16.msra.mxu0 0
        %2050 = vmatprep.subr.bf16.mxu0 0
        %2051 = vmatpush1.bf16.msra.mxu0 0
        %2052 = vmatprep.subr.bf16.mxu0 %v2043
        %2053 = vmatpush1.bf16.msra.mxu0 %v2042
        %2054 = vmatprep.subr.bf16.mxu0 %v2041
        %2055 = vmatpush1.bf16.msra.mxu0 %v2040
        %2056 = vmatprep.subr.bf16.mxu0 %v2039
        %2057 = vmatpush1.bf16.msra.mxu0 %v2038
        %2058 = vmatprep.subr.bf16.mxu0 %v2037
        %2059 = vmatpush1.bf16.msra.mxu0 %v2036
        %2060 = vmatprep.subr.bf16.mxu0 0
        %2061 = vmatpush2.bf16.msra.mxu0 0
        %2062 = vmatprep.subr.bf16.mxu0 0
        %2063 = vmatpush2.bf16.msra.mxu0 0
        %2064 = vmatprep.subr.bf16.mxu0 0
        %2065 = vmatpush2.bf16.msra.mxu0 0
        %2066 = vmatprep.subr.bf16.mxu0 0
        %2067 = vmatpush2.bf16.msra.mxu0 0
        %2068 = vmatprep.subr.bf16.mxu0 0
        %2069 = vmatpush2.bf16.msra.mxu0 0
        %2070 = vmatprep.subr.bf16.mxu0 0
        %2071 = vmatpush2.bf16.msra.mxu0 0
        %2072 = vmatprep.subr.bf16.mxu0 0
        %2073 = vmatpush2.bf16.msra.mxu0 0
        %2074 = vmatprep.subr.bf16.mxu0 0
        %2075 = vmatpush2.bf16.msra.mxu0 0
        %2076 = vmatprep.mubr.bf16.mxu0 0
        %2077 = vmatmul.mubr.bf16.gmra.mxu0 %v654
        %v2078 = vpop.f32.mrf.mxu0
        %v2079 = vadd.f32 0.0, %v2078
        %v2080 = vpop.f32.mrf.mxu0
        %v2081 = vadd.f32 0.0, %v2080
        %v2082 = vpop.f32.mrf.mxu0
        %v2083 = vadd.f32 0.0, %v2082
        %v2084 = vpop.f32.mrf.mxu0
        %v2085 = vadd.f32 0.0, %v2084
        %2086 = vmatprep.mubr.bf16.mxu0 0
        %2087 = vmatmul.mubr.bf16.gmra.mxu0 %v657
        %v2088 = vpop.f32.mrf.mxu0
        %v2089 = vadd.f32 0.0, %v2088
        %v2090 = vpop.f32.mrf.mxu0
        %v2091 = vadd.f32 0.0, %v2090
        %v2092 = vpop.f32.mrf.mxu0
        %v2093 = vadd.f32 0.0, %v2092
        %v2094 = vpop.f32.mrf.mxu0
        %v2095 = vadd.f32 0.0, %v2094
        %2096 = vmatprep.mubr.bf16.mxu0 0
        %2097 = vmatmul.mubr.bf16.gmra.mxu0 %v660
        %v2098 = vpop.f32.mrf.mxu0
        %v2099 = vadd.f32 0.0, %v2098
        %v2100 = vpop.f32.mrf.mxu0
        %v2101 = vadd.f32 0.0, %v2100
        %v2102 = vpop.f32.mrf.mxu0
        %v2103 = vadd.f32 0.0, %v2102
        %v2104 = vpop.f32.mrf.mxu0
        %v2105 = vadd.f32 0.0, %v2104
        %2106 = vmatprep.mubr.bf16.mxu0 0
        %2107 = vmatmul.mubr.bf16.gmra.mxu0 %v663
        %v2108 = vpop.f32.mrf.mxu0
        %v2109 = vadd.f32 0.0, %v2108
        %v2110 = vpop.f32.mrf.mxu0
        %v2111 = vadd.f32 0.0, %v2110
        %v2112 = vpop.f32.mrf.mxu0
        %v2113 = vadd.f32 0.0, %v2112
        %v2114 = vpop.f32.mrf.mxu0
        %v2115 = vadd.f32 0.0, %v2114
        %2116 = vmatprep.mubr.bf16.mxu0 0
        %2117 = vmatmul.mubr.bf16.gmra.mxu0 %v666
        %v2118 = vpop.f32.mrf.mxu0
        %v2119 = vadd.f32 0.0, %v2118
        %v2120 = vpop.f32.mrf.mxu0
        %v2121 = vadd.f32 0.0, %v2120
        %v2122 = vpop.f32.mrf.mxu0
        %v2123 = vadd.f32 0.0, %v2122
        %v2124 = vpop.f32.mrf.mxu0
        %v2125 = vadd.f32 0.0, %v2124
        %2126 = vmatprep.mubr.bf16.mxu0 0
        %2127 = vmatmul.mubr.bf16.gmra.mxu0 %v669
        %v2128 = vpop.f32.mrf.mxu0
        %v2129 = vadd.f32 0.0, %v2128
        %v2130 = vpop.f32.mrf.mxu0
        %v2131 = vadd.f32 0.0, %v2130
        %v2132 = vpop.f32.mrf.mxu0
        %v2133 = vadd.f32 0.0, %v2132
        %v2134 = vpop.f32.mrf.mxu0
        %v2135 = vadd.f32 0.0, %v2134
        %2136 = vmatprep.mubr.bf16.mxu0 0
        %2137 = vmatmul.mubr.bf16.gmra.mxu0 %v672
        %v2138 = vpop.f32.mrf.mxu0
        %v2139 = vadd.f32 0.0, %v2138
        %v2140 = vpop.f32.mrf.mxu0
        %v2141 = vadd.f32 0.0, %v2140
        %v2142 = vpop.f32.mrf.mxu0
        %v2143 = vadd.f32 0.0, %v2142
        %v2144 = vpop.f32.mrf.mxu0
        %v2145 = vadd.f32 0.0, %v2144
        %2146 = vmatprep.mubr.bf16.mxu0 0
        %2147 = vmatmul.mubr.bf16.gmra.mxu0 %v675
        %v2148 = vpop.f32.mrf.mxu0
        %v2149 = vadd.f32 0.0, %v2148
        %v2150 = vpop.f32.mrf.mxu0
        %v2151 = vadd.f32 0.0, %v2150
        %v2152 = vpop.f32.mrf.mxu0
        %v2153 = vadd.f32 0.0, %v2152
        %v2154 = vpop.f32.mrf.mxu0
        %v2155 = vadd.f32 0.0, %v2154
        %2156 = vmatprep.mubr.bf16.mxu0 0
        %2157 = vmatmul.mubr.bf16.gmra.mxu0 %v678
        %v2158 = vpop.f32.mrf.mxu0
        %v2159 = vadd.f32 0.0, %v2158
        %v2160 = vpop.f32.mrf.mxu0
        %v2161 = vadd.f32 0.0, %v2160
        %v2162 = vpop.f32.mrf.mxu0
        %v2163 = vadd.f32 0.0, %v2162
        %v2164 = vpop.f32.mrf.mxu0
        %v2165 = vadd.f32 0.0, %v2164
        %2166 = vmatprep.mubr.bf16.mxu0 0
        %2167 = vmatmul.mubr.bf16.gmra.mxu0 %v681
        %v2168 = vpop.f32.mrf.mxu0
        %v2169 = vadd.f32 0.0, %v2168
        %v2170 = vpop.f32.mrf.mxu0
        %v2171 = vadd.f32 0.0, %v2170
        %v2172 = vpop.f32.mrf.mxu0
        %v2173 = vadd.f32 0.0, %v2172
        %v2174 = vpop.f32.mrf.mxu0
        %v2175 = vadd.f32 0.0, %v2174
        %2176 = vmatprep.mubr.bf16.mxu0 0
        %2177 = vmatmul.mubr.bf16.gmra.mxu0 %v684
        %v2178 = vpop.f32.mrf.mxu0
        %v2179 = vadd.f32 0.0, %v2178
        %v2180 = vpop.f32.mrf.mxu0
        %v2181 = vadd.f32 0.0, %v2180
        %v2182 = vpop.f32.mrf.mxu0
        %v2183 = vadd.f32 0.0, %v2182
        %v2184 = vpop.f32.mrf.mxu0
        %v2185 = vadd.f32 0.0, %v2184
        %2186 = vmatprep.mubr.bf16.mxu0 0
        %2187 = vmatmul.mubr.bf16.gmra.mxu0 %v687
        %v2188 = vpop.f32.mrf.mxu0
        %v2189 = vadd.f32 0.0, %v2188
        %v2190 = vpop.f32.mrf.mxu0
        %v2191 = vadd.f32 0.0, %v2190
        %v2192 = vpop.f32.mrf.mxu0
        %v2193 = vadd.f32 0.0, %v2192
        %v2194 = vpop.f32.mrf.mxu0
        %v2195 = vadd.f32 0.0, %v2194
        %2196 = vmatprep.mubr.bf16.mxu0 0
        %2197 = vmatmul.mubr.bf16.gmra.mxu0 %v690
        %v2198 = vpop.f32.mrf.mxu0
        %v2199 = vadd.f32 0.0, %v2198
        %v2200 = vpop.f32.mrf.mxu0
        %v2201 = vadd.f32 0.0, %v2200
        %v2202 = vpop.f32.mrf.mxu0
        %v2203 = vadd.f32 0.0, %v2202
        %v2204 = vpop.f32.mrf.mxu0
        %v2205 = vadd.f32 0.0, %v2204
        %2206 = vmatprep.mubr.bf16.mxu0 0
        %2207 = vmatmul.mubr.bf16.gmra.mxu0 %v693
        %v2208 = vpop.f32.mrf.mxu0
        %v2209 = vadd.f32 0.0, %v2208
        %v2210 = vpop.f32.mrf.mxu0
        %v2211 = vadd.f32 0.0, %v2210
        %v2212 = vpop.f32.mrf.mxu0
        %v2213 = vadd.f32 0.0, %v2212
        %v2214 = vpop.f32.mrf.mxu0
        %v2215 = vadd.f32 0.0, %v2214
        %2216 = vmatprep.mubr.bf16.mxu0 0
        %2217 = vmatmul.mubr.bf16.gmra.mxu0 %v696
        %v2218 = vpop.f32.mrf.mxu0
        %v2219 = vadd.f32 0.0, %v2218
        %v2220 = vpop.f32.mrf.mxu0
        %v2221 = vadd.f32 0.0, %v2220
        %v2222 = vpop.f32.mrf.mxu0
        %v2223 = vadd.f32 0.0, %v2222
        %v2224 = vpop.f32.mrf.mxu0
        %v2225 = vadd.f32 0.0, %v2224
        %2226 = vmatprep.mubr.bf16.mxu0 0
        %2227 = vmatmul.mubr.bf16.gmra.mxu0 %v699
        %v2228 = vpop.f32.mrf.mxu0
        %v2229 = vadd.f32 0.0, %v2228
        %v2230 = vpop.f32.mrf.mxu0
        %v2231 = vadd.f32 0.0, %v2230
        %v2232 = vpop.f32.mrf.mxu0
        %v2233 = vadd.f32 0.0, %v2232
        %v2234 = vpop.f32.mrf.mxu0
        %v2235 = vadd.f32 0.0, %v2234
        %2236 = vdwg.mxu0
        %v2237 = vmul.f32 %v2159, 0.5
        %v2238 = vmul.f32 %v2161, 0.5
        %v2239 = vmul.f32 %v2163, 0.5
        %v2240 = vmul.f32 %v2165, 0.5
        %v2241 = vmul.f32 %v2169, 0.5
        %v2242 = vmul.f32 %v2171, 0.5
        %v2243 = vmul.f32 %v2173, 0.5
        %v2244 = vmul.f32 %v2175, 0.5
        %v2245 = vmul.f32 %v2179, 0.5
        %v2246 = vmul.f32 %v2181, 0.5
        %v2247 = vmul.f32 %v2183, 0.5
        %v2248 = vmul.f32 %v2185, 0.5
        %v2249 = vmul.f32 %v2189, 0.5
        %v2250 = vmul.f32 %v2191, 0.5
        %v2251 = vmul.f32 %v2193, 0.5
        %v2252 = vmul.f32 %v2195, 0.5
        %v2253 = vmul.f32 %v2199, 0.5
        %v2254 = vmul.f32 %v2201, 0.5
        %v2255 = vmul.f32 %v2203, 0.5
        %v2256 = vmul.f32 %v2205, 0.5
        %v2257 = vmul.f32 %v2209, 0.5
        %v2258 = vmul.f32 %v2211, 0.5
        %v2259 = vmul.f32 %v2213, 0.5
        %v2260 = vmul.f32 %v2215, 0.5
        %v2261 = vmul.f32 %v2219, 0.5
        %v2262 = vmul.f32 %v2221, 0.5
        %v2263 = vmul.f32 %v2223, 0.5
        %v2264 = vmul.f32 %v2225, 0.5
        %v2265 = vmul.f32 %v2229, 0.5
        %v2266 = vmul.f32 %v2231, 0.5
        %v2267 = vmul.f32 %v2233, 0.5
        %v2268 = vmul.f32 %v2235, 0.5
        %v2269 = vtanh.pop %v2237
        %v2270 = vtanh.pop %v2238
        %v2271 = vtanh.pop %v2239
        %v2272 = vtanh.pop %v2240
        %v2273 = vtanh.pop %v2241
        %v2274 = vtanh.pop %v2242
        %v2275 = vtanh.pop %v2243
        %v2276 = vtanh.pop %v2244
        %v2277 = vtanh.pop %v2245
        %v2278 = vtanh.pop %v2246
        %v2279 = vtanh.pop %v2247
        %v2280 = vtanh.pop %v2248
        %v2281 = vtanh.pop %v2249
        %v2282 = vtanh.pop %v2250
        %v2283 = vtanh.pop %v2251
        %v2284 = vtanh.pop %v2252
        %v2285 = vtanh.pop %v2253
        %v2286 = vtanh.pop %v2254
        %v2287 = vtanh.pop %v2255
        %v2288 = vtanh.pop %v2256
        %v2289 = vtanh.pop %v2257
        %v2290 = vtanh.pop %v2258
        %v2291 = vtanh.pop %v2259
        %v2292 = vtanh.pop %v2260
        %v2293 = vtanh.pop %v2261
        %v2294 = vtanh.pop %v2262
        %v2295 = vtanh.pop %v2263
        %v2296 = vtanh.pop %v2264
        %v2297 = vtanh.pop %v2265
        %v2298 = vtanh.pop %v2266
        %v2299 = vtanh.pop %v2267
        %v2300 = vtanh.pop %v2268
        %v2301 = vadd.f32 %v2269, 1.0
        %v2302 = vadd.f32 %v2270, 1.0
        %v2303 = vadd.f32 %v2271, 1.0
        %v2304 = vadd.f32 %v2272, 1.0
        %v2305 = vadd.f32 %v2273, 1.0
        %v2306 = vadd.f32 %v2274, 1.0
        %v2307 = vadd.f32 %v2275, 1.0
        %v2308 = vadd.f32 %v2276, 1.0
        %v2309 = vadd.f32 %v2277, 1.0
        %v2310 = vadd.f32 %v2278, 1.0
        %v2311 = vadd.f32 %v2279, 1.0
        %v2312 = vadd.f32 %v2280, 1.0
        %v2313 = vadd.f32 %v2281, 1.0
        %v2314 = vadd.f32 %v2282, 1.0
        %v2315 = vadd.f32 %v2283, 1.0
        %v2316 = vadd.f32 %v2284, 1.0
        %v2317 = vadd.f32 %v2285, 1.0
        %v2318 = vadd.f32 %v2286, 1.0
        %v2319 = vadd.f32 %v2287, 1.0
        %v2320 = vadd.f32 %v2288, 1.0
        %v2321 = vadd.f32 %v2289, 1.0
        %v2322 = vadd.f32 %v2290, 1.0
        %v2323 = vadd.f32 %v2291, 1.0
        %v2324 = vadd.f32 %v2292, 1.0
        %v2325 = vadd.f32 %v2293, 1.0
        %v2326 = vadd.f32 %v2294, 1.0
        %v2327 = vadd.f32 %v2295, 1.0
        %v2328 = vadd.f32 %v2296, 1.0
        %v2329 = vadd.f32 %v2297, 1.0
        %v2330 = vadd.f32 %v2298, 1.0
        %v2331 = vadd.f32 %v2299, 1.0
        %v2332 = vadd.f32 %v2300, 1.0
        %v2333 = vmul.f32 %v2301, 0.5
        %v2334 = vmul.f32 %v2302, 0.5
        %v2335 = vmul.f32 %v2303, 0.5
        %v2336 = vmul.f32 %v2304, 0.5
        %v2337 = vmul.f32 %v2305, 0.5
        %v2338 = vmul.f32 %v2306, 0.5
        %v2339 = vmul.f32 %v2307, 0.5
        %v2340 = vmul.f32 %v2308, 0.5
        %v2341 = vmul.f32 %v2309, 0.5
        %v2342 = vmul.f32 %v2310, 0.5
        %v2343 = vmul.f32 %v2311, 0.5
        %v2344 = vmul.f32 %v2312, 0.5
        %v2345 = vmul.f32 %v2313, 0.5
        %v2346 = vmul.f32 %v2314, 0.5
        %v2347 = vmul.f32 %v2315, 0.5
        %v2348 = vmul.f32 %v2316, 0.5
        %v2349 = vmul.f32 %v2317, 0.5
        %v2350 = vmul.f32 %v2318, 0.5
        %v2351 = vmul.f32 %v2319, 0.5
        %v2352 = vmul.f32 %v2320, 0.5
        %v2353 = vmul.f32 %v2321, 0.5
        %v2354 = vmul.f32 %v2322, 0.5
        %v2355 = vmul.f32 %v2323, 0.5
        %v2356 = vmul.f32 %v2324, 0.5
        %v2357 = vmul.f32 %v2325, 0.5
        %v2358 = vmul.f32 %v2326, 0.5
        %v2359 = vmul.f32 %v2327, 0.5
        %v2360 = vmul.f32 %v2328, 0.5
        %v2361 = vmul.f32 %v2329, 0.5
        %v2362 = vmul.f32 %v2330, 0.5
        %v2363 = vmul.f32 %v2331, 0.5
        %v2364 = vmul.f32 %v2332, 0.5
        %v2365 = vmul.f32 %v2159, %v2333
        %v2366 = vmul.f32 %v2161, %v2334
        %v2367 = vmul.f32 %v2163, %v2335
        %v2368 = vmul.f32 %v2165, %v2336
        %v2369 = vmul.f32 %v2169, %v2337
        %v2370 = vmul.f32 %v2171, %v2338
        %v2371 = vmul.f32 %v2173, %v2339
        %v2372 = vmul.f32 %v2175, %v2340
        %v2373 = vmul.f32 %v2179, %v2341
        %v2374 = vmul.f32 %v2181, %v2342
        %v2375 = vmul.f32 %v2183, %v2343
        %v2376 = vmul.f32 %v2185, %v2344
        %v2377 = vmul.f32 %v2189, %v2345
        %v2378 = vmul.f32 %v2191, %v2346
        %v2379 = vmul.f32 %v2193, %v2347
        %v2380 = vmul.f32 %v2195, %v2348
        %v2381 = vmul.f32 %v2199, %v2349
        %v2382 = vmul.f32 %v2201, %v2350
        %v2383 = vmul.f32 %v2203, %v2351
        %v2384 = vmul.f32 %v2205, %v2352
        %v2385 = vmul.f32 %v2209, %v2353
        %v2386 = vmul.f32 %v2211, %v2354
        %v2387 = vmul.f32 %v2213, %v2355
        %v2388 = vmul.f32 %v2215, %v2356
        %v2389 = vmul.f32 %v2219, %v2357
        %v2390 = vmul.f32 %v2221, %v2358
        %v2391 = vmul.f32 %v2223, %v2359
        %v2392 = vmul.f32 %v2225, %v2360
        %v2393 = vmul.f32 %v2229, %v2361
        %v2394 = vmul.f32 %v2231, %v2362
        %v2395 = vmul.f32 %v2233, %v2363
        %v2396 = vmul.f32 %v2235, %v2364
        %v2397 = vmul.f32 %v2079, %v2365
        %v2398 = vmul.f32 %v2081, %v2366
        %v2399 = vmul.f32 %v2083, %v2367
        %v2400 = vmul.f32 %v2085, %v2368
        %v2401 = vmul.f32 %v2089, %v2369
        %v2402 = vmul.f32 %v2091, %v2370
        %v2403 = vmul.f32 %v2093, %v2371
        %v2404 = vmul.f32 %v2095, %v2372
        %v2405 = vmul.f32 %v2099, %v2373
        %v2406 = vmul.f32 %v2101, %v2374
        %v2407 = vmul.f32 %v2103, %v2375
        %v2408 = vmul.f32 %v2105, %v2376
        %v2409 = vmul.f32 %v2109, %v2377
        %v2410 = vmul.f32 %v2111, %v2378
        %v2411 = vmul.f32 %v2113, %v2379
        %v2412 = vmul.f32 %v2115, %v2380
        %v2413 = vmul.f32 %v2119, %v2381
        %v2414 = vmul.f32 %v2121, %v2382
        %v2415 = vmul.f32 %v2123, %v2383
        %v2416 = vmul.f32 %v2125, %v2384
        %v2417 = vmul.f32 %v2129, %v2385
        %v2418 = vmul.f32 %v2131, %v2386
        %v2419 = vmul.f32 %v2133, %v2387
        %v2420 = vmul.f32 %v2135, %v2388
        %v2421 = vmul.f32 %v2139, %v2389
        %v2422 = vmul.f32 %v2141, %v2390
        %v2423 = vmul.f32 %v2143, %v2391
        %v2424 = vmul.f32 %v2145, %v2392
        %v2425 = vmul.f32 %v2149, %v2393
        %v2426 = vmul.f32 %v2151, %v2394
        %v2427 = vmul.f32 %v2153, %v2395
        %v2428 = vmul.f32 %v2155, %v2396
        %v2429 = vpack.c.bf16 %v2399, %v2397
        %v2430 = vpack.c.bf16 %v2400, %v2398
        %v2431 = vpack.c.bf16 %v2403, %v2401
        %v2432 = vpack.c.bf16 %v2404, %v2402
        %v2433 = vpack.c.bf16 %v2407, %v2405
        %v2434 = vpack.c.bf16 %v2408, %v2406
        %v2435 = vpack.c.bf16 %v2411, %v2409
        %v2436 = vpack.c.bf16 %v2412, %v2410
        %v2437 = vpack.c.bf16 %v2415, %v2413
        %v2438 = vpack.c.bf16 %v2416, %v2414
        %v2439 = vpack.c.bf16 %v2419, %v2417
        %v2440 = vpack.c.bf16 %v2420, %v2418
        %v2441 = vpack.c.bf16 %v2423, %v2421
        %v2442 = vpack.c.bf16 %v2424, %v2422
        %v2443 = vpack.c.bf16 %v2427, %v2425
        %v2444 = vpack.c.bf16 %v2428, %v2426
        %2445 = vmatprep.subr.bf16.mxu0 %v2444
        %2446 = vmatpush1.bf16.msra.mxu0 %v2443
        %2447 = vmatprep.subr.bf16.mxu0 %v2442
        %2448 = vmatpush1.bf16.msra.mxu0 %v2441
        %2449 = vmatprep.subr.bf16.mxu0 %v2440
        %2450 = vmatpush1.bf16.msra.mxu0 %v2439
        %2451 = vmatprep.subr.bf16.mxu0 %v2438
        %2452 = vmatpush1.bf16.msra.mxu0 %v2437
        %2453 = vmatprep.subr.bf16.mxu0 %v2436
        %2454 = vmatpush1.bf16.msra.mxu0 %v2435
        %2455 = vmatprep.subr.bf16.mxu0 %v2434
        %2456 = vmatpush1.bf16.msra.mxu0 %v2433
        %2457 = vmatprep.subr.bf16.mxu0 %v2432
        %2458 = vmatpush1.bf16.msra.mxu0 %v2431
        %2459 = vmatprep.subr.bf16.mxu0 %v2430
        %2460 = vmatpush1.bf16.msra.mxu0 %v2429
        %2461 = vmatprep.subr.bf16.mxu0 0
        %2462 = vmatpush2.bf16.msra.mxu0 0
        %2463 = vmatprep.subr.bf16.mxu0 0
        %2464 = vmatpush2.bf16.msra.mxu0 0
        %2465 = vmatprep.subr.bf16.mxu0 0
        %2466 = vmatpush2.bf16.msra.mxu0 0
        %2467 = vmatprep.subr.bf16.mxu0 0
        %2468 = vmatpush2.bf16.msra.mxu0 0
        %2469 = vmatprep.subr.bf16.mxu0 0
        %2470 = vmatpush2.bf16.msra.mxu0 0
        %2471 = vmatprep.subr.bf16.mxu0 0
        %2472 = vmatpush2.bf16.msra.mxu0 0
        %2473 = vmatprep.subr.bf16.mxu0 0
        %2474 = vmatpush2.bf16.msra.mxu0 0
        %2475 = vmatprep.subr.bf16.mxu0 0
        %2476 = vmatpush2.bf16.msra.mxu0 0
        %2477 = vmatprep.mubr.bf16.mxu0 0
        %2478 = vmatmul.mubr.bf16.gmra.mxu0 %v1118
        %v2479 = vpop.f32.mrf.mxu0
        %v2480 = vadd.f32 0.0, %v2479
        %v2481 = vpop.f32.mrf.mxu0
        %v2482 = vadd.f32 0.0, %v2481
        %v2483 = vpop.f32.mrf.mxu0
        %v2484 = vadd.f32 0.0, %v2483
        %v2485 = vpop.f32.mrf.mxu0
        %v2486 = vadd.f32 0.0, %v2485
        %2487 = vmatprep.mubr.bf16.mxu0 0
        %2488 = vmatmul.mubr.bf16.gmra.mxu0 %v1119
        %v2489 = vpop.f32.mrf.mxu0
        %v2490 = vadd.f32 0.0, %v2489
        %v2491 = vpop.f32.mrf.mxu0
        %v2492 = vadd.f32 0.0, %v2491
        %v2493 = vpop.f32.mrf.mxu0
        %v2494 = vadd.f32 0.0, %v2493
        %v2495 = vpop.f32.mrf.mxu0
        %v2496 = vadd.f32 0.0, %v2495
        %2497 = vmatprep.mubr.bf16.mxu0 0
        %2498 = vmatmul.mubr.bf16.gmra.mxu0 %v1120
        %v2499 = vpop.f32.mrf.mxu0
        %v2500 = vadd.f32 0.0, %v2499
        %v2501 = vpop.f32.mrf.mxu0
        %v2502 = vadd.f32 0.0, %v2501
        %v2503 = vpop.f32.mrf.mxu0
        %v2504 = vadd.f32 0.0, %v2503
        %v2505 = vpop.f32.mrf.mxu0
        %v2506 = vadd.f32 0.0, %v2505
        %2507 = vmatprep.mubr.bf16.mxu0 0
        %2508 = vmatmul.mubr.bf16.gmra.mxu0 %v1121
        %v2509 = vpop.f32.mrf.mxu0
        %v2510 = vadd.f32 0.0, %v2509
        %v2511 = vpop.f32.mrf.mxu0
        %v2512 = vadd.f32 0.0, %v2511
        %v2513 = vpop.f32.mrf.mxu0
        %v2514 = vadd.f32 0.0, %v2513
        %v2515 = vpop.f32.mrf.mxu0
        %v2516 = vadd.f32 0.0, %v2515
        %2517 = vdwg.mxu0
        %s2518 = scalar_lea.vmem %s261, 256 [#allocation5]
        %2519 = vst [vmem:[%s2518] sm:$0xff] %v2480
        %2520 = vst [vmem:[%s2518 + $0x8] sm:$0xff] %v2482
        %2521 = vst [vmem:[%s2518 + $0x10] sm:$0xff] %v2484
        %2522 = vst [vmem:[%s2518 + $0x18] sm:$0xff] %v2486
        %2523 = vst [vmem:[%s2518 + $0x20] sm:$0xff] %v2490
        %2524 = vst [vmem:[%s2518 + $0x28] sm:$0xff] %v2492
        %2525 = vst [vmem:[%s2518 + $0x30] sm:$0xff] %v2494
        %2526 = vst [vmem:[%s2518 + $0x38] sm:$0xff] %v2496
        %2527 = vst [vmem:[%s2518 + $0x40] sm:$0xff] %v2500
        %2528 = vst [vmem:[%s2518 + $0x48] sm:$0xff] %v2502
        %2529 = vst [vmem:[%s2518 + $0x50] sm:$0xff] %v2504
        %2530 = vst [vmem:[%s2518 + $0x58] sm:$0xff] %v2506
        %2531 = vst [vmem:[%s2518 + $0x60] sm:$0xff] %v2510
        %2532 = vst [vmem:[%s2518 + $0x68] sm:$0xff] %v2512
        %2533 = vst [vmem:[%s2518 + $0x70] sm:$0xff] %v2514
        %2534 = vst [vmem:[%s2518 + $0x78] sm:$0xff] %v2516
        %s2535 = scalar_lea.vmem %s235, 384 [#allocation2]
        %v2536 = vld [vmem:[%s2535] sm:$0xff]
        %v2537 = vld [vmem:[%s2535 + $0x8] sm:$0xff]
        %v2538 = vld [vmem:[%s2535 + $0x10] sm:$0xff]
        %v2539 = vld [vmem:[%s2535 + $0x18] sm:$0xff]
        %v2540 = vld [vmem:[%s2535 + $0x20] sm:$0xff]
        %v2541 = vld [vmem:[%s2535 + $0x28] sm:$0xff]
        %v2542 = vld [vmem:[%s2535 + $0x30] sm:$0xff]
        %v2543 = vld [vmem:[%s2535 + $0x38] sm:$0xff]
        %v2544 = vld [vmem:[%s2535 + $0x40] sm:$0xff]
        %v2545 = vld [vmem:[%s2535 + $0x48] sm:$0xff]
        %v2546 = vld [vmem:[%s2535 + $0x50] sm:$0xff]
        %v2547 = vld [vmem:[%s2535 + $0x58] sm:$0xff]
        %v2548 = vld [vmem:[%s2535 + $0x60] sm:$0xff]
        %v2549 = vld [vmem:[%s2535 + $0x68] sm:$0xff]
        %v2550 = vld [vmem:[%s2535 + $0x70] sm:$0xff]
        %v2551 = vld [vmem:[%s2535 + $0x78] sm:$0xff]
        %v2552 = vadd.f32 %v2536, %v2538
        %v2553 = vadd.f32 %v2552, %v2540
        %v2554 = vadd.f32 %v2553, %v2542
        %v2555 = vadd.f32 %v2554, %v2544
        %v2556 = vadd.f32 %v2555, %v2546
        %v2557 = vadd.f32 %v2556, %v2548
        %v2558 = vadd.f32 %v2557, %v2550
        %v2559 = vrot.slane %v2558, 4
        %v2560 = vadd.f32 %v2558, %v2559
        %v2561 = vrot.slane %v2560, 2
        %v2562 = vadd.f32 %v2560, %v2561
        %v2563 = vrot.slane %v2562, 1
        %v2564 = vadd.f32 %v2562, %v2563
        %v2565 = vadd.f32 %v2537, %v2539
        %v2566 = vadd.f32 %v2565, %v2541
        %v2567 = vadd.f32 %v2566, %v2543
        %v2568 = vadd.f32 %v2567, %v2545
        %v2569 = vadd.f32 %v2568, %v2547
        %v2570 = vadd.f32 %v2569, %v2549
        %v2571 = vadd.f32 %v2570, %v2551
        %v2572 = vrot.slane %v2571, 4
        %v2573 = vadd.f32 %v2571, %v2572
        %v2574 = vrot.slane %v2573, 2
        %v2575 = vadd.f32 %v2573, %v2574
        %v2576 = vrot.slane %v2575, 1
        %v2577 = vadd.f32 %v2575, %v2576
        %v2578 = vmul.f32 %v2564, %v365
        %v2579 = vmul.f32 %v2577, %v365
        %v2580 = vmul.f32 %v2536, %v2536
        %v2581 = vmul.f32 %v2537, %v2537
        %v2582 = vmul.f32 %v2538, %v2538
        %v2583 = vmul.f32 %v2539, %v2539
        %v2584 = vmul.f32 %v2540, %v2540
        %v2585 = vmul.f32 %v2541, %v2541
        %v2586 = vmul.f32 %v2542, %v2542
        %v2587 = vmul.f32 %v2543, %v2543
        %v2588 = vmul.f32 %v2544, %v2544
        %v2589 = vmul.f32 %v2545, %v2545
        %v2590 = vmul.f32 %v2546, %v2546
        %v2591 = vmul.f32 %v2547, %v2547
        %v2592 = vmul.f32 %v2548, %v2548
        %v2593 = vmul.f32 %v2549, %v2549
        %v2594 = vmul.f32 %v2550, %v2550
        %v2595 = vmul.f32 %v2551, %v2551
        %v2596 = vadd.f32 %v2580, %v2582
        %v2597 = vadd.f32 %v2596, %v2584
        %v2598 = vadd.f32 %v2597, %v2586
        %v2599 = vadd.f32 %v2598, %v2588
        %v2600 = vadd.f32 %v2599, %v2590
        %v2601 = vadd.f32 %v2600, %v2592
        %v2602 = vadd.f32 %v2601, %v2594
        %v2603 = vrot.slane %v2602, 4
        %v2604 = vadd.f32 %v2602, %v2603
        %v2605 = vrot.slane %v2604, 2
        %v2606 = vadd.f32 %v2604, %v2605
        %v2607 = vrot.slane %v2606, 1
        %v2608 = vadd.f32 %v2606, %v2607
        %v2609 = vadd.f32 %v2581, %v2583
        %v2610 = vadd.f32 %v2609, %v2585
        %v2611 = vadd.f32 %v2610, %v2587
        %v2612 = vadd.f32 %v2611, %v2589
        %v2613 = vadd.f32 %v2612, %v2591
        %v2614 = vadd.f32 %v2613, %v2593
        %v2615 = vadd.f32 %v2614, %v2595
        %v2616 = vrot.slane %v2615, 4
        %v2617 = vadd.f32 %v2615, %v2616
        %v2618 = vrot.slane %v2617, 2
        %v2619 = vadd.f32 %v2617, %v2618
        %v2620 = vrot.slane %v2619, 1
        %v2621 = vadd.f32 %v2619, %v2620
        %v2622 = vmul.f32 %v2608, %v365
        %v2623 = vmul.f32 %v2621, %v365
        %v2624 = vmul.f32 %v2578, %v2578
        %v2625 = vmul.f32 %v2579, %v2579
        %v2626 = vsub.f32 %v2622, %v2624
        %v2627 = vsub.f32 %v2623, %v2625
        %v2628 = vsub.f32 %v2536, %v2578
        %v2629 = vsub.f32 %v2537, %v2579
        %v2630 = vsub.f32 %v2538, %v2578
        %v2631 = vsub.f32 %v2539, %v2579
        %v2632 = vsub.f32 %v2540, %v2578
        %v2633 = vsub.f32 %v2541, %v2579
        %v2634 = vsub.f32 %v2542, %v2578
        %v2635 = vsub.f32 %v2543, %v2579
        %v2636 = vsub.f32 %v2544, %v2578
        %v2637 = vsub.f32 %v2545, %v2579
        %v2638 = vsub.f32 %v2546, %v2578
        %v2639 = vsub.f32 %v2547, %v2579
        %v2640 = vsub.f32 %v2548, %v2578
        %v2641 = vsub.f32 %v2549, %v2579
        %v2642 = vsub.f32 %v2550, %v2578
        %v2643 = vsub.f32 %v2551, %v2579
        %v2644 = vadd.f32 %v2626, 1e-05
        %v2645 = vadd.f32 %v2627, 1e-05
        %v2646 = vrsqrt.pop %v2644
        %v2647 = vrsqrt.pop %v2645
        %v2648 = vmul.f32 %v2628, %v2646
        %v2649 = vmul.f32 %v2629, %v2647
        %v2650 = vmul.f32 %v2630, %v2646
        %v2651 = vmul.f32 %v2631, %v2647
        %v2652 = vmul.f32 %v2632, %v2646
        %v2653 = vmul.f32 %v2633, %v2647
        %v2654 = vmul.f32 %v2634, %v2646
        %v2655 = vmul.f32 %v2635, %v2647
        %v2656 = vmul.f32 %v2636, %v2646
        %v2657 = vmul.f32 %v2637, %v2647
        %v2658 = vmul.f32 %v2638, %v2646
        %v2659 = vmul.f32 %v2639, %v2647
        %v2660 = vmul.f32 %v2640, %v2646
        %v2661 = vmul.f32 %v2641, %v2647
        %v2662 = vmul.f32 %v2642, %v2646
        %v2663 = vmul.f32 %v2643, %v2647
        %v2664 = vmul.f32 %v2648, %v455
        %v2665 = vmul.f32 %v2649, %v455
        %v2666 = vmul.f32 %v2650, %v460
        %v2667 = vmul.f32 %v2651, %v460
        %v2668 = vmul.f32 %v2652, %v465
        %v2669 = vmul.f32 %v2653, %v465
        %v2670 = vmul.f32 %v2654, %v470
        %v2671 = vmul.f32 %v2655, %v470
        %v2672 = vmul.f32 %v2656, %v475
        %v2673 = vmul.f32 %v2657, %v475
        %v2674 = vmul.f32 %v2658, %v480
        %v2675 = vmul.f32 %v2659, %v480
        %v2676 = vmul.f32 %v2660, %v485
        %v2677 = vmul.f32 %v2661, %v485
        %v2678 = vmul.f32 %v2662, %v490
        %v2679 = vmul.f32 %v2663, %v490
        %v2680 = vadd.f32 %v2664, %v511
        %v2681 = vadd.f32 %v2665, %v511
        %v2682 = vadd.f32 %v2666, %v516
        %v2683 = vadd.f32 %v2667, %v516
        %v2684 = vadd.f32 %v2668, %v521
        %v2685 = vadd.f32 %v2669, %v521
        %v2686 = vadd.f32 %v2670, %v526
        %v2687 = vadd.f32 %v2671, %v526
        %v2688 = vadd.f32 %v2672, %v531
        %v2689 = vadd.f32 %v2673, %v531
        %v2690 = vadd.f32 %v2674, %v536
        %v2691 = vadd.f32 %v2675, %v536
        %v2692 = vadd.f32 %v2676, %v541
        %v2693 = vadd.f32 %v2677, %v541
        %v2694 = vadd.f32 %v2678, %v546
        %v2695 = vadd.f32 %v2679, %v546
        %v2696 = vpack.c.bf16 %v2682, %v2680
        %v2697 = vpack.c.bf16 %v2683, %v2681
        %v2698 = vpack.c.bf16 %v2686, %v2684
        %v2699 = vpack.c.bf16 %v2687, %v2685
        %v2700 = vpack.c.bf16 %v2690, %v2688
        %v2701 = vpack.c.bf16 %v2691, %v2689
        %v2702 = vpack.c.bf16 %v2694, %v2692
        %v2703 = vpack.c.bf16 %v2695, %v2693
        %2704 = vmatprep.subr.bf16.mxu0 0
        %2705 = vmatpush1.bf16.msra.mxu0 0
        %2706 = vmatprep.subr.bf16.mxu0 0
        %2707 = vmatpush1.bf16.msra.mxu0 0
        %2708 = vmatprep.subr.bf16.mxu0 0
        %2709 = vmatpush1.bf16.msra.mxu0 0
        %2710 = vmatprep.subr.bf16.mxu0 0
        %2711 = vmatpush1.bf16.msra.mxu0 0
        %2712 = vmatprep.subr.bf16.mxu0 %v2703
        %2713 = vmatpush1.bf16.msra.mxu0 %v2702
        %2714 = vmatprep.subr.bf16.mxu0 %v2701
        %2715 = vmatpush1.bf16.msra.mxu0 %v2700
        %2716 = vmatprep.subr.bf16.mxu0 %v2699
        %2717 = vmatpush1.bf16.msra.mxu0 %v2698
        %2718 = vmatprep.subr.bf16.mxu0 %v2697
        %2719 = vmatpush1.bf16.msra.mxu0 %v2696
        %2720 = vmatprep.subr.bf16.mxu0 0
        %2721 = vmatpush2.bf16.msra.mxu0 0
        %2722 = vmatprep.subr.bf16.mxu0 0
        %2723 = vmatpush2.bf16.msra.mxu0 0
        %2724 = vmatprep.subr.bf16.mxu0 0
        %2725 = vmatpush2.bf16.msra.mxu0 0
        %2726 = vmatprep.subr.bf16.mxu0 0
        %2727 = vmatpush2.bf16.msra.mxu0 0
        %2728 = vmatprep.subr.bf16.mxu0 0
        %2729 = vmatpush2.bf16.msra.mxu0 0
        %2730 = vmatprep.subr.bf16.mxu0 0
        %2731 = vmatpush2.bf16.msra.mxu0 0
        %2732 = vmatprep.subr.bf16.mxu0 0
        %2733 = vmatpush2.bf16.msra.mxu0 0
        %2734 = vmatprep.subr.bf16.mxu0 0
        %2735 = vmatpush2.bf16.msra.mxu0 0
        %2736 = vmatprep.mubr.bf16.mxu0 0
        %2737 = vmatmul.mubr.bf16.gmra.mxu0 %v654
        %v2738 = vpop.f32.mrf.mxu0
        %v2739 = vadd.f32 0.0, %v2738
        %v2740 = vpop.f32.mrf.mxu0
        %v2741 = vadd.f32 0.0, %v2740
        %v2742 = vpop.f32.mrf.mxu0
        %v2743 = vadd.f32 0.0, %v2742
        %v2744 = vpop.f32.mrf.mxu0
        %v2745 = vadd.f32 0.0, %v2744
        %2746 = vmatprep.mubr.bf16.mxu0 0
        %2747 = vmatmul.mubr.bf16.gmra.mxu0 %v657
        %v2748 = vpop.f32.mrf.mxu0
        %v2749 = vadd.f32 0.0, %v2748
        %v2750 = vpop.f32.mrf.mxu0
        %v2751 = vadd.f32 0.0, %v2750
        %v2752 = vpop.f32.mrf.mxu0
        %v2753 = vadd.f32 0.0, %v2752
        %v2754 = vpop.f32.mrf.mxu0
        %v2755 = vadd.f32 0.0, %v2754
        %2756 = vmatprep.mubr.bf16.mxu0 0
        %2757 = vmatmul.mubr.bf16.gmra.mxu0 %v660
        %v2758 = vpop.f32.mrf.mxu0
        %v2759 = vadd.f32 0.0, %v2758
        %v2760 = vpop.f32.mrf.mxu0
        %v2761 = vadd.f32 0.0, %v2760
        %v2762 = vpop.f32.mrf.mxu0
        %v2763 = vadd.f32 0.0, %v2762
        %v2764 = vpop.f32.mrf.mxu0
        %v2765 = vadd.f32 0.0, %v2764
        %2766 = vmatprep.mubr.bf16.mxu0 0
        %2767 = vmatmul.mubr.bf16.gmra.mxu0 %v663
        %v2768 = vpop.f32.mrf.mxu0
        %v2769 = vadd.f32 0.0, %v2768
        %v2770 = vpop.f32.mrf.mxu0
        %v2771 = vadd.f32 0.0, %v2770
        %v2772 = vpop.f32.mrf.mxu0
        %v2773 = vadd.f32 0.0, %v2772
        %v2774 = vpop.f32.mrf.mxu0
        %v2775 = vadd.f32 0.0, %v2774
        %2776 = vmatprep.mubr.bf16.mxu0 0
        %2777 = vmatmul.mubr.bf16.gmra.mxu0 %v666
        %v2778 = vpop.f32.mrf.mxu0
        %v2779 = vadd.f32 0.0, %v2778
        %v2780 = vpop.f32.mrf.mxu0
        %v2781 = vadd.f32 0.0, %v2780
        %v2782 = vpop.f32.mrf.mxu0
        %v2783 = vadd.f32 0.0, %v2782
        %v2784 = vpop.f32.mrf.mxu0
        %v2785 = vadd.f32 0.0, %v2784
        %2786 = vmatprep.mubr.bf16.mxu0 0
        %2787 = vmatmul.mubr.bf16.gmra.mxu0 %v669
        %v2788 = vpop.f32.mrf.mxu0
        %v2789 = vadd.f32 0.0, %v2788
        %v2790 = vpop.f32.mrf.mxu0
        %v2791 = vadd.f32 0.0, %v2790
        %v2792 = vpop.f32.mrf.mxu0
        %v2793 = vadd.f32 0.0, %v2792
        %v2794 = vpop.f32.mrf.mxu0
        %v2795 = vadd.f32 0.0, %v2794
        %2796 = vmatprep.mubr.bf16.mxu0 0
        %2797 = vmatmul.mubr.bf16.gmra.mxu0 %v672
        %v2798 = vpop.f32.mrf.mxu0
        %v2799 = vadd.f32 0.0, %v2798
        %v2800 = vpop.f32.mrf.mxu0
        %v2801 = vadd.f32 0.0, %v2800
        %v2802 = vpop.f32.mrf.mxu0
        %v2803 = vadd.f32 0.0, %v2802
        %v2804 = vpop.f32.mrf.mxu0
        %v2805 = vadd.f32 0.0, %v2804
        %2806 = vmatprep.mubr.bf16.mxu0 0
        %2807 = vmatmul.mubr.bf16.gmra.mxu0 %v675
        %v2808 = vpop.f32.mrf.mxu0
        %v2809 = vadd.f32 0.0, %v2808
        %v2810 = vpop.f32.mrf.mxu0
        %v2811 = vadd.f32 0.0, %v2810
        %v2812 = vpop.f32.mrf.mxu0
        %v2813 = vadd.f32 0.0, %v2812
        %v2814 = vpop.f32.mrf.mxu0
        %v2815 = vadd.f32 0.0, %v2814
        %2816 = vmatprep.mubr.bf16.mxu0 0
        %2817 = vmatmul.mubr.bf16.gmra.mxu0 %v678
        %v2818 = vpop.f32.mrf.mxu0
        %v2819 = vadd.f32 0.0, %v2818
        %v2820 = vpop.f32.mrf.mxu0
        %v2821 = vadd.f32 0.0, %v2820
        %v2822 = vpop.f32.mrf.mxu0
        %v2823 = vadd.f32 0.0, %v2822
        %v2824 = vpop.f32.mrf.mxu0
        %v2825 = vadd.f32 0.0, %v2824
        %2826 = vmatprep.mubr.bf16.mxu0 0
        %2827 = vmatmul.mubr.bf16.gmra.mxu0 %v681
        %v2828 = vpop.f32.mrf.mxu0
        %v2829 = vadd.f32 0.0, %v2828
        %v2830 = vpop.f32.mrf.mxu0
        %v2831 = vadd.f32 0.0, %v2830
        %v2832 = vpop.f32.mrf.mxu0
        %v2833 = vadd.f32 0.0, %v2832
        %v2834 = vpop.f32.mrf.mxu0
        %v2835 = vadd.f32 0.0, %v2834
        %2836 = vmatprep.mubr.bf16.mxu0 0
        %2837 = vmatmul.mubr.bf16.gmra.mxu0 %v684
        %v2838 = vpop.f32.mrf.mxu0
        %v2839 = vadd.f32 0.0, %v2838
        %v2840 = vpop.f32.mrf.mxu0
        %v2841 = vadd.f32 0.0, %v2840
        %v2842 = vpop.f32.mrf.mxu0
        %v2843 = vadd.f32 0.0, %v2842
        %v2844 = vpop.f32.mrf.mxu0
        %v2845 = vadd.f32 0.0, %v2844
        %2846 = vmatprep.mubr.bf16.mxu0 0
        %2847 = vmatmul.mubr.bf16.gmra.mxu0 %v687
        %v2848 = vpop.f32.mrf.mxu0
        %v2849 = vadd.f32 0.0, %v2848
        %v2850 = vpop.f32.mrf.mxu0
        %v2851 = vadd.f32 0.0, %v2850
        %v2852 = vpop.f32.mrf.mxu0
        %v2853 = vadd.f32 0.0, %v2852
        %v2854 = vpop.f32.mrf.mxu0
        %v2855 = vadd.f32 0.0, %v2854
        %2856 = vmatprep.mubr.bf16.mxu0 0
        %2857 = vmatmul.mubr.bf16.gmra.mxu0 %v690
        %v2858 = vpop.f32.mrf.mxu0
        %v2859 = vadd.f32 0.0, %v2858
        %v2860 = vpop.f32.mrf.mxu0
        %v2861 = vadd.f32 0.0, %v2860
        %v2862 = vpop.f32.mrf.mxu0
        %v2863 = vadd.f32 0.0, %v2862
        %v2864 = vpop.f32.mrf.mxu0
        %v2865 = vadd.f32 0.0, %v2864
        %2866 = vmatprep.mubr.bf16.mxu0 0
        %2867 = vmatmul.mubr.bf16.gmra.mxu0 %v693
        %v2868 = vpop.f32.mrf.mxu0
        %v2869 = vadd.f32 0.0, %v2868
        %v2870 = vpop.f32.mrf.mxu0
        %v2871 = vadd.f32 0.0, %v2870
        %v2872 = vpop.f32.mrf.mxu0
        %v2873 = vadd.f32 0.0, %v2872
        %v2874 = vpop.f32.mrf.mxu0
        %v2875 = vadd.f32 0.0, %v2874
        %2876 = vmatprep.mubr.bf16.mxu0 0
        %2877 = vmatmul.mubr.bf16.gmra.mxu0 %v696
        %v2878 = vpop.f32.mrf.mxu0
        %v2879 = vadd.f32 0.0, %v2878
        %v2880 = vpop.f32.mrf.mxu0
        %v2881 = vadd.f32 0.0, %v2880
        %v2882 = vpop.f32.mrf.mxu0
        %v2883 = vadd.f32 0.0, %v2882
        %v2884 = vpop.f32.mrf.mxu0
        %v2885 = vadd.f32 0.0, %v2884
        %2886 = vmatprep.mubr.bf16.mxu0 0
        %2887 = vmatmul.mubr.bf16.gmra.mxu0 %v699
        %v2888 = vpop.f32.mrf.mxu0
        %v2889 = vadd.f32 0.0, %v2888
        %v2890 = vpop.f32.mrf.mxu0
        %v2891 = vadd.f32 0.0, %v2890
        %v2892 = vpop.f32.mrf.mxu0
        %v2893 = vadd.f32 0.0, %v2892
        %v2894 = vpop.f32.mrf.mxu0
        %v2895 = vadd.f32 0.0, %v2894
        %2896 = vdwg.mxu0
        %v2897 = vmul.f32 %v2819, 0.5
        %v2898 = vmul.f32 %v2821, 0.5
        %v2899 = vmul.f32 %v2823, 0.5
        %v2900 = vmul.f32 %v2825, 0.5
        %v2901 = vmul.f32 %v2829, 0.5
        %v2902 = vmul.f32 %v2831, 0.5
        %v2903 = vmul.f32 %v2833, 0.5
        %v2904 = vmul.f32 %v2835, 0.5
        %v2905 = vmul.f32 %v2839, 0.5
        %v2906 = vmul.f32 %v2841, 0.5
        %v2907 = vmul.f32 %v2843, 0.5
        %v2908 = vmul.f32 %v2845, 0.5
        %v2909 = vmul.f32 %v2849, 0.5
        %v2910 = vmul.f32 %v2851, 0.5
        %v2911 = vmul.f32 %v2853, 0.5
        %v2912 = vmul.f32 %v2855, 0.5
        %v2913 = vmul.f32 %v2859, 0.5
        %v2914 = vmul.f32 %v2861, 0.5
        %v2915 = vmul.f32 %v2863, 0.5
        %v2916 = vmul.f32 %v2865, 0.5
        %v2917 = vmul.f32 %v2869, 0.5
        %v2918 = vmul.f32 %v2871, 0.5
        %v2919 = vmul.f32 %v2873, 0.5
        %v2920 = vmul.f32 %v2875, 0.5
        %v2921 = vmul.f32 %v2879, 0.5
        %v2922 = vmul.f32 %v2881, 0.5
        %v2923 = vmul.f32 %v2883, 0.5
        %v2924 = vmul.f32 %v2885, 0.5
        %v2925 = vmul.f32 %v2889, 0.5
        %v2926 = vmul.f32 %v2891, 0.5
        %v2927 = vmul.f32 %v2893, 0.5
        %v2928 = vmul.f32 %v2895, 0.5
        %v2929 = vtanh.pop %v2897
        %v2930 = vtanh.pop %v2898
        %v2931 = vtanh.pop %v2899
        %v2932 = vtanh.pop %v2900
        %v2933 = vtanh.pop %v2901
        %v2934 = vtanh.pop %v2902
        %v2935 = vtanh.pop %v2903
        %v2936 = vtanh.pop %v2904
        %v2937 = vtanh.pop %v2905
        %v2938 = vtanh.pop %v2906
        %v2939 = vtanh.pop %v2907
        %v2940 = vtanh.pop %v2908
        %v2941 = vtanh.pop %v2909
        %v2942 = vtanh.pop %v2910
        %v2943 = vtanh.pop %v2911
        %v2944 = vtanh.pop %v2912
        %v2945 = vtanh.pop %v2913
        %v2946 = vtanh.pop %v2914
        %v2947 = vtanh.pop %v2915
        %v2948 = vtanh.pop %v2916
        %v2949 = vtanh.pop %v2917
        %v2950 = vtanh.pop %v2918
        %v2951 = vtanh.pop %v2919
        %v2952 = vtanh.pop %v2920
        %v2953 = vtanh.pop %v2921
        %v2954 = vtanh.pop %v2922
        %v2955 = vtanh.pop %v2923
        %v2956 = vtanh.pop %v2924
        %v2957 = vtanh.pop %v2925
        %v2958 = vtanh.pop %v2926
        %v2959 = vtanh.pop %v2927
        %v2960 = vtanh.pop %v2928
        %v2961 = vadd.f32 %v2929, 1.0
        %v2962 = vadd.f32 %v2930, 1.0
        %v2963 = vadd.f32 %v2931, 1.0
        %v2964 = vadd.f32 %v2932, 1.0
        %v2965 = vadd.f32 %v2933, 1.0
        %v2966 = vadd.f32 %v2934, 1.0
        %v2967 = vadd.f32 %v2935, 1.0
        %v2968 = vadd.f32 %v2936, 1.0
        %v2969 = vadd.f32 %v2937, 1.0
        %v2970 = vadd.f32 %v2938, 1.0
        %v2971 = vadd.f32 %v2939, 1.0
        %v2972 = vadd.f32 %v2940, 1.0
        %v2973 = vadd.f32 %v2941, 1.0
        %v2974 = vadd.f32 %v2942, 1.0
        %v2975 = vadd.f32 %v2943, 1.0
        %v2976 = vadd.f32 %v2944, 1.0
        %v2977 = vadd.f32 %v2945, 1.0
        %v2978 = vadd.f32 %v2946, 1.0
        %v2979 = vadd.f32 %v2947, 1.0
        %v2980 = vadd.f32 %v2948, 1.0
        %v2981 = vadd.f32 %v2949, 1.0
        %v2982 = vadd.f32 %v2950, 1.0
        %v2983 = vadd.f32 %v2951, 1.0
        %v2984 = vadd.f32 %v2952, 1.0
        %v2985 = vadd.f32 %v2953, 1.0
        %v2986 = vadd.f32 %v2954, 1.0
        %v2987 = vadd.f32 %v2955, 1.0
        %v2988 = vadd.f32 %v2956, 1.0
        %v2989 = vadd.f32 %v2957, 1.0
        %v2990 = vadd.f32 %v2958, 1.0
        %v2991 = vadd.f32 %v2959, 1.0
        %v2992 = vadd.f32 %v2960, 1.0
        %v2993 = vmul.f32 %v2961, 0.5
        %v2994 = vmul.f32 %v2962, 0.5
        %v2995 = vmul.f32 %v2963, 0.5
        %v2996 = vmul.f32 %v2964, 0.5
        %v2997 = vmul.f32 %v2965, 0.5
        %v2998 = vmul.f32 %v2966, 0.5
        %v2999 = vmul.f32 %v2967, 0.5
        %v3000 = vmul.f32 %v2968, 0.5
        %v3001 = vmul.f32 %v2969, 0.5
        %v3002 = vmul.f32 %v2970, 0.5
        %v3003 = vmul.f32 %v2971, 0.5
        %v3004 = vmul.f32 %v2972, 0.5
        %v3005 = vmul.f32 %v2973, 0.5
        %v3006 = vmul.f32 %v2974, 0.5
        %v3007 = vmul.f32 %v2975, 0.5
        %v3008 = vmul.f32 %v2976, 0.5
        %v3009 = vmul.f32 %v2977, 0.5
        %v3010 = vmul.f32 %v2978, 0.5
        %v3011 = vmul.f32 %v2979, 0.5
        %v3012 = vmul.f32 %v2980, 0.5
        %v3013 = vmul.f32 %v2981, 0.5
        %v3014 = vmul.f32 %v2982, 0.5
        %v3015 = vmul.f32 %v2983, 0.5
        %v3016 = vmul.f32 %v2984, 0.5
        %v3017 = vmul.f32 %v2985, 0.5
        %v3018 = vmul.f32 %v2986, 0.5
        %v3019 = vmul.f32 %v2987, 0.5
        %v3020 = vmul.f32 %v2988, 0.5
        %v3021 = vmul.f32 %v2989, 0.5
        %v3022 = vmul.f32 %v2990, 0.5
        %v3023 = vmul.f32 %v2991, 0.5
        %v3024 = vmul.f32 %v2992, 0.5
        %v3025 = vmul.f32 %v2819, %v2993
        %v3026 = vmul.f32 %v2821, %v2994
        %v3027 = vmul.f32 %v2823, %v2995
        %v3028 = vmul.f32 %v2825, %v2996
        %v3029 = vmul.f32 %v2829, %v2997
        %v3030 = vmul.f32 %v2831, %v2998
        %v3031 = vmul.f32 %v2833, %v2999
        %v3032 = vmul.f32 %v2835, %v3000
        %v3033 = vmul.f32 %v2839, %v3001
        %v3034 = vmul.f32 %v2841, %v3002
        %v3035 = vmul.f32 %v2843, %v3003
        %v3036 = vmul.f32 %v2845, %v3004
        %v3037 = vmul.f32 %v2849, %v3005
        %v3038 = vmul.f32 %v2851, %v3006
        %v3039 = vmul.f32 %v2853, %v3007
        %v3040 = vmul.f32 %v2855, %v3008
        %v3041 = vmul.f32 %v2859, %v3009
        %v3042 = vmul.f32 %v2861, %v3010
        %v3043 = vmul.f32 %v2863, %v3011
        %v3044 = vmul.f32 %v2865, %v3012
        %v3045 = vmul.f32 %v2869, %v3013
        %v3046 = vmul.f32 %v2871, %v3014
        %v3047 = vmul.f32 %v2873, %v3015
        %v3048 = vmul.f32 %v2875, %v3016
        %v3049 = vmul.f32 %v2879, %v3017
        %v3050 = vmul.f32 %v2881, %v3018
        %v3051 = vmul.f32 %v2883, %v3019
        %v3052 = vmul.f32 %v2885, %v3020
        %v3053 = vmul.f32 %v2889, %v3021
        %v3054 = vmul.f32 %v2891, %v3022
        %v3055 = vmul.f32 %v2893, %v3023
        %v3056 = vmul.f32 %v2895, %v3024
        %v3057 = vmul.f32 %v2739, %v3025
        %v3058 = vmul.f32 %v2741, %v3026
        %v3059 = vmul.f32 %v2743, %v3027
        %v3060 = vmul.f32 %v2745, %v3028
        %v3061 = vmul.f32 %v2749, %v3029
        %v3062 = vmul.f32 %v2751, %v3030
        %v3063 = vmul.f32 %v2753, %v3031
        %v3064 = vmul.f32 %v2755, %v3032
        %v3065 = vmul.f32 %v2759, %v3033
        %v3066 = vmul.f32 %v2761, %v3034
        %v3067 = vmul.f32 %v2763, %v3035
        %v3068 = vmul.f32 %v2765, %v3036
        %v3069 = vmul.f32 %v2769, %v3037
        %v3070 = vmul.f32 %v2771, %v3038
        %v3071 = vmul.f32 %v2773, %v3039
        %v3072 = vmul.f32 %v2775, %v3040
        %v3073 = vmul.f32 %v2779, %v3041
        %v3074 = vmul.f32 %v2781, %v3042
        %v3075 = vmul.f32 %v2783, %v3043
        %v3076 = vmul.f32 %v2785, %v3044
        %v3077 = vmul.f32 %v2789, %v3045
        %v3078 = vmul.f32 %v2791, %v3046
        %v3079 = vmul.f32 %v2793, %v3047
        %v3080 = vmul.f32 %v2795, %v3048
        %v3081 = vmul.f32 %v2799, %v3049
        %v3082 = vmul.f32 %v2801, %v3050
        %v3083 = vmul.f32 %v2803, %v3051
        %v3084 = vmul.f32 %v2805, %v3052
        %v3085 = vmul.f32 %v2809, %v3053
        %v3086 = vmul.f32 %v2811, %v3054
        %v3087 = vmul.f32 %v2813, %v3055
        %v3088 = vmul.f32 %v2815, %v3056
        %v3089 = vpack.c.bf16 %v3059, %v3057
        %v3090 = vpack.c.bf16 %v3060, %v3058
        %v3091 = vpack.c.bf16 %v3063, %v3061
        %v3092 = vpack.c.bf16 %v3064, %v3062
        %v3093 = vpack.c.bf16 %v3067, %v3065
        %v3094 = vpack.c.bf16 %v3068, %v3066
        %v3095 = vpack.c.bf16 %v3071, %v3069
        %v3096 = vpack.c.bf16 %v3072, %v3070
        %v3097 = vpack.c.bf16 %v3075, %v3073
        %v3098 = vpack.c.bf16 %v3076, %v3074
        %v3099 = vpack.c.bf16 %v3079, %v3077
        %v3100 = vpack.c.bf16 %v3080, %v3078
        %v3101 = vpack.c.bf16 %v3083, %v3081
        %v3102 = vpack.c.bf16 %v3084, %v3082
        %v3103 = vpack.c.bf16 %v3087, %v3085
        %v3104 = vpack.c.bf16 %v3088, %v3086
        %3105 = vmatprep.subr.bf16.mxu0 %v3104
        %3106 = vmatpush1.bf16.msra.mxu0 %v3103
        %3107 = vmatprep.subr.bf16.mxu0 %v3102
        %3108 = vmatpush1.bf16.msra.mxu0 %v3101
        %3109 = vmatprep.subr.bf16.mxu0 %v3100
        %3110 = vmatpush1.bf16.msra.mxu0 %v3099
        %3111 = vmatprep.subr.bf16.mxu0 %v3098
        %3112 = vmatpush1.bf16.msra.mxu0 %v3097
        %3113 = vmatprep.subr.bf16.mxu0 %v3096
        %3114 = vmatpush1.bf16.msra.mxu0 %v3095
        %3115 = vmatprep.subr.bf16.mxu0 %v3094
        %3116 = vmatpush1.bf16.msra.mxu0 %v3093
        %3117 = vmatprep.subr.bf16.mxu0 %v3092
        %3118 = vmatpush1.bf16.msra.mxu0 %v3091
        %3119 = vmatprep.subr.bf16.mxu0 %v3090
        %3120 = vmatpush1.bf16.msra.mxu0 %v3089
        %3121 = vmatprep.subr.bf16.mxu0 0
        %3122 = vmatpush2.bf16.msra.mxu0 0
        %3123 = vmatprep.subr.bf16.mxu0 0
        %3124 = vmatpush2.bf16.msra.mxu0 0
        %3125 = vmatprep.subr.bf16.mxu0 0
        %3126 = vmatpush2.bf16.msra.mxu0 0
        %3127 = vmatprep.subr.bf16.mxu0 0
        %3128 = vmatpush2.bf16.msra.mxu0 0
        %3129 = vmatprep.subr.bf16.mxu0 0
        %3130 = vmatpush2.bf16.msra.mxu0 0
        %3131 = vmatprep.subr.bf16.mxu0 0
        %3132 = vmatpush2.bf16.msra.mxu0 0
        %3133 = vmatprep.subr.bf16.mxu0 0
        %3134 = vmatpush2.bf16.msra.mxu0 0
        %3135 = vmatprep.subr.bf16.mxu0 0
        %3136 = vmatpush2.bf16.msra.mxu0 0
        %3137 = vmatprep.mubr.bf16.mxu0 0
        %3138 = vmatmul.mubr.bf16.gmra.mxu0 %v1118
        %v3139 = vpop.f32.mrf.mxu0
        %v3140 = vadd.f32 0.0, %v3139
        %v3141 = vpop.f32.mrf.mxu0
        %v3142 = vadd.f32 0.0, %v3141
        %v3143 = vpop.f32.mrf.mxu0
        %v3144 = vadd.f32 0.0, %v3143
        %v3145 = vpop.f32.mrf.mxu0
        %v3146 = vadd.f32 0.0, %v3145
        %3147 = vmatprep.mubr.bf16.mxu0 0
        %3148 = vmatmul.mubr.bf16.gmra.mxu0 %v1119
        %v3149 = vpop.f32.mrf.mxu0
        %v3150 = vadd.f32 0.0, %v3149
        %v3151 = vpop.f32.mrf.mxu0
        %v3152 = vadd.f32 0.0, %v3151
        %v3153 = vpop.f32.mrf.mxu0
        %v3154 = vadd.f32 0.0, %v3153
        %v3155 = vpop.f32.mrf.mxu0
        %v3156 = vadd.f32 0.0, %v3155
        %3157 = vmatprep.mubr.bf16.mxu0 0
        %3158 = vmatmul.mubr.bf16.gmra.mxu0 %v1120
        %v3159 = vpop.f32.mrf.mxu0
        %v3160 = vadd.f32 0.0, %v3159
        %v3161 = vpop.f32.mrf.mxu0
        %v3162 = vadd.f32 0.0, %v3161
        %v3163 = vpop.f32.mrf.mxu0
        %v3164 = vadd.f32 0.0, %v3163
        %v3165 = vpop.f32.mrf.mxu0
        %v3166 = vadd.f32 0.0, %v3165
        %3167 = vmatprep.mubr.bf16.mxu0 0
        %3168 = vmatmul.mubr.bf16.gmra.mxu0 %v1121
        %v3169 = vpop.f32.mrf.mxu0
        %v3170 = vadd.f32 0.0, %v3169
        %v3171 = vpop.f32.mrf.mxu0
        %v3172 = vadd.f32 0.0, %v3171
        %v3173 = vpop.f32.mrf.mxu0
        %v3174 = vadd.f32 0.0, %v3173
        %v3175 = vpop.f32.mrf.mxu0
        %v3176 = vadd.f32 0.0, %v3175
        %3177 = vdwg.mxu0
        %s3178 = scalar_lea.vmem %s261, 384 [#allocation5]
        %3179 = vst [vmem:[%s3178] sm:$0xff] %v3140
        %3180 = vst [vmem:[%s3178 + $0x8] sm:$0xff] %v3142
        %3181 = vst [vmem:[%s3178 + $0x10] sm:$0xff] %v3144
        %3182 = vst [vmem:[%s3178 + $0x18] sm:$0xff] %v3146
        %3183 = vst [vmem:[%s3178 + $0x20] sm:$0xff] %v3150
        %3184 = vst [vmem:[%s3178 + $0x28] sm:$0xff] %v3152
        %3185 = vst [vmem:[%s3178 + $0x30] sm:$0xff] %v3154
        %3186 = vst [vmem:[%s3178 + $0x38] sm:$0xff] %v3156
        %3187 = vst [vmem:[%s3178 + $0x40] sm:$0xff] %v3160
        %3188 = vst [vmem:[%s3178 + $0x48] sm:$0xff] %v3162
        %3189 = vst [vmem:[%s3178 + $0x50] sm:$0xff] %v3164
        %3190 = vst [vmem:[%s3178 + $0x58] sm:$0xff] %v3166
        %3191 = vst [vmem:[%s3178 + $0x60] sm:$0xff] %v3170
        %3192 = vst [vmem:[%s3178 + $0x68] sm:$0xff] %v3172
        %3193 = vst [vmem:[%s3178 + $0x70] sm:$0xff] %v3174
        %3194 = vst [vmem:[%s3178 + $0x78] sm:$0xff] %v3176
        %s3195 = sand.u32 %s156, 1
        %s3196 = scalar_lea.sflag [#allocation4], %s3195
        %s3197 = sand.u32 %s156, 1
        %s3198 = smul.addr %s3197, 512
        %s3199 = scalar_lea.vmem [#allocation5], %s3198
        // Predicated region
        $region45: #{tpu_custom_call.1} parent=39 // pred_check
          %p3200 = pneg %p166
        $region46: #{tpu_custom_call.1} parent=39 // pred_check_branch
          %3202 = sbr.rel (%p3200) target = $region48
        $region47: #{tpu_custom_call.1} parent=39 // pred_region
          %s3203 = smul.u32 4, %s26
          %s3204 = smul.u32 2, %s27
          %s3206 = ssub.s32 8192, 8192
          %3207 = vsyncadd %s3196, %s3206
          %s3208 = smul.addr %s3203, 16
          %s3209 = sadd.s32 %s3204, %s3208
          %s3210 = smul.addr %s3209, 128
          %s3211 = scalar_lea.hbm %s5, %s3210
          %s3212 = sshll.u32 %s3199, 4
          %s3213 = int_to_ptr.vmem [resolvable:$true] %s3212
          %3218 = dma.vmem_to_hbm [thread:$0]  %s3213, 8192, %s3211, %s3196, 256, 256, 16
        $region48: #{tpu_custom_call.1} parent=39 // pred_fallthru
          _
      $region40: #{tpu_custom_call.1} parent=5 // pred_fallthru
        _
      %p3219 = scmp.le.s32.totalorder 2, %s17
      // Predicated region
      $region49: #{tpu_custom_call.1} parent=5 // pred_check
        %p3220 = pneg %p3219
      $region50: #{tpu_custom_call.1} parent=5 // pred_check_branch
        %3222 = sbr.rel (%p3220) target = $region52
      $region51: #{tpu_custom_call.1} parent=5 // pred_region
        %s3223 = ssub.s32 %s17, 2
        // Predicated region
        $region53: #{tpu_custom_call.1} parent=51 // pred_check
          %p3224 = pneg %p172
        $region54: #{tpu_custom_call.1} parent=51 // pred_check_branch
          %3226 = sbr.rel (%p3224) target = $region56
        $region55: #{tpu_custom_call.1} parent=51 // pred_region
          %s3227 = sand.u32 %s157, 1
          %s3228 = scalar_lea.sflag [#allocation4], %s3227
          %s3229 = sand.u32 %s157, 1
          %s3230 = smul.addr %s3229, 512
          %s3231 = scalar_lea.vmem [#allocation5], %s3230
          %3232 = dma.done %s3228, 8192
        $region56: #{tpu_custom_call.1} parent=51 // pred_fallthru
          _
      $region52: #{tpu_custom_call.1} parent=5 // pred_fallthru
        _
    $region6: #{tpu_custom_call.1} parent=1 // loop_footer
      %s21 = sadd.s32 1, %s17
    $region7: #{tpu_custom_call.1} parent=1 // loop_footer_branch
      %16 = sbr.rel target = $region3
    $region8: #{tpu_custom_call.1} parent=1 // loop_exit
      _
    %3233 = vsyncpa [#allocation3], 1
    %s3234 = scalar_lea.sflag [#allocation3], 1
    %3235 = vsyncpa %s3234, 1
    %3236 = vsyncpa [#allocation4], 1
    %s3237 = scalar_lea.sflag [#allocation4], 1
    %3238 = vsyncpa %s3237, 1

</llo_original>
